<compile_context>
chip_gen: v7x
topology: tpu7x:2x2x1
jax: 0.10.0
libtpu: 0.0.40
codegen_flags: <defaults>
</compile_context>

<pallas_src>
import functools

import jax
import jax.numpy as jnp
from jax.experimental import pallas as pl
from jax.experimental.pallas import tpu as pltpu

F32 = jnp.float32


# ----------------------------------------------------------------------------
# BlockSpec helpers (channel-major slab layout: arrays are (C, N*S))
# ----------------------------------------------------------------------------
def _stream_spec(rows, lane_block):
    """Per-grid-step block of B samples: full channel rows, B*S (or B*2S) lanes."""
    return pl.BlockSpec((rows, lane_block), lambda i: (0, i))


def _stat_spec(rows):
    """Per-grid-step partial BN statistics: (1, rows, 2) = [sum, sum_sq]."""
    return pl.BlockSpec((1, rows, 2), lambda i: (i, 0, 0))


def _const_spec(shape, multi_step):
    """Grid-invariant input; single-buffer it when the grid has >1 step."""
    idx = lambda i: (0,) * len(shape)
    if multi_step and hasattr(pl, "Buffered"):
        try:
            return pl.BlockSpec(tuple(shape), idx, pipeline_mode=pl.Buffered(1))
        except TypeError:       # older pallas without pipeline_mode kwarg
            pass
    return pl.BlockSpec(tuple(shape), idx)


def _cparams():
    return pltpu.CompilerParams(dimension_semantics=("parallel",),
                                vmem_limit_bytes=32 * 1024 * 1024)


# ----------------------------------------------------------------------------
# DFT operators (ortho-normalized), built once in the wrapper.
#   flat 2-D DFT:  Y_flat = X_flat @ (Mr + i*Mi),   real iFFT: Zr@Mr + Zi@Mi
# ----------------------------------------------------------------------------
def _dft2_matrices(h, w):
    kh = jnp.arange(h, dtype=F32)
    kw = jnp.arange(w, dtype=F32)
    ah = 2.0 * jnp.pi * jnp.outer(kh, kh) / h
    aw = 2.0 * jnp.pi * jnp.outer(kw, kw) / w
    fhr, fhi = jnp.cos(ah) / jnp.sqrt(h * 1.0), -jnp.sin(ah) / jnp.sqrt(h * 1.0)
    fwr, fwi = jnp.cos(aw) / jnp.sqrt(w * 1.0), -jnp.sin(aw) / jnp.sqrt(w * 1.0)
    mr = jnp.einsum("kh,lw->hwkl", fhr, fwr) - jnp.einsum("kh,lw->hwkl", fhi, fwi)
    mi = jnp.einsum("kh,lw->hwkl", fhr, fwi) + jnp.einsum("kh,lw->hwkl", fhi, fwr)
    s = h * w
    return mr.reshape(s, s).astype(F32), mi.reshape(s, s).astype(F32)


def _lfu_operators(h, w):
    """LFU quadrant-select+DFT operator (S, 2S) and iDFT+2x2-tile operator (2*S4, S)."""
    s = h * w
    h2, w2 = h // 2, w // 2
    s4 = h2 * w2
    m8r, m8i = _dft2_matrices(h2, w2)
    t = jnp.arange(s4)
    sel_r, sel_i = [], []
    for p in range(4):                      # channel-block order p = 2*q_w + q_h
        qh, qw = p % 2, p // 2
        src = (qh * h2 + t // w2) * w + (qw * w2 + t % w2)
        sel = (jnp.arange(s)[:, None] == src[None, :]).astype(F32)    # (S, S4)
        sel_r.append(sel @ m8r)
        sel_i.append(sel @ m8i)
    sel_cat = jnp.concatenate(sel_r + sel_i, axis=1)                  # (S, 2S)
    hh = jnp.arange(s) // w
    ww = jnp.arange(s) % w
    t_of_s = (hh % h2) * w2 + (ww % w2)
    tile = (t[:, None] == t_of_s[None, :]).astype(F32)                # (S4, S)
    l_inv = jnp.concatenate([m8r @ tile, m8i @ tile], axis=0)         # (2*S4, S)
    return sel_cat, l_inv


# ----------------------------------------------------------------------------
# BN finalize / pair-slab helpers (tiny per-channel math, plain JAX)
# ----------------------------------------------------------------------------
def _bn_scale_shift(stats, gamma, beta, count, eps):
    mean = stats[:, 0] / count
    var = stats[:, 1] / count - mean * mean      # biased var (training-mode BN)
    scale = gamma * jax.lax.rsqrt(var + eps)
    shift = beta - mean * scale
    return scale[:, None].astype(F32), shift[:, None].astype(F32)


def _pair_slab(v, c, width):
    """(2c,1) per-channel vector -> (c, 2*width) [real-half | imag-half] slab."""
    return jnp.concatenate([jnp.broadcast_to(v[:c], (c, width)),
                            jnp.broadcast_to(v[c:], (c, width))], axis=1).astype(F32)


# ----------------------------------------------------------------------------
# Kernel A: FFC entry convs (l2l + g2l and SpectralTransform conv1 fused into a
#           single block-matrix matmul) + partial BN stats for bn_l and bn1.
# ----------------------------------------------------------------------------
def _entry_kernel(x_ref, w_ref, yl_ref, y1_ref, st_ref, *, cl_out):
    x = x_ref[...]                                                     # (Cin, B*S)
    y = jnp.dot(w_ref[...], x, preferred_element_type=F32)            # (Cl_o+C, B*S)
    st_ref[0] = jnp.concatenate(
        [jnp.sum(y, axis=1, keepdims=True),
         jnp.sum(y * y, axis=1, keepdims=True)], axis=1)
    yl_ref[...] = y[:cl_out].astype(yl_ref.dtype)
    y1_ref[...] = y[cl_out:].astype(y1_ref.dtype)


# ----------------------------------------------------------------------------
# Kernel B: fused global FourierUnit + local FourierUnit.
#   BN1+ReLU prologue -> single (B*C, S)@(S, 2S) FFT matmul -> 1x1 conv ->
#   real|imag lane-concatenated output; same for the LFU with the quadrant
#   select + 8x8 DFT folded into one (S, 2S) operator.
# ----------------------------------------------------------------------------
def _spectral_mid_kernel(*refs, lfu, b, s, cdtype):
    if lfu:
        (y1_ref, a1_ref, b1_ref, fmat_ref, wfur_ref, wfui_ref,
         selcat_ref, wlfr_ref, wlfi_ref,
         yfu_ref, stfu_ref, ylf_ref, stlf_ref) = refs
    else:
        (y1_ref, a1_ref, b1_ref, fmat_ref, wfur_ref, wfui_ref,
         yfu_ref, stfu_ref) = refs
    c = y1_ref.shape[0]

    # BN1 + ReLU prologue, done in f32 on the VPU (works on every generation).
    x1 = jnp.maximum(y1_ref[...].astype(F32) * a1_ref[...] + b1_ref[...], 0.0)
    x1 = x1.astype(cdtype)                                             # (c, b*s)

    # ---- global FourierUnit -------------------------------------------------
    # plane-form rows (sample-major: row = b_idx*c + ch)
    x1_pl = jnp.concatenate([x1[:, i * s:(i + 1) * s] for i in range(b)], axis=0)
    ff = jnp.dot(x1_pl, fmat_ref[...], preferred_element_type=F32)     # (b*c, 2s)
    # real / imag halves back to conv-form (c, b*s)
    rr = jnp.concatenate([ff[i * c:(i + 1) * c, :s] for i in range(b)],
                         axis=1).astype(cdtype)
    ii = jnp.concatenate([ff[i * c:(i + 1) * c, s:] for i in range(b)],
                         axis=1).astype(cdtype)
    yfu = (jnp.dot(wfur_ref[...], rr, preferred_element_type=F32)
           + jnp.dot(wfui_ref[...], ii, preferred_element_type=F32))   # (2c, b*s)
    stfu_ref[0] = jnp.concatenate(
        [jnp.sum(yfu, axis=1, keepdims=True),
         jnp.sum(yfu * yfu, axis=1, keepdims=True)], axis=1)
    # real|imag lane-concatenated per sample: (c, b*2s)
    pieces = []
    for i in range(b):
        pieces.append(yfu[:c, i * s:(i + 1) * s])
        pieces.append(yfu[c:, i * s:(i + 1) * s])
    yfu_ref[...] = jnp.concatenate(pieces, axis=1).astype(yfu_ref.dtype)

    if lfu:
        c4 = c // 4
        s4 = s // 4
        xq_pl = jnp.concatenate(
            [x1[:c4, i * s:(i + 1) * s] for i in range(b)], axis=0)    # (b*c4, s)
        ffq = jnp.dot(xq_pl, selcat_ref[...],
                      preferred_element_type=F32)                      # (b*c4, 2s)
        rq, iq = [], []
        for p in range(4):
            rq.append(jnp.concatenate(
                [ffq[i * c4:(i + 1) * c4, p * s4:(p + 1) * s4] for i in range(b)],
                axis=1))
            iq.append(jnp.concatenate(
                [ffq[i * c4:(i + 1) * c4, (4 + p) * s4:(5 + p) * s4] for i in range(b)],
                axis=1))
        rq = jnp.concatenate(rq, axis=0).astype(cdtype)                # (c, b*s4)
        iq = jnp.concatenate(iq, axis=0).astype(cdtype)
        ylf = (jnp.dot(wlfr_ref[...], rq, preferred_element_type=F32)
               + jnp.dot(wlfi_ref[...], iq, preferred_element_type=F32))  # (2c, b*s4)
        stlf_ref[0] = jnp.concatenate(
            [jnp.sum(ylf, axis=1, keepdims=True),
             jnp.sum(ylf * ylf, axis=1, keepdims=True)], axis=1)
        pieces = []
        for i in range(b):
            pieces.append(ylf[:c, i * s4:(i + 1) * s4])
            pieces.append(ylf[c:, i * s4:(i + 1) * s4])
        ylf_ref[...] = jnp.concatenate(pieces, axis=1).astype(ylf_ref.dtype)


# ----------------------------------------------------------------------------
# Kernel D: fused tail.  BN+ReLU prologues, both inverse FFTs (single K=2S and
#           K=2*S4 matmuls, 2x2 tiling folded into the LFU operator),
#           (x1 + fu + lfu) sum, conv2, l2g conv, bn_g partial stats.
# ----------------------------------------------------------------------------
def _spectral_out_kernel(*refs, lfu, b, s, cl_in, cdtype):
    if lfu:
        (y1_ref, a1_ref, b1_ref, yfu_ref, afu_ref, bfu_ref,
         ylf_ref, alf_ref, blf_ref, x_ref,
         finv_ref, linv_ref, w2_ref, wl2g_ref, yg_ref, st_ref) = refs
    else:
        (y1_ref, a1_ref, b1_ref, yfu_ref, afu_ref, bfu_ref, x_ref,
         finv_ref, w2_ref, wl2g_ref, yg_ref, st_ref) = refs
    c = y1_ref.shape[0]
    s4 = s // 4

    x1 = jnp.maximum(y1_ref[...].astype(F32) * a1_ref[...] + b1_ref[...], 0.0)

    # FourierUnit BN+ReLU (pair layout) -> plane-form (b*c, 2s) -> one matmul
    yfu = yfu_ref[...]
    gfu = jnp.concatenate(
        [jnp.maximum(yfu[:, i * 2 * s:(i + 1) * 2 * s].astype(F32) * afu_ref[...]
                     + bfu_ref[...], 0.0) for i in range(b)],
        axis=0).astype(cdtype)
    out_sp = jnp.dot(gfu, finv_ref[...], preferred_element_type=F32)   # (b*c, s)

    if lfu:
        ylf = ylf_ref[...]
        glf = jnp.concatenate(
            [jnp.maximum(ylf[:, i * 2 * s4:(i + 1) * 2 * s4].astype(F32) * alf_ref[...]
                         + blf_ref[...], 0.0) for i in range(b)],
            axis=0).astype(cdtype)
        out_sp = out_sp + jnp.dot(glf, linv_ref[...], preferred_element_type=F32)

    # plane-form back to conv-form, then conv2 + l2g conv fused
    out_cv = jnp.concatenate([out_sp[i * c:(i + 1) * c, :] for i in range(b)],
                             axis=1)                                    # (c, b*s)
    tot = (x1 + out_cv).astype(cdtype)
    xl = x_ref[...][:cl_in]                                             # (cl_in, b*s)
    yg = (jnp.dot(w2_ref[...], tot, preferred_element_type=F32)
          + jnp.dot(wl2g_ref[...], xl, preferred_element_type=F32))     # (cg_o, b*s)
    st_ref[0] = jnp.concatenate(
        [jnp.sum(yg, axis=1, keepdims=True),
         jnp.sum(yg * yg, axis=1, keepdims=True)], axis=1)
    yg_ref[...] = yg.astype(yg_ref.dtype)


# ----------------------------------------------------------------------------
# Kernel E: final bn_l / bn_g affine (FFC_BN_ACT activation is nn.Identity),
#           written with slice stores (no concatenated VMEM copy).
# ----------------------------------------------------------------------------
def _out_bn_kernel(yl_ref, yg_ref, al_ref, bl_ref, ag_ref, bg_ref, o_ref, *, cl_out):
    o_ref[:cl_out, :] = (yl_ref[...].astype(F32) * al_ref[...]
                         + bl_ref[...]).astype(o_ref.dtype)
    o_ref[cl_out:, :] = (yg_ref[...].astype(F32) * ag_ref[...]
                         + bg_ref[...]).astype(o_ref.dtype)


# ----------------------------------------------------------------------------
# Full forward (FFC_BN_ACT with kernel_size=1, stride=1, groups=1)
# ----------------------------------------------------------------------------
def ffc_bn_act_forward(x, params, *, ratio_gin=0.5, ratio_gout=0.5,
                       enable_lfu=True, eps=1e-5,
                       compute_dtype=jnp.bfloat16, block_samples=None):
    del ratio_gout
    n, cin, h, w = x.shape
    s = h * w
    s4 = (h // 2) * (w // 2)
    cl_in = int(cin * (1 - ratio_gin))
    cdtype = jnp.dtype(compute_dtype)

    wll, wgl, wl2g = params["w_l2l"], params["w_g2l"], params["w_l2g"]
    w1, w2 = params["st_w1"], params["st_w2"]
    wfu, wlfu = params["fu_w"], params["lfu_w"]
    cl_out, cg_out = wll.shape[0], w2.shape[0]
    c = w1.shape[0]
    if enable_lfu:
        assert c % 4 == 0 and h % 2 == 0 and w % 2 == 0, \
            "LFU requires hidden channels % 4 == 0 and even H, W"

    # samples per grid step: as many as fit a modest VMEM budget.
    if block_samples is None:
        per_sample = (cin + cl_out + 8 * c + cg_out) * s * cdtype.itemsize
        b = max(1, min(n, (6 << 20) // max(per_sample, 1)))
        while n % b:
            b -= 1
    else:
        b = block_samples
        assert n % b == 0
    g = n // b
    multi = g > 1
    cparams = _cparams()

    # channel-major slab layout (C, N*S); one XLA transpose at entry and exit.
    xp = jnp.transpose(x.reshape(n, cin, s), (1, 0, 2)).reshape(cin, n * s)
    xp = xp.astype(cdtype)

    mr, mi = _dft2_matrices(h, w)
    f_fwd = jnp.concatenate([mr, mi], axis=1).astype(cdtype)            # (S, 2S)
    f_inv = jnp.concatenate([mr, mi], axis=0).astype(cdtype)            # (2S, S)

    # fused entry-conv weight [[Wll Wgl], [0 W1]] -> one MXU matmul in kernel A
    w_pre = jnp.concatenate(
        [jnp.concatenate([wll, wgl], axis=1),
         jnp.concatenate([jnp.zeros((c, cl_in), F32), w1], axis=1)],
        axis=0).astype(cdtype)
    ck = cl_out + c

    # ---- kernel A: l2l + g2l + SpectralTransform conv1 (+ partial BN stats) --
    yl_raw, y1_raw, st_pre = pl.pallas_call(
        functools.partial(_entry_kernel, cl_out=cl_out),
        out_shape=(jax.ShapeDtypeStruct((cl_out, n * s), cdtype),
                   jax.ShapeDtypeStruct((c, n * s), cdtype),
                   jax.ShapeDtypeStruct((g, ck, 2), F32)),
        grid=(g,),
        in_specs=[_stream_spec(cin, b * s), _const_spec(w_pre.shape, multi)],
        out_specs=(_stream_spec(cl_out, b * s), _stream_spec(c, b * s),
                   _stat_spec(ck)),
        compiler_params=cparams,
    )(xp, w_pre)

    st = jnp.sum(st_pre, axis=0)
    al, bl = _bn_scale_shift(st[:cl_out], params["bn_l_g"], params["bn_l_b"],
                             n * s, eps)
    a1, b1 = _bn_scale_shift(st[cl_out:], params["st_bn1_g"], params["st_bn1_b"],
                             n * s, eps)

    # ---- kernel B: fused global FourierUnit + local FourierUnit --------------
    wfu_r, wfu_i = wfu[:, :c].astype(cdtype), wfu[:, c:].astype(cdtype)
    in_arrays = [y1_raw, a1, b1, f_fwd, wfu_r, wfu_i]
    in_specs = [_stream_spec(c, b * s), _const_spec((c, 1), multi),
                _const_spec((c, 1), multi), _const_spec((s, 2 * s), multi),
                _const_spec((2 * c, c), multi), _const_spec((2 * c, c), multi)]
    out_shape = [jax.ShapeDtypeStruct((c, n * 2 * s), cdtype),
                 jax.ShapeDtypeStruct((g, 2 * c, 2), F32)]
    out_specs = [_stream_spec(c, b * 2 * s), _stat_spec(2 * c)]
    if enable_lfu:
        sel_cat, l_inv = _lfu_operators(h, w)
        sel_cat, l_inv = sel_cat.astype(cdtype), l_inv.astype(cdtype)
        wlf_r, wlf_i = wlfu[:, :c].astype(cdtype), wlfu[:, c:].astype(cdtype)
        in_arrays += [sel_cat, wlf_r, wlf_i]
        in_specs += [_const_spec((s, 2 * s), multi),
                     _const_spec((2 * c, c), multi), _const_spec((2 * c, c), multi)]
        out_shape += [jax.ShapeDtypeStruct((c, n * 2 * s4), cdtype),
                      jax.ShapeDtypeStruct((g, 2 * c, 2), F32)]
        out_specs += [_stream_spec(c, b * 2 * s4), _stat_spec(2 * c)]
    res = pl.pallas_call(
        functools.partial(_spectral_mid_kernel, lfu=enable_lfu, b=b, s=s,
                          cdtype=cdtype),
        out_shape=tuple(out_shape), grid=(g,), in_specs=in_specs,
        out_specs=tuple(out_specs), compiler_params=cparams,
    )(*in_arrays)
    if enable_lfu:
        yfu_raw, st_fu, ylf_raw, st_lf = res
    else:
        yfu_raw, st_fu = res

    afu, bfu = _bn_scale_shift(jnp.sum(st_fu, axis=0), params["fu_g"],
                               params["fu_b"], n * s, eps)

    # ---- kernel D: inverse FFTs + (x1+fu+lfu) + conv2 + l2g (+ bn_g stats) ----
    in_arrays = [y1_raw, a1, b1, yfu_raw, _pair_slab(afu, c, s), _pair_slab(bfu, c, s)]
    in_specs = [_stream_spec(c, b * s), _const_spec((c, 1), multi),
                _const_spec((c, 1), multi), _stream_spec(c, b * 2 * s),
                _const_spec((c, 2 * s), multi), _const_spec((c, 2 * s), multi)]
    if enable_lfu:
        alf, blf = _bn_scale_shift(jnp.sum(st_lf, axis=0), params["lfu_g"],
                                   params["lfu_b"], n * s4, eps)
        in_arrays += [ylf_raw, _pair_slab(alf, c, s4), _pair_slab(blf, c, s4)]
        in_specs += [_stream_spec(c, b * 2 * s4),
                     _const_spec((c, 2 * s4), multi), _const_spec((c, 2 * s4), multi)]
    in_arrays += [xp, f_inv]
    in_specs += [_stream_spec(cin, b * s), _const_spec((2 * s, s), multi)]
    if enable_lfu:
        in_arrays += [l_inv]
        in_specs += [_const_spec((2 * s4, s), multi)]
    in_arrays += [w2.astype(cdtype), wl2g.astype(cdtype)]
    in_specs += [_const_spec((cg_out, c), multi), _const_spec((cg_out, cl_in), multi)]
    yg_raw, st_g = pl.pallas_call(
        functools.partial(_spectral_out_kernel, lfu=enable_lfu, b=b, s=s,
                          cl_in=cl_in, cdtype=cdtype),
        out_shape=(jax.ShapeDtypeStruct((cg_out, n * s), cdtype),
                   jax.ShapeDtypeStruct((g, cg_out, 2), F32)),
        grid=(g,), in_specs=in_specs,
        out_specs=(_stream_spec(cg_out, b * s), _stat_spec(cg_out)),
        compiler_params=cparams,
    )(*in_arrays)

    ag, bg = _bn_scale_shift(jnp.sum(st_g, axis=0), params["bn_g_g"],
                             params["bn_g_b"], n * s, eps)

    # ---- kernel E: final bn_l / bn_g affine (activation = Identity) ----------
    out_cm = pl.pallas_call(
        functools.partial(_out_bn_kernel, cl_out=cl_out),
        out_shape=jax.ShapeDtypeStruct((cl_out + cg_out, n * s), F32),
        grid=(g,),
        in_specs=[_stream_spec(cl_out, b * s), _stream_spec(cg_out, b * s),
                  _const_spec((cl_out, 1), multi), _const_spec((cl_out, 1), multi),
                  _const_spec((cg_out, 1), multi), _const_spec((cg_out, 1), multi)],
        out_specs=_stream_spec(cl_out + cg_out, b * s),
        compiler_params=cparams,
    )(yl_raw, yg_raw, al, bl, ag, bg)

    out = jnp.transpose(out_cm.reshape(cl_out + cg_out, n, s), (1, 0, 2))
    return out.reshape(n, cl_out + cg_out, h, w)


# ----------------------------------------------------------------------------
# Pure-JAX reference (mirrors the PyTorch module, training-mode BatchNorm)
# ----------------------------------------------------------------------------
def _conv1x1_ref(x, w):                                   # w: (out, in)
    return jnp.einsum("oi,nihw->nohw", w, x)


def _bn_ref(y, gamma, beta, eps=1e-5):
    mean = y.mean(axis=(0, 2, 3), keepdims=True)
    var = y.var(axis=(0, 2, 3), keepdims=True)
    y = (y - mean) * jax.lax.rsqrt(var + eps)
    return y * gamma.reshape(1, -1, 1, 1) + beta.reshape(1, -1, 1, 1)


def _fourier_unit_ref(x, w, gamma, beta):
    f = jnp.fft.fft2(x, norm="ortho")
    ff = jnp.concatenate([f.real, f.imag], axis=1)
    y = jnp.maximum(_bn_ref(_conv1x1_ref(ff, w), gamma, beta), 0.0)
    zr, zi = jnp.split(y, 2, axis=1)
    return jnp.fft.ifft2(zr + 1j * zi, norm="ortho").real


def _spectral_transform_ref(x, p, enable_lfu=True):
    x1 = jnp.maximum(_bn_ref(_conv1x1_ref(x, p["st_w1"]),
                             p["st_bn1_g"], p["st_bn1_b"]), 0.0)
    c = x1.shape[1]
    out = _fourier_unit_ref(x1, p["fu_w"], p["fu_g"], p["fu_b"])
    if enable_lfu:
        xq = x1[:, :c // 4]
        xs = jnp.concatenate(jnp.split(xq, 2, axis=2), axis=1)
        xs = jnp.concatenate(jnp.split(xs, 2, axis=3), axis=1)
        xs = _fourier_unit_ref(xs, p["lfu_w"], p["lfu_g"], p["lfu_b"])
        xs = jnp.tile(xs, (1, 1, 2, 2))
    else:
        xs = 0.0
    return _conv1x1_ref(x1 + out + xs, p["st_w2"])


def _ffc_bn_act_ref(x, p, ratio_gin=0.5, enable_lfu=True):
    cin = x.shape[1]
    cl = int(cin * (1 - ratio_gin))
    xl, xg = x[:, :cl], x[:, cl:]
    out_l = _conv1x1_ref(xl, p["w_l2l"]) + _conv1x1_ref(xg, p["w_g2l"])
    out_g = _conv1x1_ref(xl, p["w_l2g"]) + _spectral_transform_ref(xg, p, enable_lfu)
    out_l = _bn_ref(out_l, p["bn_l_g"], p["bn_l_b"])      # act_l = Identity
    out_g = _bn_ref(out_g, p["bn_g_g"], p["bn_g_b"])      # act_g = Identity
    return jnp.concatenate([out_l, out_g], axis=1)


# ----------------------------------------------------------------------------
# Deterministic parameter construction + run
# ----------------------------------------------------------------------------
def make_params(key, in_channels, out_channels, ratio_gin=0.5, ratio_gout=0.5):
    cl_in = int(in_channels * (1 - ratio_gin))
    cg_in = in_channels - cl_in
    cg_out = int(out_channels * ratio_gout)
    cl_out = out_channels - cg_out
    c = cg_out // 2
    ks = jax.random.split(key, 18)
    r = lambda k, shape: 0.3 * jax.random.normal(k, shape, F32)
    g = lambda k, m: 1.0 + 0.1 * jax.random.normal(k, (m,), F32)
    b = lambda k, m: 0.1 * jax.random.normal(k, (m,), F32)
    return {
        "w_l2l": r(ks[0], (cl_out, cl_in)),
        "w_g2l": r(ks[1], (cl_out, cg_in)),
        "w_l2g": r(ks[2], (cg_out, cl_in)),
        "st_w1": r(ks[3], (c, cg_in)),
        "st_bn1_g": g(ks[4], c), "st_bn1_b": b(ks[5], c),
        "fu_w": r(ks[6], (2 * c, 2 * c)),
        "fu_g": g(ks[7], 2 * c), "fu_b": b(ks[8], 2 * c),
        "lfu_w": r(ks[9], (2 * c, 2 * c)),
        "lfu_g": g(ks[10], 2 * c), "lfu_b": b(ks[11], 2 * c),
        "st_w2": r(ks[12], (cg_out, c)),
        "bn_l_g": g(ks[13], cl_out), "bn_l_b": b(ks[14], cl_out),
        "bn_g_g": g(ks[15], cg_out), "bn_g_b": b(ks[16], cg_out),
    }


if __name__ == "__main__":
    key = jax.random.PRNGKey(0)
    kx, kp = jax.random.split(key)

    N, Cin, H, W = 2, 8, 16, 16
    Cout = 16
    ratio_gin = ratio_gout = 0.5

    x = jax.random.normal(kx, (N, Cin, H, W), F32)
    params = make_params(kp, Cin, Cout, ratio_gin, ratio_gout)

    ref = _ffc_bn_act_ref(x, params, ratio_gin=ratio_gin, enable_lfu=True)
    scale = float(jnp.max(jnp.abs(ref))) + 1e-6

    # f32 path, tight tolerance (catches a mis-scaled DFT / BN).
    fwd_f32 = jax.jit(functools.partial(
        ffc_bn_act_forward, ratio_gin=ratio_gin, ratio_gout=ratio_gout,
        enable_lfu=True, compute_dtype=jnp.float32))
    out_f32 = jax.block_until_ready(fwd_f32(x, params))
    assert out_f32.shape == (N, Cout, H, W), out_f32.shape
    err32 = float(jnp.max(jnp.abs(out_f32 - ref)))
    assert err32 <= 3e-3 * scale + 3e-3, f"f32 mismatch vs reference: {err32}"

    # bf16 operators / intermediates (fast path), looser tolerance.
    fwd_bf16 = jax.jit(functools.partial(
        ffc_bn_act_forward, ratio_gin=ratio_gin, ratio_gout=ratio_gout,
        enable_lfu=True, compute_dtype=jnp.bfloat16))
    out_bf16 = jax.block_until_ready(fwd_bf16(x, params))
    err16 = float(jnp.max(jnp.abs(out_bf16 - ref)))
    assert err16 <= 0.06 * scale + 0.06, f"bf16 mismatch vs reference: {err16}"

    print("KERNEL_OK")
</pallas_src>

<mosaic_0001>
module attributes {stable_mosaic.version = 11 : i64} {
  func.func @_entry_kernel(%arg0: i32, %arg1: memref<8x512xf32, #tpu.memory_space<vmem>>, %arg2: memref<12x8xf32, #tpu.memory_space<vmem>>, %arg3: memref<8x512xf32, #tpu.memory_space<vmem>>, %arg4: memref<4x512xf32, #tpu.memory_space<vmem>>, %arg5: memref<1x12x2xf32, #tpu.memory_space<vmem>>) attributes {dimension_semantics = [#tpu.dimension_semantics<parallel>], iteration_bounds = array<i64: 1>, scalar_prefetch = 0 : i64, scratch_operands = 0 : i64, tpu.core_type = #tpu.core_type<tc>, window_params = [{transform_indices = @transform_0, window_bounds = array<i64: 8, 512>}, {pipeline_mode = #tpu.pipeline_mode<synchronous>, transform_indices = @transform_1, window_bounds = array<i64: 12, 8>}, {transform_indices = @transform_2, window_bounds = array<i64: 8, 512>}, {transform_indices = @transform_3, window_bounds = array<i64: 4, 512>}, {transform_indices = @transform_4, window_bounds = array<i64: 1, 12, 2>}]} {
    %c0 = arith.constant 0 : index
    %c0_0 = arith.constant 0 : index
    %0 = vector.load %arg1[%c0, %c0_0] : memref<8x512xf32, #tpu.memory_space<vmem>>, vector<8x512xf32>
    %c0_1 = arith.constant 0 : index
    %c0_2 = arith.constant 0 : index
    %1 = vector.load %arg2[%c0_1, %c0_2] : memref<12x8xf32, #tpu.memory_space<vmem>>, vector<12x8xf32>
    %cst = arith.constant dense<0.000000e+00> : vector<12x512xf32>
    %2 = tpu.matmul %1, %0, %cst {dimension_numbers = #tpu.dot_dimension_numbers<[1], [0], [0], [1], [0, 0, 1, 1], [], []>} : vector<12x8xf32>, vector<8x512xf32>, vector<12x512xf32> -> vector<12x512xf32>
    %cst_3 = arith.constant dense<0.000000e+00> : vector<12xf32>
    %3 = vector.multi_reduction <add>, %2, %cst_3 [1] : vector<12x512xf32> to vector<12xf32>
    %4 = vector.shape_cast %3 : vector<12xf32> to vector<12x1xf32>
    %5 = arith.mulf %2, %2 : vector<12x512xf32>
    %cst_4 = arith.constant dense<0.000000e+00> : vector<12xf32>
    %6 = vector.multi_reduction <add>, %5, %cst_4 [1] : vector<12x512xf32> to vector<12xf32>
    %7 = vector.shape_cast %6 : vector<12xf32> to vector<12x1xf32>
    %8 = tpu.concatenate %4, %7 in 1 : vector<12x1xf32>, vector<12x1xf32> -> vector<12x2xf32>
    %c0_5 = arith.constant 0 : index
    %c0_6 = arith.constant 0 : index
    %c0_7 = arith.constant 0 : index
    %9 = vector.load %arg5[%c0_5, %c0_6, %c0_7] : memref<1x12x2xf32, #tpu.memory_space<vmem>>, vector<1x12x2xf32>
    %10 = vector.shape_cast %9 : vector<1x12x2xf32> to vector<12x2xf32>
    %11 = vector.shape_cast %8 : vector<12x2xf32> to vector<1x12x2xf32>
    tpu.vector_store %arg5[%c0_5, %c0_6, %c0_7], %11 {strides = array<i32>} : memref<1x12x2xf32, #tpu.memory_space<vmem>>, vector<1x12x2xf32>,
    %12 = vector.extract_strided_slice %2 {offsets = [0, 0], sizes = [8, 512], strides = [1, 1]} : vector<12x512xf32> to vector<8x512xf32>
    %c0_8 = arith.constant 0 : index
    %c0_9 = arith.constant 0 : index
    %13 = vector.load %arg3[%c0_8, %c0_9] : memref<8x512xf32, #tpu.memory_space<vmem>>, vector<8x512xf32>
    tpu.vector_store %arg3[%c0_8, %c0_9], %12 {strides = array<i32>} : memref<8x512xf32, #tpu.memory_space<vmem>>, vector<8x512xf32>,
    %14 = vector.extract_strided_slice %2 {offsets = [8, 0], sizes = [4, 512], strides = [1, 1]} : vector<12x512xf32> to vector<4x512xf32>
    %c0_10 = arith.constant 0 : index
    %c0_11 = arith.constant 0 : index
    %15 = vector.load %arg4[%c0_10, %c0_11] : memref<4x512xf32, #tpu.memory_space<vmem>>, vector<4x512xf32>
    tpu.vector_store %arg4[%c0_10, %c0_11], %14 {strides = array<i32>} : memref<4x512xf32, #tpu.memory_space<vmem>>, vector<4x512xf32>,
    return
  }
  func.func @transform_0(%arg0: i32) -> (i32, i32) {
    %c0_i32 = arith.constant 0 : i32
    %c0_i32_0 = arith.constant 0 : i32
    return %c0_i32, %arg0 : i32, i32
  }
  func.func @transform_1(%arg0: i32) -> (i32, i32) {
    %c0_i32 = arith.constant 0 : i32
    %c0_i32_0 = arith.constant 0 : i32
    %c0_i32_1 = arith.constant 0 : i32
    return %c0_i32, %c0_i32_0 : i32, i32
  }
  func.func @transform_2(%arg0: i32) -> (i32, i32) {
    %c0_i32 = arith.constant 0 : i32
    %c0_i32_0 = arith.constant 0 : i32
    return %c0_i32, %arg0 : i32, i32
  }
  func.func @transform_3(%arg0: i32) -> (i32, i32) {
    %c0_i32 = arith.constant 0 : i32
    %c0_i32_0 = arith.constant 0 : i32
    return %c0_i32, %arg0 : i32, i32
  }
  func.func @transform_4(%arg0: i32) -> (i32, i32, i32) {
    %c0_i32 = arith.constant 0 : i32
    %c0_i32_0 = arith.constant 0 : i32
    %c0_i32_1 = arith.constant 0 : i32
    return %arg0, %c0_i32, %c0_i32_0 : i32, i32, i32
  }
}

module attributes {stable_mosaic.version = 11 : i64} {
  func.func @_spectral_mid_kernel(%arg0: i32, %arg1: memref<4x512xf32, #tpu.memory_space<vmem>>, %arg2: memref<4x1xf32, #tpu.memory_space<vmem>>, %arg3: memref<4x1xf32, #tpu.memory_space<vmem>>, %arg4: memref<256x512xf32, #tpu.memory_space<vmem>>, %arg5: memref<8x4xf32, #tpu.memory_space<vmem>>, %arg6: memref<8x4xf32, #tpu.memory_space<vmem>>, %arg7: memref<256x512xf32, #tpu.memory_space<vmem>>, %arg8: memref<8x4xf32, #tpu.memory_space<vmem>>, %arg9: memref<8x4xf32, #tpu.memory_space<vmem>>, %arg10: memref<4x1024xf32, #tpu.memory_space<vmem>>, %arg11: memref<1x8x2xf32, #tpu.memory_space<vmem>>, %arg12: memref<4x256xf32, #tpu.memory_space<vmem>>, %arg13: memref<1x8x2xf32, #tpu.memory_space<vmem>>) attributes {dimension_semantics = [#tpu.dimension_semantics<parallel>], iteration_bounds = array<i64: 1>, scalar_prefetch = 0 : i64, scratch_operands = 0 : i64, tpu.core_type = #tpu.core_type<tc>, window_params = [{transform_indices = @transform_0, window_bounds = array<i64: 4, 512>}, {pipeline_mode = #tpu.pipeline_mode<synchronous>, transform_indices = @transform_1, window_bounds = array<i64: 4, 1>}, {pipeline_mode = #tpu.pipeline_mode<synchronous>, transform_indices = @transform_2, window_bounds = array<i64: 4, 1>}, {pipeline_mode = #tpu.pipeline_mode<synchronous>, transform_indices = @transform_3, window_bounds = array<i64: 256, 512>}, {pipeline_mode = #tpu.pipeline_mode<synchronous>, transform_indices = @transform_4, window_bounds = array<i64: 8, 4>}, {pipeline_mode = #tpu.pipeline_mode<synchronous>, transform_indices = @transform_5, window_bounds = array<i64: 8, 4>}, {pipeline_mode = #tpu.pipeline_mode<synchronous>, transform_indices = @transform_6, window_bounds = array<i64: 256, 512>}, {pipeline_mode = #tpu.pipeline_mode<synchronous>, transform_indices = @transform_7, window_bounds = array<i64: 8, 4>}, {pipeline_mode = #tpu.pipeline_mode<synchronous>, transform_indices = @transform_8, window_bounds = array<i64: 8, 4>}, {transform_indices = @transform_9, window_bounds = array<i64: 4, 1024>}, {transform_indices = @transform_10, window_bounds = array<i64: 1, 8, 2>}, {transform_indices = @transform_11, window_bounds = array<i64: 4, 256>}, {transform_indices = @transform_12, window_bounds = array<i64: 1, 8, 2>}]} {
    %c0 = arith.constant 0 : index
    %c0_0 = arith.constant 0 : index
    %0 = vector.load %arg1[%c0, %c0_0] : memref<4x512xf32, #tpu.memory_space<vmem>>, vector<4x512xf32>
    %c0_1 = arith.constant 0 : index
    %c0_2 = arith.constant 0 : index
    %1 = vector.load %arg2[%c0_1, %c0_2] : memref<4x1xf32, #tpu.memory_space<vmem>>, vector<4x1xf32>
    %2 = vector.broadcast %1 : vector<4x1xf32> to vector<4x512xf32>
    %3 = arith.mulf %0, %2 : vector<4x512xf32>
    %c0_3 = arith.constant 0 : index
    %c0_4 = arith.constant 0 : index
    %4 = vector.load %arg3[%c0_3, %c0_4] : memref<4x1xf32, #tpu.memory_space<vmem>>, vector<4x1xf32>
    %5 = vector.broadcast %4 : vector<4x1xf32> to vector<4x512xf32>
    %6 = arith.addf %3, %5 : vector<4x512xf32>
    %cst = arith.constant 0.000000e+00 : f32
    %7 = vector.broadcast %cst : f32 to vector<4x512xf32>
    %8 = arith.maximumf %6, %7 : vector<4x512xf32>
    %9 = vector.extract_strided_slice %8 {offsets = [0, 0], sizes = [4, 256], strides = [1, 1]} : vector<4x512xf32> to vector<4x256xf32>
    %10 = vector.extract_strided_slice %8 {offsets = [0, 256], sizes = [4, 256], strides = [1, 1]} : vector<4x512xf32> to vector<4x256xf32>
    %11 = tpu.concatenate %9, %10 in 0 : vector<4x256xf32>, vector<4x256xf32> -> vector<8x256xf32>
    %c0_5 = arith.constant 0 : index
    %c0_6 = arith.constant 0 : index
    %12 = vector.load %arg4[%c0_5, %c0_6] : memref<256x512xf32, #tpu.memory_space<vmem>>, vector<256x512xf32>
    %cst_7 = arith.constant dense<0.000000e+00> : vector<8x512xf32>
    %13 = tpu.matmul %11, %12, %cst_7 {dimension_numbers = #tpu.dot_dimension_numbers<[1], [0], [0], [1], [0, 0, 1, 1], [], []>} : vector<8x256xf32>, vector<256x512xf32>, vector<8x512xf32> -> vector<8x512xf32>
    %14 = vector.extract_strided_slice %13 {offsets = [0, 0], sizes = [4, 256], strides = [1, 1]} : vector<8x512xf32> to vector<4x256xf32>
    %15 = vector.extract_strided_slice %13 {offsets = [4, 0], sizes = [4, 256], strides = [1, 1]} : vector<8x512xf32> to vector<4x256xf32>
    %16 = tpu.concatenate %14, %15 in 1 : vector<4x256xf32>, vector<4x256xf32> -> vector<4x512xf32>
    %17 = vector.extract_strided_slice %13 {offsets = [0, 256], sizes = [4, 256], strides = [1, 1]} : vector<8x512xf32> to vector<4x256xf32>
    %18 = vector.extract_strided_slice %13 {offsets = [4, 256], sizes = [4, 256], strides = [1, 1]} : vector<8x512xf32> to vector<4x256xf32>
    %19 = tpu.concatenate %17, %18 in 1 : vector<4x256xf32>, vector<4x256xf32> -> vector<4x512xf32>
    %c0_8 = arith.constant 0 : index
    %c0_9 = arith.constant 0 : index
    %20 = vector.load %arg5[%c0_8, %c0_9] : memref<8x4xf32, #tpu.memory_space<vmem>>, vector<8x4xf32>
    %cst_10 = arith.constant dense<0.000000e+00> : vector<8x512xf32>
    %21 = tpu.matmul %20, %16, %cst_10 {dimension_numbers = #tpu.dot_dimension_numbers<[1], [0], [0], [1], [0, 0, 1, 1], [], []>} : vector<8x4xf32>, vector<4x512xf32>, vector<8x512xf32> -> vector<8x512xf32>
    %c0_11 = arith.constant 0 : index
    %c0_12 = arith.constant 0 : index
    %22 = vector.load %arg6[%c0_11, %c0_12] : memref<8x4xf32, #tpu.memory_space<vmem>>, vector<8x4xf32>
    %cst_13 = arith.constant dense<0.000000e+00> : vector<8x512xf32>
    %23 = tpu.matmul %22, %19, %cst_13 {dimension_numbers = #tpu.dot_dimension_numbers<[1], [0], [0], [1], [0, 0, 1, 1], [], []>} : vector<8x4xf32>, vector<4x512xf32>, vector<8x512xf32> -> vector<8x512xf32>
    %24 = arith.addf %21, %23 : vector<8x512xf32>
    %cst_14 = arith.constant dense<0.000000e+00> : vector<8xf32>
    %25 = vector.multi_reduction <add>, %24, %cst_14 [1] : vector<8x512xf32> to vector<8xf32>
    %26 = vector.shape_cast %25 : vector<8xf32> to vector<8x1xf32>
    %27 = arith.mulf %24, %24 : vector<8x512xf32>
    %cst_15 = arith.constant dense<0.000000e+00> : vector<8xf32>
    %28 = vector.multi_reduction <add>, %27, %cst_15 [1] : vector<8x512xf32> to vector<8xf32>
    %29 = vector.shape_cast %28 : vector<8xf32> to vector<8x1xf32>
    %30 = tpu.concatenate %26, %29 in 1 : vector<8x1xf32>, vector<8x1xf32> -> vector<8x2xf32>
    %c0_16 = arith.constant 0 : index
    %c0_17 = arith.constant 0 : index
    %c0_18 = arith.constant 0 : index
    %31 = vector.load %arg11[%c0_16, %c0_17, %c0_18] : memref<1x8x2xf32, #tpu.memory_space<vmem>>, vector<1x8x2xf32>
    %32 = vector.shape_cast %31 : vector<1x8x2xf32> to vector<8x2xf32>
    %33 = vector.shape_cast %30 : vector<8x2xf32> to vector<1x8x2xf32>
    tpu.vector_store %arg11[%c0_16, %c0_17, %c0_18], %33 {strides = array<i32>} : memref<1x8x2xf32, #tpu.memory_space<vmem>>, vector<1x8x2xf32>,
    %34 = vector.extract_strided_slice %24 {offsets = [0, 0], sizes = [4, 256], strides = [1, 1]} : vector<8x512xf32> to vector<4x256xf32>
    %35 = vector.extract_strided_slice %24 {offsets = [4, 0], sizes = [4, 256], strides = [1, 1]} : vector<8x512xf32> to vector<4x256xf32>
    %36 = vector.extract_strided_slice %24 {offsets = [0, 256], sizes = [4, 256], strides = [1, 1]} : vector<8x512xf32> to vector<4x256xf32>
    %37 = vector.extract_strided_slice %24 {offsets = [4, 256], sizes = [4, 256], strides = [1, 1]} : vector<8x512xf32> to vector<4x256xf32>
    %38 = tpu.concatenate %34, %35, %36, %37 in 1 : vector<4x256xf32>, vector<4x256xf32>, vector<4x256xf32>, vector<4x256xf32> -> vector<4x1024xf32>
    %c0_19 = arith.constant 0 : index
    %c0_20 = arith.constant 0 : index
    %39 = vector.load %arg10[%c0_19, %c0_20] : memref<4x1024xf32, #tpu.memory_space<vmem>>, vector<4x1024xf32>
    tpu.vector_store %arg10[%c0_19, %c0_20], %38 {strides = array<i32>} : memref<4x1024xf32, #tpu.memory_space<vmem>>, vector<4x1024xf32>,
    %40 = vector.extract_strided_slice %8 {offsets = [0, 0], sizes = [1, 256], strides = [1, 1]} : vector<4x512xf32> to vector<1x256xf32>
    %41 = vector.extract_strided_slice %8 {offsets = [0, 256], sizes = [1, 256], strides = [1, 1]} : vector<4x512xf32> to vector<1x256xf32>
    %42 = tpu.concatenate %40, %41 in 0 : vector<1x256xf32>, vector<1x256xf32> -> vector<2x256xf32>
    %c0_21 = arith.constant 0 : index
    %c0_22 = arith.constant 0 : index
    %43 = vector.load %arg7[%c0_21, %c0_22] : memref<256x512xf32, #tpu.memory_space<vmem>>, vector<256x512xf32>
    %cst_23 = arith.constant dense<0.000000e+00> : vector<2x512xf32>
    %44 = tpu.matmul %42, %43, %cst_23 {dimension_numbers = #tpu.dot_dimension_numbers<[1], [0], [0], [1], [0, 0, 1, 1], [], []>} : vector<2x256xf32>, vector<256x512xf32>, vector<2x512xf32> -> vector<2x512xf32>
    %45 = vector.extract_strided_slice %44 {offsets = [0, 0], sizes = [1, 64], strides = [1, 1]} : vector<2x512xf32> to vector<1x64xf32>
    %46 = vector.extract_strided_slice %44 {offsets = [1, 0], sizes = [1, 64], strides = [1, 1]} : vector<2x512xf32> to vector<1x64xf32>
    %47 = tpu.concatenate %45, %46 in 1 : vector<1x64xf32>, vector<1x64xf32> -> vector<1x128xf32>
    %48 = vector.extract_strided_slice %44 {offsets = [0, 256], sizes = [1, 64], strides = [1, 1]} : vector<2x512xf32> to vector<1x64xf32>
    %49 = vector.extract_strided_slice %44 {offsets = [1, 256], sizes = [1, 64], strides = [1, 1]} : vector<2x512xf32> to vector<1x64xf32>
    %50 = tpu.concatenate %48, %49 in 1 : vector<1x64xf32>, vector<1x64xf32> -> vector<1x128xf32>
    %51 = vector.extract_strided_slice %44 {offsets = [0, 64], sizes = [1, 64], strides = [1, 1]} : vector<2x512xf32> to vector<1x64xf32>
    %52 = vector.extract_strided_slice %44 {offsets = [1, 64], sizes = [1, 64], strides = [1, 1]} : vector<2x512xf32> to vector<1x64xf32>
    %53 = tpu.concatenate %51, %52 in 1 : vector<1x64xf32>, vector<1x64xf32> -> vector<1x128xf32>
    %54 = vector.extract_strided_slice %44 {offsets = [0, 320], sizes = [1, 64], strides = [1, 1]} : vector<2x512xf32> to vector<1x64xf32>
    %55 = vector.extract_strided_slice %44 {offsets = [1, 320], sizes = [1, 64], strides = [1, 1]} : vector<2x512xf32> to vector<1x64xf32>
    %56 = tpu.concatenate %54, %55 in 1 : vector<1x64xf32>, vector<1x64xf32> -> vector<1x128xf32>
    %57 = vector.extract_strided_slice %44 {offsets = [0, 128], sizes = [1, 64], strides = [1, 1]} : vector<2x512xf32> to vector<1x64xf32>
    %58 = vector.extract_strided_slice %44 {offsets = [1, 128], sizes = [1, 64], strides = [1, 1]} : vector<2x512xf32> to vector<1x64xf32>
    %59 = tpu.concatenate %57, %58 in 1 : vector<1x64xf32>, vector<1x64xf32> -> vector<1x128xf32>
    %60 = vector.extract_strided_slice %44 {offsets = [0, 384], sizes = [1, 64], strides = [1, 1]} : vector<2x512xf32> to vector<1x64xf32>
    %61 = vector.extract_strided_slice %44 {offsets = [1, 384], sizes = [1, 64], strides = [1, 1]} : vector<2x512xf32> to vector<1x64xf32>
    %62 = tpu.concatenate %60, %61 in 1 : vector<1x64xf32>, vector<1x64xf32> -> vector<1x128xf32>
    %63 = vector.extract_strided_slice %44 {offsets = [0, 192], sizes = [1, 64], strides = [1, 1]} : vector<2x512xf32> to vector<1x64xf32>
    %64 = vector.extract_strided_slice %44 {offsets = [1, 192], sizes = [1, 64], strides = [1, 1]} : vector<2x512xf32> to vector<1x64xf32>
    %65 = tpu.concatenate %63, %64 in 1 : vector<1x64xf32>, vector<1x64xf32> -> vector<1x128xf32>
    %66 = vector.extract_strided_slice %44 {offsets = [0, 448], sizes = [1, 64], strides = [1, 1]} : vector<2x512xf32> to vector<1x64xf32>
    %67 = vector.extract_strided_slice %44 {offsets = [1, 448], sizes = [1, 64], strides = [1, 1]} : vector<2x512xf32> to vector<1x64xf32>
    %68 = tpu.concatenate %66, %67 in 1 : vector<1x64xf32>, vector<1x64xf32> -> vector<1x128xf32>
    %69 = tpu.concatenate %47, %53, %59, %65 in 0 : vector<1x128xf32>, vector<1x128xf32>, vector<1x128xf32>, vector<1x128xf32> -> vector<4x128xf32>
    %70 = tpu.concatenate %50, %56, %62, %68 in 0 : vector<1x128xf32>, vector<1x128xf32>, vector<1x128xf32>, vector<1x128xf32> -> vector<4x128xf32>
    %c0_24 = arith.constant 0 : index
    %c0_25 = arith.constant 0 : index
    %71 = vector.load %arg8[%c0_24, %c0_25] : memref<8x4xf32, #tpu.memory_space<vmem>>, vector<8x4xf32>
    %cst_26 = arith.constant dense<0.000000e+00> : vector<8x128xf32>
    %72 = tpu.matmul %71, %69, %cst_26 {dimension_numbers = #tpu.dot_dimension_numbers<[1], [0], [0], [1], [0, 0, 1, 1], [], []>} : vector<8x4xf32>, vector<4x128xf32>, vector<8x128xf32> -> vector<8x128xf32>
    %c0_27 = arith.constant 0 : index
    %c0_28 = arith.constant 0 : index
    %73 = vector.load %arg9[%c0_27, %c0_28] : memref<8x4xf32, #tpu.memory_space<vmem>>, vector<8x4xf32>
    %cst_29 = arith.constant dense<0.000000e+00> : vector<8x128xf32>
    %74 = tpu.matmul %73, %70, %cst_29 {dimension_numbers = #tpu.dot_dimension_numbers<[1], [0], [0], [1], [0, 0, 1, 1], [], []>} : vector<8x4xf32>, vector<4x128xf32>, vector<8x128xf32> -> vector<8x128xf32>
    %75 = arith.addf %72, %74 : vector<8x128xf32>
    %cst_30 = arith.constant dense<0.000000e+00> : vector<8xf32>
    %76 = vector.multi_reduction <add>, %75, %cst_30 [1] : vector<8x128xf32> to vector<8xf32>
    %77 = vector.shape_cast %76 : vector<8xf32> to vector<8x1xf32>
    %78 = arith.mulf %75, %75 : vector<8x128xf32>
    %cst_31 = arith.constant dense<0.000000e+00> : vector<8xf32>
    %79 = vector.multi_reduction <add>, %78, %cst_31 [1] : vector<8x128xf32> to vector<8xf32>
    %80 = vector.shape_cast %79 : vector<8xf32> to vector<8x1xf32>
    %81 = tpu.concatenate %77, %80 in 1 : vector<8x1xf32>, vector<8x1xf32> -> vector<8x2xf32>
    %c0_32 = arith.constant 0 : index
    %c0_33 = arith.constant 0 : index
    %c0_34 = arith.constant 0 : index
    %82 = vector.load %arg13[%c0_32, %c0_33, %c0_34] : memref<1x8x2xf32, #tpu.memory_space<vmem>>, vector<1x8x2xf32>
    %83 = vector.shape_cast %82 : vector<1x8x2xf32> to vector<8x2xf32>
    %84 = vector.shape_cast %81 : vector<8x2xf32> to vector<1x8x2xf32>
    tpu.vector_store %arg13[%c0_32, %c0_33, %c0_34], %84 {strides = array<i32>} : memref<1x8x2xf32, #tpu.memory_space<vmem>>, vector<1x8x2xf32>,
    %85 = vector.extract_strided_slice %75 {offsets = [0, 0], sizes = [4, 64], strides = [1, 1]} : vector<8x128xf32> to vector<4x64xf32>
    %86 = vector.extract_strided_slice %75 {offsets = [4, 0], sizes = [4, 64], strides = [1, 1]} : vector<8x128xf32> to vector<4x64xf32>
    %87 = vector.extract_strided_slice %75 {offsets = [0, 64], sizes = [4, 64], strides = [1, 1]} : vector<8x128xf32> to vector<4x64xf32>
    %88 = vector.extract_strided_slice %75 {offsets = [4, 64], sizes = [4, 64], strides = [1, 1]} : vector<8x128xf32> to vector<4x64xf32>
    %89 = tpu.concatenate %85, %86, %87, %88 in 1 : vector<4x64xf32>, vector<4x64xf32>, vector<4x64xf32>, vector<4x64xf32> -> vector<4x256xf32>
    %c0_35 = arith.constant 0 : index
    %c0_36 = arith.constant 0 : index
    %90 = vector.load %arg12[%c0_35, %c0_36] : memref<4x256xf32, #tpu.memory_space<vmem>>, vector<4x256xf32>
    tpu.vector_store %arg12[%c0_35, %c0_36], %89 {strides = array<i32>} : memref<4x256xf32, #tpu.memory_space<vmem>>, vector<4x256xf32>,
    return
  }
  func.func @transform_0(%arg0: i32) -> (i32, i32) {
    %c0_i32 = arith.constant 0 : i32
    %c0_i32_0 = arith.constant 0 : i32
    return %c0_i32, %arg0 : i32, i32
  }
  func.func @transform_1(%arg0: i32) -> (i32, i32) {
    %c0_i32 = arith.constant 0 : i32
    %c0_i32_0 = arith.constant 0 : i32
    %c0_i32_1 = arith.constant 0 : i32
    return %c0_i32, %c0_i32_0 : i32, i32
  }
  func.func @transform_2(%arg0: i32) -> (i32, i32) {
    %c0_i32 = arith.constant 0 : i32
    %c0_i32_0 = arith.constant 0 : i32
    %c0_i32_1 = arith.constant 0 : i32
    return %c0_i32, %c0_i32_0 : i32, i32
  }
  func.func @transform_3(%arg0: i32) -> (i32, i32) {
    %c0_i32 = arith.constant 0 : i32
    %c0_i32_0 = arith.constant 0 : i32
    %c0_i32_1 = arith.constant 0 : i32
    return %c0_i32, %c0_i32_0 : i32, i32
  }
  func.func @transform_4(%arg0: i32) -> (i32, i32) {
    %c0_i32 = arith.constant 0 : i32
    %c0_i32_0 = arith.constant 0 : i32
    %c0_i32_1 = arith.constant 0 : i32
    return %c0_i32, %c0_i32_0 : i32, i32
  }
  func.func @transform_5(%arg0: i32) -> (i32, i32) {
    %c0_i32 = arith.constant 0 : i32
    %c0_i32_0 = arith.constant 0 : i32
    %c0_i32_1 = arith.constant 0 : i32
    return %c0_i32, %c0_i32_0 : i32, i32
  }
  func.func @transform_6(%arg0: i32) -> (i32, i32) {
    %c0_i32 = arith.constant 0 : i32
    %c0_i32_0 = arith.constant 0 : i32
    %c0_i32_1 = arith.constant 0 : i32
    return %c0_i32, %c0_i32_0 : i32, i32
  }
  func.func @transform_7(%arg0: i32) -> (i32, i32) {
    %c0_i32 = arith.constant 0 : i32
    %c0_i32_0 = arith.constant 0 : i32
    %c0_i32_1 = arith.constant 0 : i32
    return %c0_i32, %c0_i32_0 : i32, i32
  }
  func.func @transform_8(%arg0: i32) -> (i32, i32) {
    %c0_i32 = arith.constant 0 : i32
    %c0_i32_0 = arith.constant 0 : i32
    %c0_i32_1 = arith.constant 0 : i32
    return %c0_i32, %c0_i32_0 : i32, i32
  }
  func.func @transform_9(%arg0: i32) -> (i32, i32) {
    %c0_i32 = arith.constant 0 : i32
    %c0_i32_0 = arith.constant 0 : i32
    return %c0_i32, %arg0 : i32, i32
  }
  func.func @transform_10(%arg0: i32) -> (i32, i32, i32) {
    %c0_i32 = arith.constant 0 : i32
    %c0_i32_0 = arith.constant 0 : i32
    %c0_i32_1 = arith.constant 0 : i32
    return %arg0, %c0_i32, %c0_i32_0 : i32, i32, i32
  }
  func.func @transform_11(%arg0: i32) -> (i32, i32) {
    %c0_i32 = arith.constant 0 : i32
    %c0_i32_0 = arith.constant 0 : i32
    return %c0_i32, %arg0 : i32, i32
  }
  func.func @transform_12(%arg0: i32) -> (i32, i32, i32) {
    %c0_i32 = arith.constant 0 : i32
    %c0_i32_0 = arith.constant 0 : i32
    %c0_i32_1 = arith.constant 0 : i32
    return %arg0, %c0_i32, %c0_i32_0 : i32, i32, i32
  }
}

module attributes {stable_mosaic.version = 11 : i64} {
  func.func @_out_bn_kernel(%arg0: i32, %arg1: memref<8x512xf32, #tpu.memory_space<vmem>>, %arg2: memref<8x512xf32, #tpu.memory_space<vmem>>, %arg3: memref<8x1xf32, #tpu.memory_space<vmem>>, %arg4: memref<8x1xf32, #tpu.memory_space<vmem>>, %arg5: memref<8x1xf32, #tpu.memory_space<vmem>>, %arg6: memref<8x1xf32, #tpu.memory_space<vmem>>, %arg7: memref<16x512xf32, #tpu.memory_space<vmem>>) attributes {dimension_semantics = [#tpu.dimension_semantics<parallel>], iteration_bounds = array<i64: 1>, scalar_prefetch = 0 : i64, scratch_operands = 0 : i64, tpu.core_type = #tpu.core_type<tc>, window_params = [{transform_indices = @transform_0, window_bounds = array<i64: 8, 512>}, {transform_indices = @transform_1, window_bounds = array<i64: 8, 512>}, {pipeline_mode = #tpu.pipeline_mode<synchronous>, transform_indices = @transform_2, window_bounds = array<i64: 8, 1>}, {pipeline_mode = #tpu.pipeline_mode<synchronous>, transform_indices = @transform_3, window_bounds = array<i64: 8, 1>}, {pipeline_mode = #tpu.pipeline_mode<synchronous>, transform_indices = @transform_4, window_bounds = array<i64: 8, 1>}, {pipeline_mode = #tpu.pipeline_mode<synchronous>, transform_indices = @transform_5, window_bounds = array<i64: 8, 1>}, {transform_indices = @transform_6, window_bounds = array<i64: 16, 512>}]} {
    %c0 = arith.constant 0 : index
    %c0_0 = arith.constant 0 : index
    %0 = vector.load %arg1[%c0, %c0_0] : memref<8x512xf32, #tpu.memory_space<vmem>>, vector<8x512xf32>
    %c0_1 = arith.constant 0 : index
    %c0_2 = arith.constant 0 : index
    %1 = vector.load %arg3[%c0_1, %c0_2] : memref<8x1xf32, #tpu.memory_space<vmem>>, vector<8x1xf32>
    %2 = vector.broadcast %1 : vector<8x1xf32> to vector<8x512xf32>
    %3 = arith.mulf %0, %2 : vector<8x512xf32>
    %c0_3 = arith.constant 0 : index
    %c0_4 = arith.constant 0 : index
    %4 = vector.load %arg4[%c0_3, %c0_4] : memref<8x1xf32, #tpu.memory_space<vmem>>, vector<8x1xf32>
    %5 = vector.broadcast %4 : vector<8x1xf32> to vector<8x512xf32>
    %6 = arith.addf %3, %5 : vector<8x512xf32>
    %c0_5 = arith.constant 0 : index
    %c0_6 = arith.constant 0 : index
    %7 = vector.load %arg7[%c0_5, %c0_6] : memref<16x512xf32, #tpu.memory_space<vmem>>, vector<8x512xf32>
    tpu.vector_store %arg7[%c0_5, %c0_6], %6 {strides = array<i32>} : memref<16x512xf32, #tpu.memory_space<vmem>>, vector<8x512xf32>,
    %c0_7 = arith.constant 0 : index
    %c0_8 = arith.constant 0 : index
    %8 = vector.load %arg2[%c0_7, %c0_8] : memref<8x512xf32, #tpu.memory_space<vmem>>, vector<8x512xf32>
    %c0_9 = arith.constant 0 : index
    %c0_10 = arith.constant 0 : index
    %9 = vector.load %arg5[%c0_9, %c0_10] : memref<8x1xf32, #tpu.memory_space<vmem>>, vector<8x1xf32>
    %10 = vector.broadcast %9 : vector<8x1xf32> to vector<8x512xf32>
    %11 = arith.mulf %8, %10 : vector<8x512xf32>
    %c0_11 = arith.constant 0 : index
    %c0_12 = arith.constant 0 : index
    %12 = vector.load %arg6[%c0_11, %c0_12] : memref<8x1xf32, #tpu.memory_space<vmem>>, vector<8x1xf32>
    %13 = vector.broadcast %12 : vector<8x1xf32> to vector<8x512xf32>
    %14 = arith.addf %11, %13 : vector<8x512xf32>
    %c8 = arith.constant 8 : index
    %c0_13 = arith.constant 0 : index
    %15 = vector.load %arg7[%c8, %c0_13] : memref<16x512xf32, #tpu.memory_space<vmem>>, vector<8x512xf32>
    tpu.vector_store %arg7[%c8, %c0_13], %14 {strides = array<i32>} : memref<16x512xf32, #tpu.memory_space<vmem>>, vector<8x512xf32>,
    return
  }
  func.func @transform_0(%arg0: i32) -> (i32, i32) {
    %c0_i32 = arith.constant 0 : i32
    %c0_i32_0 = arith.constant 0 : i32
    return %c0_i32, %arg0 : i32, i32
  }
  func.func @transform_1(%arg0: i32) -> (i32, i32) {
    %c0_i32 = arith.constant 0 : i32
    %c0_i32_0 = arith.constant 0 : i32
    return %c0_i32, %arg0 : i32, i32
  }
  func.func @transform_2(%arg0: i32) -> (i32, i32) {
    %c0_i32 = arith.constant 0 : i32
    %c0_i32_0 = arith.constant 0 : i32
    %c0_i32_1 = arith.constant 0 : i32
    return %c0_i32, %c0_i32_0 : i32, i32
  }
  func.func @transform_3(%arg0: i32) -> (i32, i32) {
    %c0_i32 = arith.constant 0 : i32
    %c0_i32_0 = arith.constant 0 : i32
    %c0_i32_1 = arith.constant 0 : i32
    return %c0_i32, %c0_i32_0 : i32, i32
  }
  func.func @transform_4(%arg0: i32) -> (i32, i32) {
    %c0_i32 = arith.constant 0 : i32
    %c0_i32_0 = arith.constant 0 : i32
    %c0_i32_1 = arith.constant 0 : i32
    return %c0_i32, %c0_i32_0 : i32, i32
  }
  func.func @transform_5(%arg0: i32) -> (i32, i32) {
    %c0_i32 = arith.constant 0 : i32
    %c0_i32_0 = arith.constant 0 : i32
    %c0_i32_1 = arith.constant 0 : i32
    return %c0_i32, %c0_i32_0 : i32, i32
  }
  func.func @transform_6(%arg0: i32) -> (i32, i32) {
    %c0_i32 = arith.constant 0 : i32
    %c0_i32_0 = arith.constant 0 : i32
    return %c0_i32, %arg0 : i32, i32
  }
}

module attributes {stable_mosaic.version = 11 : i64} {
  func.func @_spectral_out_kernel(%arg0: i32, %arg1: memref<4x512xf32, #tpu.memory_space<vmem>>, %arg2: memref<4x1xf32, #tpu.memory_space<vmem>>, %arg3: memref<4x1xf32, #tpu.memory_space<vmem>>, %arg4: memref<4x1024xf32, #tpu.memory_space<vmem>>, %arg5: memref<4x512xf32, #tpu.memory_space<vmem>>, %arg6: memref<4x512xf32, #tpu.memory_space<vmem>>, %arg7: memref<4x256xf32, #tpu.memory_space<vmem>>, %arg8: memref<4x128xf32, #tpu.memory_space<vmem>>, %arg9: memref<4x128xf32, #tpu.memory_space<vmem>>, %arg10: memref<8x512xf32, #tpu.memory_space<vmem>>, %arg11: memref<512x256xf32, #tpu.memory_space<vmem>>, %arg12: memref<128x256xf32, #tpu.memory_space<vmem>>, %arg13: memref<8x4xf32, #tpu.memory_space<vmem>>, %arg14: memref<8x4xf32, #tpu.memory_space<vmem>>, %arg15: memref<8x512xf32, #tpu.memory_space<vmem>>, %arg16: memref<1x8x2xf32, #tpu.memory_space<vmem>>) attributes {dimension_semantics = [#tpu.dimension_semantics<parallel>], iteration_bounds = array<i64: 1>, scalar_prefetch = 0 : i64, scratch_operands = 0 : i64, tpu.core_type = #tpu.core_type<tc>, window_params = [{transform_indices = @transform_0, window_bounds = array<i64: 4, 512>}, {pipeline_mode = #tpu.pipeline_mode<synchronous>, transform_indices = @transform_1, window_bounds = array<i64: 4, 1>}, {pipeline_mode = #tpu.pipeline_mode<synchronous>, transform_indices = @transform_2, window_bounds = array<i64: 4, 1>}, {transform_indices = @transform_3, window_bounds = array<i64: 4, 1024>}, {pipeline_mode = #tpu.pipeline_mode<synchronous>, transform_indices = @transform_4, window_bounds = array<i64: 4, 512>}, {pipeline_mode = #tpu.pipeline_mode<synchronous>, transform_indices = @transform_5, window_bounds = array<i64: 4, 512>}, {transform_indices = @transform_6, window_bounds = array<i64: 4, 256>}, {pipeline_mode = #tpu.pipeline_mode<synchronous>, transform_indices = @transform_7, window_bounds = array<i64: 4, 128>}, {pipeline_mode = #tpu.pipeline_mode<synchronous>, transform_indices = @transform_8, window_bounds = array<i64: 4, 128>}, {transform_indices = @transform_9, window_bounds = array<i64: 8, 512>}, {pipeline_mode = #tpu.pipeline_mode<synchronous>, transform_indices = @transform_10, window_bounds = array<i64: 512, 256>}, {pipeline_mode = #tpu.pipeline_mode<synchronous>, transform_indices = @transform_11, window_bounds = array<i64: 128, 256>}, {pipeline_mode = #tpu.pipeline_mode<synchronous>, transform_indices = @transform_12, window_bounds = array<i64: 8, 4>}, {pipeline_mode = #tpu.pipeline_mode<synchronous>, transform_indices = @transform_13, window_bounds = array<i64: 8, 4>}, {transform_indices = @transform_14, window_bounds = array<i64: 8, 512>}, {transform_indices = @transform_15, window_bounds = array<i64: 1, 8, 2>}]} {
    %c0 = arith.constant 0 : index
    %c0_0 = arith.constant 0 : index
    %0 = vector.load %arg1[%c0, %c0_0] : memref<4x512xf32, #tpu.memory_space<vmem>>, vector<4x512xf32>
    %c0_1 = arith.constant 0 : index
    %c0_2 = arith.constant 0 : index
    %1 = vector.load %arg2[%c0_1, %c0_2] : memref<4x1xf32, #tpu.memory_space<vmem>>, vector<4x1xf32>
    %2 = vector.broadcast %1 : vector<4x1xf32> to vector<4x512xf32>
    %3 = arith.mulf %0, %2 : vector<4x512xf32>
    %c0_3 = arith.constant 0 : index
    %c0_4 = arith.constant 0 : index
    %4 = vector.load %arg3[%c0_3, %c0_4] : memref<4x1xf32, #tpu.memory_space<vmem>>, vector<4x1xf32>
    %5 = vector.broadcast %4 : vector<4x1xf32> to vector<4x512xf32>
    %6 = arith.addf %3, %5 : vector<4x512xf32>
    %cst = arith.constant 0.000000e+00 : f32
    %7 = vector.broadcast %cst : f32 to vector<4x512xf32>
    %8 = arith.maximumf %6, %7 : vector<4x512xf32>
    %c0_5 = arith.constant 0 : index
    %c0_6 = arith.constant 0 : index
    %9 = vector.load %arg4[%c0_5, %c0_6] : memref<4x1024xf32, #tpu.memory_space<vmem>>, vector<4x1024xf32>
    %10 = vector.extract_strided_slice %9 {offsets = [0, 0], sizes = [4, 512], strides = [1, 1]} : vector<4x1024xf32> to vector<4x512xf32>
    %c0_7 = arith.constant 0 : index
    %c0_8 = arith.constant 0 : index
    %11 = vector.load %arg5[%c0_7, %c0_8] : memref<4x512xf32, #tpu.memory_space<vmem>>, vector<4x512xf32>
    %12 = arith.mulf %10, %11 : vector<4x512xf32>
    %c0_9 = arith.constant 0 : index
    %c0_10 = arith.constant 0 : index
    %13 = vector.load %arg6[%c0_9, %c0_10] : memref<4x512xf32, #tpu.memory_space<vmem>>, vector<4x512xf32>
    %14 = arith.addf %12, %13 : vector<4x512xf32>
    %cst_11 = arith.constant 0.000000e+00 : f32
    %15 = vector.broadcast %cst_11 : f32 to vector<4x512xf32>
    %16 = arith.maximumf %14, %15 : vector<4x512xf32>
    %17 = vector.extract_strided_slice %9 {offsets = [0, 512], sizes = [4, 512], strides = [1, 1]} : vector<4x1024xf32> to vector<4x512xf32>
    %c0_12 = arith.constant 0 : index
    %c0_13 = arith.constant 0 : index
    %18 = vector.load %arg5[%c0_12, %c0_13] : memref<4x512xf32, #tpu.memory_space<vmem>>, vector<4x512xf32>
    %19 = arith.mulf %17, %18 : vector<4x512xf32>
    %c0_14 = arith.constant 0 : index
    %c0_15 = arith.constant 0 : index
    %20 = vector.load %arg6[%c0_14, %c0_15] : memref<4x512xf32, #tpu.memory_space<vmem>>, vector<4x512xf32>
    %21 = arith.addf %19, %20 : vector<4x512xf32>
    %cst_16 = arith.constant 0.000000e+00 : f32
    %22 = vector.broadcast %cst_16 : f32 to vector<4x512xf32>
    %23 = arith.maximumf %21, %22 : vector<4x512xf32>
    %24 = tpu.concatenate %16, %23 in 0 : vector<4x512xf32>, vector<4x512xf32> -> vector<8x512xf32>
    %c0_17 = arith.constant 0 : index
    %c0_18 = arith.constant 0 : index
    %25 = vector.load %arg11[%c0_17, %c0_18] : memref<512x256xf32, #tpu.memory_space<vmem>>, vector<512x256xf32>
    %cst_19 = arith.constant dense<0.000000e+00> : vector<8x256xf32>
    %26 = tpu.matmul %24, %25, %cst_19 {dimension_numbers = #tpu.dot_dimension_numbers<[1], [0], [0], [1], [0, 0, 1, 1], [], []>} : vector<8x512xf32>, vector<512x256xf32>, vector<8x256xf32> -> vector<8x256xf32>
    %c0_20 = arith.constant 0 : index
    %c0_21 = arith.constant 0 : index
    %27 = vector.load %arg7[%c0_20, %c0_21] : memref<4x256xf32, #tpu.memory_space<vmem>>, vector<4x256xf32>
    %28 = vector.extract_strided_slice %27 {offsets = [0, 0], sizes = [4, 128], strides = [1, 1]} : vector<4x256xf32> to vector<4x128xf32>
    %c0_22 = arith.constant 0 : index
    %c0_23 = arith.constant 0 : index
    %29 = vector.load %arg8[%c0_22, %c0_23] : memref<4x128xf32, #tpu.memory_space<vmem>>, vector<4x128xf32>
    %30 = arith.mulf %28, %29 : vector<4x128xf32>
    %c0_24 = arith.constant 0 : index
    %c0_25 = arith.constant 0 : index
    %31 = vector.load %arg9[%c0_24, %c0_25] : memref<4x128xf32, #tpu.memory_space<vmem>>, vector<4x128xf32>
    %32 = arith.addf %30, %31 : vector<4x128xf32>
    %cst_26 = arith.constant 0.000000e+00 : f32
    %33 = vector.broadcast %cst_26 : f32 to vector<4x128xf32>
    %34 = arith.maximumf %32, %33 : vector<4x128xf32>
    %35 = vector.extract_strided_slice %27 {offsets = [0, 128], sizes = [4, 128], strides = [1, 1]} : vector<4x256xf32> to vector<4x128xf32>
    %c0_27 = arith.constant 0 : index
    %c0_28 = arith.constant 0 : index
    %36 = vector.load %arg8[%c0_27, %c0_28] : memref<4x128xf32, #tpu.memory_space<vmem>>, vector<4x128xf32>
    %37 = arith.mulf %35, %36 : vector<4x128xf32>
    %c0_29 = arith.constant 0 : index
    %c0_30 = arith.constant 0 : index
    %38 = vector.load %arg9[%c0_29, %c0_30] : memref<4x128xf32, #tpu.memory_space<vmem>>, vector<4x128xf32>
    %39 = arith.addf %37, %38 : vector<4x128xf32>
    %cst_31 = arith.constant 0.000000e+00 : f32
    %40 = vector.broadcast %cst_31 : f32 to vector<4x128xf32>
    %41 = arith.maximumf %39, %40 : vector<4x128xf32>
    %42 = tpu.concatenate %34, %41 in 0 : vector<4x128xf32>, vector<4x128xf32> -> vector<8x128xf32>
    %c0_32 = arith.constant 0 : index
    %c0_33 = arith.constant 0 : index
    %43 = vector.load %arg12[%c0_32, %c0_33] : memref<128x256xf32, #tpu.memory_space<vmem>>, vector<128x256xf32>
    %cst_34 = arith.constant dense<0.000000e+00> : vector<8x256xf32>
    %44 = tpu.matmul %42, %43, %cst_34 {dimension_numbers = #tpu.dot_dimension_numbers<[1], [0], [0], [1], [0, 0, 1, 1], [], []>} : vector<8x128xf32>, vector<128x256xf32>, vector<8x256xf32> -> vector<8x256xf32>
    %45 = arith.addf %26, %44 : vector<8x256xf32>
    %46 = vector.extract_strided_slice %45 {offsets = [0, 0], sizes = [4, 256], strides = [1, 1]} : vector<8x256xf32> to vector<4x256xf32>
    %47 = vector.extract_strided_slice %45 {offsets = [4, 0], sizes = [4, 256], strides = [1, 1]} : vector<8x256xf32> to vector<4x256xf32>
    %48 = tpu.concatenate %46, %47 in 1 : vector<4x256xf32>, vector<4x256xf32> -> vector<4x512xf32>
    %49 = arith.addf %8, %48 : vector<4x512xf32>
    %c0_35 = arith.constant 0 : index
    %c0_36 = arith.constant 0 : index
    %50 = vector.load %arg10[%c0_35, %c0_36] : memref<8x512xf32, #tpu.memory_space<vmem>>, vector<8x512xf32>
    %51 = vector.extract_strided_slice %50 {offsets = [0, 0], sizes = [4, 512], strides = [1, 1]} : vector<8x512xf32> to vector<4x512xf32>
    %c0_37 = arith.constant 0 : index
    %c0_38 = arith.constant 0 : index
    %52 = vector.load %arg13[%c0_37, %c0_38] : memref<8x4xf32, #tpu.memory_space<vmem>>, vector<8x4xf32>
    %cst_39 = arith.constant dense<0.000000e+00> : vector<8x512xf32>
    %53 = tpu.matmul %52, %49, %cst_39 {dimension_numbers = #tpu.dot_dimension_numbers<[1], [0], [0], [1], [0, 0, 1, 1], [], []>} : vector<8x4xf32>, vector<4x512xf32>, vector<8x512xf32> -> vector<8x512xf32>
    %c0_40 = arith.constant 0 : index
    %c0_41 = arith.constant 0 : index
    %54 = vector.load %arg14[%c0_40, %c0_41] : memref<8x4xf32, #tpu.memory_space<vmem>>, vector<8x4xf32>
    %cst_42 = arith.constant dense<0.000000e+00> : vector<8x512xf32>
    %55 = tpu.matmul %54, %51, %cst_42 {dimension_numbers = #tpu.dot_dimension_numbers<[1], [0], [0], [1], [0, 0, 1, 1], [], []>} : vector<8x4xf32>, vector<4x512xf32>, vector<8x512xf32> -> vector<8x512xf32>
    %56 = arith.addf %53, %55 : vector<8x512xf32>
    %cst_43 = arith.constant dense<0.000000e+00> : vector<8xf32>
    %57 = vector.multi_reduction <add>, %56, %cst_43 [1] : vector<8x512xf32> to vector<8xf32>
    %58 = vector.shape_cast %57 : vector<8xf32> to vector<8x1xf32>
    %59 = arith.mulf %56, %56 : vector<8x512xf32>
    %cst_44 = arith.constant dense<0.000000e+00> : vector<8xf32>
    %60 = vector.multi_reduction <add>, %59, %cst_44 [1] : vector<8x512xf32> to vector<8xf32>
    %61 = vector.shape_cast %60 : vector<8xf32> to vector<8x1xf32>
    %62 = tpu.concatenate %58, %61 in 1 : vector<8x1xf32>, vector<8x1xf32> -> vector<8x2xf32>
    %c0_45 = arith.constant 0 : index
    %c0_46 = arith.constant 0 : index
    %c0_47 = arith.constant 0 : index
    %63 = vector.load %arg16[%c0_45, %c0_46, %c0_47] : memref<1x8x2xf32, #tpu.memory_space<vmem>>, vector<1x8x2xf32>
    %64 = vector.shape_cast %63 : vector<1x8x2xf32> to vector<8x2xf32>
    %65 = vector.shape_cast %62 : vector<8x2xf32> to vector<1x8x2xf32>
    tpu.vector_store %arg16[%c0_45, %c0_46, %c0_47], %65 {strides = array<i32>} : memref<1x8x2xf32, #tpu.memory_space<vmem>>, vector<1x8x2xf32>,
    %c0_48 = arith.constant 0 : index
    %c0_49 = arith.constant 0 : index
    %66 = vector.load %arg15[%c0_48, %c0_49] : memref<8x512xf32, #tpu.memory_space<vmem>>, vector<8x512xf32>
    tpu.vector_store %arg15[%c0_48, %c0_49], %56 {strides = array<i32>} : memref<8x512xf32, #tpu.memory_space<vmem>>, vector<8x512xf32>,
    return
  }
  func.func @transform_0(%arg0: i32) -> (i32, i32) {
    %c0_i32 = arith.constant 0 : i32
    %c0_i32_0 = arith.constant 0 : i32
    return %c0_i32, %arg0 : i32, i32
  }
  func.func @transform_1(%arg0: i32) -> (i32, i32) {
    %c0_i32 = arith.constant 0 : i32
    %c0_i32_0 = arith.constant 0 : i32
    %c0_i32_1 = arith.constant 0 : i32
    return %c0_i32, %c0_i32_0 : i32, i32
  }
  func.func @transform_2(%arg0: i32) -> (i32, i32) {
    %c0_i32 = arith.constant 0 : i32
    %c0_i32_0 = arith.constant 0 : i32
    %c0_i32_1 = arith.constant 0 : i32
    return %c0_i32, %c0_i32_0 : i32, i32
  }
  func.func @transform_3(%arg0: i32) -> (i32, i32) {
    %c0_i32 = arith.constant 0 : i32
    %c0_i32_0 = arith.constant 0 : i32
    return %c0_i32, %arg0 : i32, i32
  }
  func.func @transform_4(%arg0: i32) -> (i32, i32) {
    %c0_i32 = arith.constant 0 : i32
    %c0_i32_0 = arith.constant 0 : i32
    %c0_i32_1 = arith.constant 0 : i32
    return %c0_i32, %c0_i32_0 : i32, i32
  }
  func.func @transform_5(%arg0: i32) -> (i32, i32) {
    %c0_i32 = arith.constant 0 : i32
    %c0_i32_0 = arith.constant 0 : i32
    %c0_i32_1 = arith.constant 0 : i32
    return %c0_i32, %c0_i32_0 : i32, i32
  }
  func.func @transform_6(%arg0: i32) -> (i32, i32) {
    %c0_i32 = arith.constant 0 : i32
    %c0_i32_0 = arith.constant 0 : i32
    return %c0_i32, %arg0 : i32, i32
  }
  func.func @transform_7(%arg0: i32) -> (i32, i32) {
    %c0_i32 = arith.constant 0 : i32
    %c0_i32_0 = arith.constant 0 : i32
    %c0_i32_1 = arith.constant 0 : i32
    return %c0_i32, %c0_i32_0 : i32, i32
  }
  func.func @transform_8(%arg0: i32) -> (i32, i32) {
    %c0_i32 = arith.constant 0 : i32
    %c0_i32_0 = arith.constant 0 : i32
    %c0_i32_1 = arith.constant 0 : i32
    return %c0_i32, %c0_i32_0 : i32, i32
  }
  func.func @transform_9(%arg0: i32) -> (i32, i32) {
    %c0_i32 = arith.constant 0 : i32
    %c0_i32_0 = arith.constant 0 : i32
    return %c0_i32, %arg0 : i32, i32
  }
  func.func @transform_10(%arg0: i32) -> (i32, i32) {
    %c0_i32 = arith.constant 0 : i32
    %c0_i32_0 = arith.constant 0 : i32
    %c0_i32_1 = arith.constant 0 : i32
    return %c0_i32, %c0_i32_0 : i32, i32
  }
  func.func @transform_11(%arg0: i32) -> (i32, i32) {
    %c0_i32 = arith.constant 0 : i32
    %c0_i32_0 = arith.constant 0 : i32
    %c0_i32_1 = arith.constant 0 : i32
    return %c0_i32, %c0_i32_0 : i32, i32
  }
  func.func @transform_12(%arg0: i32) -> (i32, i32) {
    %c0_i32 = arith.constant 0 : i32
    %c0_i32_0 = arith.constant 0 : i32
    %c0_i32_1 = arith.constant 0 : i32
    return %c0_i32, %c0_i32_0 : i32, i32
  }
  func.func @transform_13(%arg0: i32) -> (i32, i32) {
    %c0_i32 = arith.constant 0 : i32
    %c0_i32_0 = arith.constant 0 : i32
    %c0_i32_1 = arith.constant 0 : i32
    return %c0_i32, %c0_i32_0 : i32, i32
  }
  func.func @transform_14(%arg0: i32) -> (i32, i32) {
    %c0_i32 = arith.constant 0 : i32
    %c0_i32_0 = arith.constant 0 : i32
    return %c0_i32, %arg0 : i32, i32
  }
  func.func @transform_15(%arg0: i32) -> (i32, i32, i32) {
    %c0_i32 = arith.constant 0 : i32
    %c0_i32_0 = arith.constant 0 : i32
    %c0_i32_1 = arith.constant 0 : i32
    return %arg0, %c0_i32, %c0_i32_0 : i32, i32, i32
  }
}

</mosaic_0001>

<llo_original>
// kernel: ffc_bn_act_forward.4
$region0: #{ffc_bn_act_forward.4}
  #allocation0 [shape = 'u32[]', space=smem, size = 0x4, offset = 0x4, fixed_abs, tag = 'smem constant byte address 0x4 - core index']
  #allocation1 [shape = 'u32[144,128]{1,0:T(1,128)}', space=vmem, size = 0x12000, scoped, tag = 'internal scratch']
  %s0 = inlined_call_operand.vmem [shape: f32[8,512], index: 0, kind: input, shape index: {}]
  %s1 = inlined_call_operand.vmem [shape: f32[12,8], index: 1, kind: input, shape index: {}]
  %s2 = inlined_call_operand.vmem [shape: f32[8,512], index: 2, kind: output, shape index: {0}]
  %s3 = inlined_call_operand.vmem [shape: f32[4,512], index: 3, kind: output, shape index: {1}]
  %s4 = inlined_call_operand.vmem [shape: f32[1,12,2], index: 4, kind: output, shape index: {2}]
  %5 = xla_tuple %s2, %s3, %s4
  %s6 = sld [smem:[#allocation0]]
  $region34: #{ffc_bn_act_forward.4} parent=0
    _
  %s8 = ssub.s32 1, %s6
  %s9 = scalar_select 0, %s8, %s6
  // Predicated region
  $region2: #{ffc_bn_act_forward.4} parent=0 // pred_check
    _
  $region3: #{ffc_bn_act_forward.4} parent=0 // pred_check_branch
    %11 = sbr.rel (0) target = $region5
  $region4: #{ffc_bn_act_forward.4} parent=0 // pred_region
    _
  $region5: #{ffc_bn_act_forward.4} parent=0 // pred_fallthru
    _
  // Predicated region
  $region6: #{ffc_bn_act_forward.4} parent=0 // pred_check
    _
  $region7: #{ffc_bn_act_forward.4} parent=0 // pred_check_branch
    %13 = sbr.rel (0) target = $region9
  $region8: #{ffc_bn_act_forward.4} parent=0 // pred_region
    _
  $region9: #{ffc_bn_act_forward.4} parent=0 // pred_fallthru
    _
  %v14 = vld [vmem:[%s0] sm:$0xff]
  %v15 = vld [vmem:[%s0 + $0x8] sm:$0xff]
  %v16 = vld [vmem:[%s0 + $0x10] sm:$0xff]
  %v17 = vld [vmem:[%s0 + $0x18] sm:$0xff]
  %v18 = vld [vmem:[%s1] sm:$0xff]
  %v19 = vld [vmem:[%s1 + $0x8] sm:$0xf]
  %vm20 = vcmask 64512
  %v22 = vsel %vm20, %v18, 0
  %v25 = vsel %vm20, %v19, 0
  %27 = vmatprep.subr.mxu0 %v15
  %28 = vmatpush1.msra.mxu0 %v14
  %29 = vmatprep.subr.mxu0 0.0
  %30 = vmatpush1.msra.mxu0 0.0
  %31 = vmatprep.subr.mxu0 0.0
  %32 = vmatpush1.msra.mxu0 0.0
  %33 = vmatprep.subr.mxu0 0.0
  %34 = vmatpush1.msra.mxu0 0.0
  %35 = vmatprep.subr.mxu0 0.0
  %36 = vmatpush1.msra.mxu0 0.0
  %37 = vmatprep.subr.mxu0 0.0
  %38 = vmatpush1.msra.mxu0 0.0
  %39 = vmatprep.subr.mxu0 0.0
  %40 = vmatpush1.msra.mxu0 0.0
  %41 = vmatprep.subr.mxu0 0.0
  %42 = vmatpush1.msra.mxu0 0.0
  %43 = vmatprep.subr.mxu0 0.0
  %44 = vmatpush1.msra.mxu0 0.0
  %45 = vmatprep.subr.mxu0 0.0
  %46 = vmatpush1.msra.mxu0 0.0
  %47 = vmatprep.subr.mxu0 0.0
  %48 = vmatpush1.msra.mxu0 0.0
  %49 = vmatprep.subr.mxu0 0.0
  %50 = vmatpush1.msra.mxu0 0.0
  %51 = vmatprep.subr.mxu0 0.0
  %52 = vmatpush1.msra.mxu0 0.0
  %53 = vmatprep.subr.mxu0 0.0
  %54 = vmatpush1.msra.mxu0 0.0
  %55 = vmatprep.subr.mxu0 0.0
  %56 = vmatpush1.msra.mxu0 0.0
  %57 = vmatprep.subr.mxu0 0.0
  %58 = vmatpush1.msra.mxu0 0.0
  %59 = vmatprep.subr.mxu0 0.0
  %60 = vmatpush1.msra.mxu0 0.0
  %61 = vmatprep.subr.mxu0 0.0
  %62 = vmatpush1.msra.mxu0 0.0
  %63 = vmatprep.subr.mxu0 0.0
  %64 = vmatpush1.msra.mxu0 0.0
  %65 = vmatprep.subr.mxu0 0.0
  %66 = vmatpush1.msra.mxu0 0.0
  %67 = vmatprep.subr.mxu0 0.0
  %68 = vmatpush1.msra.mxu0 0.0
  %69 = vmatprep.subr.mxu0 0.0
  %70 = vmatpush1.msra.mxu0 0.0
  %71 = vmatprep.subr.mxu0 0.0
  %72 = vmatpush1.msra.mxu0 0.0
  %73 = vmatprep.subr.mxu0 0.0
  %74 = vmatpush1.msra.mxu0 0.0
  %75 = vmatprep.subr.mxu0 0.0
  %76 = vmatpush1.msra.mxu0 0.0
  %77 = vmatprep.subr.mxu0 0.0
  %78 = vmatpush1.msra.mxu0 0.0
  %79 = vmatprep.subr.mxu0 0.0
  %80 = vmatpush1.msra.mxu0 0.0
  %81 = vmatprep.subr.mxu0 0.0
  %82 = vmatpush1.msra.mxu0 0.0
  %83 = vmatprep.subr.mxu0 0.0
  %84 = vmatpush1.msra.mxu0 0.0
  %85 = vmatprep.subr.mxu0 0.0
  %86 = vmatpush1.msra.mxu0 0.0
  %87 = vmatprep.subr.mxu0 0.0
  %88 = vmatpush1.msra.mxu0 0.0
  %89 = vmatprep.subr.mxu0 0.0
  %90 = vmatpush1.msra.mxu0 0.0
  %91 = vmatprep.mubr.f32.mxu0 0.0
  %92 = vmatmul.mubr.f32.gmra.mrb[0].mxu0 %v22
  %v93 = vpop.f32.mrb[0].mxu0
  %v94 = vadd.f32 0.0, %v93
  %v95 = vpop.f32.mrb[0].mxu0
  %v96 = vadd.f32 0.0, %v95
  %97 = vmatprep.mubr.f32.mxu0 0.0
  %98 = vmatmul.mubr.f32.gmra.mrb[0].mxu0 %v25
  %v99 = vpop.f32.mrb[0].mxu0
  %v100 = vadd.f32 0.0, %v99
  %v101 = vpop.f32.mrb[0].mxu0
  %v102 = vadd.f32 0.0, %v101
  %103 = vdwg.mxu0
  %104 = vmatprep.subr.mxu0 %v17
  %105 = vmatpush1.msra.mxu0 %v16
  %106 = vmatprep.subr.mxu0 0.0
  %107 = vmatpush1.msra.mxu0 0.0
  %108 = vmatprep.subr.mxu0 0.0
  %109 = vmatpush1.msra.mxu0 0.0
  %110 = vmatprep.subr.mxu0 0.0
  %111 = vmatpush1.msra.mxu0 0.0
  %112 = vmatprep.subr.mxu0 0.0
  %113 = vmatpush1.msra.mxu0 0.0
  %114 = vmatprep.subr.mxu0 0.0
  %115 = vmatpush1.msra.mxu0 0.0
  %116 = vmatprep.subr.mxu0 0.0
  %117 = vmatpush1.msra.mxu0 0.0
  %118 = vmatprep.subr.mxu0 0.0
  %119 = vmatpush1.msra.mxu0 0.0
  %120 = vmatprep.subr.mxu0 0.0
  %121 = vmatpush1.msra.mxu0 0.0
  %122 = vmatprep.subr.mxu0 0.0
  %123 = vmatpush1.msra.mxu0 0.0
  %124 = vmatprep.subr.mxu0 0.0
  %125 = vmatpush1.msra.mxu0 0.0
  %126 = vmatprep.subr.mxu0 0.0
  %127 = vmatpush1.msra.mxu0 0.0
  %128 = vmatprep.subr.mxu0 0.0
  %129 = vmatpush1.msra.mxu0 0.0
  %130 = vmatprep.subr.mxu0 0.0
  %131 = vmatpush1.msra.mxu0 0.0
  %132 = vmatprep.subr.mxu0 0.0
  %133 = vmatpush1.msra.mxu0 0.0
  %134 = vmatprep.subr.mxu0 0.0
  %135 = vmatpush1.msra.mxu0 0.0
  %136 = vmatprep.subr.mxu0 0.0
  %137 = vmatpush1.msra.mxu0 0.0
  %138 = vmatprep.subr.mxu0 0.0
  %139 = vmatpush1.msra.mxu0 0.0
  %140 = vmatprep.subr.mxu0 0.0
  %141 = vmatpush1.msra.mxu0 0.0
  %142 = vmatprep.subr.mxu0 0.0
  %143 = vmatpush1.msra.mxu0 0.0
  %144 = vmatprep.subr.mxu0 0.0
  %145 = vmatpush1.msra.mxu0 0.0
  %146 = vmatprep.subr.mxu0 0.0
  %147 = vmatpush1.msra.mxu0 0.0
  %148 = vmatprep.subr.mxu0 0.0
  %149 = vmatpush1.msra.mxu0 0.0
  %150 = vmatprep.subr.mxu0 0.0
  %151 = vmatpush1.msra.mxu0 0.0
  %152 = vmatprep.subr.mxu0 0.0
  %153 = vmatpush1.msra.mxu0 0.0
  %154 = vmatprep.subr.mxu0 0.0
  %155 = vmatpush1.msra.mxu0 0.0
  %156 = vmatprep.subr.mxu0 0.0
  %157 = vmatpush1.msra.mxu0 0.0
  %158 = vmatprep.subr.mxu0 0.0
  %159 = vmatpush1.msra.mxu0 0.0
  %160 = vmatprep.subr.mxu0 0.0
  %161 = vmatpush1.msra.mxu0 0.0
  %162 = vmatprep.subr.mxu0 0.0
  %163 = vmatpush1.msra.mxu0 0.0
  %164 = vmatprep.subr.mxu0 0.0
  %165 = vmatpush1.msra.mxu0 0.0
  %166 = vmatprep.subr.mxu0 0.0
  %167 = vmatpush1.msra.mxu0 0.0
  %168 = vmatprep.mubr.f32.mxu0 0.0
  %169 = vmatmul.mubr.f32.gmra.mrb[0].mxu0 %v22
  %v170 = vpop.f32.mrb[0].mxu0
  %v171 = vadd.f32 0.0, %v170
  %v172 = vpop.f32.mrb[0].mxu0
  %v173 = vadd.f32 0.0, %v172
  %174 = vmatprep.mubr.f32.mxu0 0.0
  %175 = vmatmul.mubr.f32.gmra.mrb[0].mxu0 %v25
  %v176 = vpop.f32.mrb[0].mxu0
  %v177 = vadd.f32 0.0, %v176
  %v178 = vpop.f32.mrb[0].mxu0
  %v179 = vadd.f32 0.0, %v178
  %180 = vdwg.mxu0
  %v181 = vadd.f32 %v94, %v96
  %v182 = vadd.f32 %v181, %v171
  %v183 = vadd.f32 %v182, %v173
  %184 = vadd.xlane.f32.xlu0 %v183
  %v185 = vpop.xlane.xlu0 %184
  %vm186 = vcmask 1043456
  %v187 = vsel %vm186, %v100, 0.0
  %v188 = vsel %vm186, %v102, 0.0
  %v189 = vadd.f32 %v187, %v188
  %v190 = vsel %vm186, %v177, 0.0
  %v191 = vadd.f32 %v189, %v190
  %v192 = vsel %vm186, %v179, 0.0
  %v193 = vadd.f32 %v191, %v192
  %194 = vadd.xlane.f32.xlu0 %v193
  %v195 = vpop.xlane.xlu0 %194
  %v196 = vmul.f32 %v94, %v94
  %v197 = vmul.f32 %v96, %v96
  %v198 = vmul.f32 %v171, %v171
  %v199 = vmul.f32 %v173, %v173
  %v200 = vmul.f32 %v100, %v100
  %v201 = vmul.f32 %v102, %v102
  %v202 = vmul.f32 %v177, %v177
  %v203 = vmul.f32 %v179, %v179
  %v204 = vadd.f32 %v196, %v197
  %v205 = vadd.f32 %v204, %v198
  %v206 = vadd.f32 %v205, %v199
  %207 = vadd.xlane.f32.xlu0 %v206
  %v208 = vpop.xlane.xlu0 %207
  %v209 = vsel %vm186, %v200, 0.0
  %v210 = vsel %vm186, %v201, 0.0
  %v211 = vadd.f32 %v209, %v210
  %v212 = vsel %vm186, %v202, 0.0
  %v213 = vadd.f32 %v211, %v212
  %v214 = vsel %vm186, %v203, 0.0
  %v215 = vadd.f32 %v213, %v214
  %216 = vadd.xlane.f32.xlu0 %v215
  %v217 = vpop.xlane.xlu0 %216
  %vm218 = vcmask 7168
  %v219 = vsel %vm218, %v185, %v208
  %v220 = vsel %vm218, %v195, %v217
  %vm221 = vcmask 15360
  %222 = vst.msk [vmem:[%s4] sm:$0xff] %vm221, %v219
  %vm223 = vcmask 11264
  %224 = vst.msk [vmem:[%s4 + $0x8] sm:$0xf] %vm223, %v220
  %225 = vst [vmem:[%s2] sm:$0xff] %v94
  %226 = vst [vmem:[%s2 + $0x8] sm:$0xff] %v96
  %227 = vst [vmem:[%s2 + $0x10] sm:$0xff] %v171
  %228 = vst [vmem:[%s2 + $0x18] sm:$0xff] %v173
  %v233 = vcombine.low %v100, %v102
  %v234 = vcombine.low %v177, %v179
  %237 = vst [vmem:[%s3] sm:$0xff] %v233
  %238 = vst [vmem:[%s3 + $0x8] sm:$0xff] %v234
  // Predicated region
  $region10: #{ffc_bn_act_forward.4} parent=0 // pred_check
    _
  $region11: #{ffc_bn_act_forward.4} parent=0 // pred_check_branch
    %240 = sbr.rel (0) target = $region13
  $region12: #{ffc_bn_act_forward.4} parent=0 // pred_region
    _
  $region13: #{ffc_bn_act_forward.4} parent=0 // pred_fallthru
    _
  // Predicated region
  $region14: #{ffc_bn_act_forward.4} parent=0 // pred_check
    _
  $region15: #{ffc_bn_act_forward.4} parent=0 // pred_check_branch
    %242 = sbr.rel (0) target = $region17
  $region16: #{ffc_bn_act_forward.4} parent=0 // pred_region
    _
  $region17: #{ffc_bn_act_forward.4} parent=0 // pred_fallthru
    _
  // Predicated region
  $region18: #{ffc_bn_act_forward.4} parent=0 // pred_check
    _
  $region19: #{ffc_bn_act_forward.4} parent=0 // pred_check_branch
    %244 = sbr.rel (0) target = $region21
  $region20: #{ffc_bn_act_forward.4} parent=0 // pred_region
    _
  $region21: #{ffc_bn_act_forward.4} parent=0 // pred_fallthru
    _
  // Predicated region
  $region22: #{ffc_bn_act_forward.4} parent=0 // pred_check
    _
  $region23: #{ffc_bn_act_forward.4} parent=0 // pred_check_branch
    %246 = sbr.rel (0) target = $region25
  $region24: #{ffc_bn_act_forward.4} parent=0 // pred_region
    _
  $region25: #{ffc_bn_act_forward.4} parent=0 // pred_fallthru
    _
  // Predicated region
  $region26: #{ffc_bn_act_forward.4} parent=0 // pred_check
    _
  $region27: #{ffc_bn_act_forward.4} parent=0 // pred_check_branch
    %248 = sbr.rel (0) target = $region29
  $region28: #{ffc_bn_act_forward.4} parent=0 // pred_region
    _
  $region29: #{ffc_bn_act_forward.4} parent=0 // pred_fallthru
    _
  // Predicated region
  $region30: #{ffc_bn_act_forward.4} parent=0 // pred_check
    _
  $region31: #{ffc_bn_act_forward.4} parent=0 // pred_check_branch
    %250 = sbr.rel (0) target = $region33
  $region32: #{ffc_bn_act_forward.4} parent=0 // pred_region
    _
  $region33: #{ffc_bn_act_forward.4} parent=0 // pred_fallthru
    _

// kernel: ffc_bn_act_forward.5
$region0: #{ffc_bn_act_forward.5}
  #allocation0 [shape = 'u32[]', space=smem, size = 0x4, offset = 0x4, fixed_abs, tag = 'smem constant byte address 0x4 - core index']
  #allocation1 [shape = 'u32[144,128]{1,0:T(1,128)}', space=vmem, size = 0x12000, scoped, tag = 'internal scratch']
  %s0 = inlined_call_operand.vmem [shape: f32[4,512], index: 0, kind: input, shape index: {}]
  %s1 = inlined_call_operand.vmem [shape: f32[4,1], index: 1, kind: input, shape index: {}]
  %s2 = inlined_call_operand.vmem [shape: f32[4,1], index: 2, kind: input, shape index: {}]
  %s3 = inlined_call_operand.vmem [shape: f32[256,512], index: 3, kind: input, shape index: {}]
  %s4 = inlined_call_operand.vmem [shape: f32[8,4], index: 4, kind: input, shape index: {}]
  %s5 = inlined_call_operand.vmem [shape: f32[8,4], index: 5, kind: input, shape index: {}]
  %s6 = inlined_call_operand.vmem [shape: f32[256,512], index: 6, kind: input, shape index: {}]
  %s7 = inlined_call_operand.vmem [shape: f32[8,4], index: 7, kind: input, shape index: {}]
  %s8 = inlined_call_operand.vmem [shape: f32[8,4], index: 8, kind: input, shape index: {}]
  %s9 = inlined_call_operand.vmem [shape: f32[4,1024], index: 9, kind: output, shape index: {0}]
  %s10 = inlined_call_operand.vmem [shape: f32[1,8,2], index: 10, kind: output, shape index: {1}]
  %s11 = inlined_call_operand.vmem [shape: f32[4,256], index: 11, kind: output, shape index: {2}]
  %s12 = inlined_call_operand.vmem [shape: f32[1,8,2], index: 12, kind: output, shape index: {3}]
  %13 = xla_tuple %s9, %s10, %s11, %s12
  %s14 = sld [smem:[#allocation0]]
  $region70: #{ffc_bn_act_forward.5} parent=0
    _
  %s16 = ssub.s32 1, %s14
  %s17 = scalar_select 0, %s16, %s14
  // Predicated region
  $region2: #{ffc_bn_act_forward.5} parent=0 // pred_check
    _
  $region3: #{ffc_bn_act_forward.5} parent=0 // pred_check_branch
    %19 = sbr.rel (0) target = $region5
  $region4: #{ffc_bn_act_forward.5} parent=0 // pred_region
    _
  $region5: #{ffc_bn_act_forward.5} parent=0 // pred_fallthru
    _
  // Predicated region
  $region6: #{ffc_bn_act_forward.5} parent=0 // pred_check
    _
  $region7: #{ffc_bn_act_forward.5} parent=0 // pred_check_branch
    %21 = sbr.rel (0) target = $region9
  $region8: #{ffc_bn_act_forward.5} parent=0 // pred_region
    _
  $region9: #{ffc_bn_act_forward.5} parent=0 // pred_fallthru
    _
  // Predicated region
  $region10: #{ffc_bn_act_forward.5} parent=0 // pred_check
    _
  $region11: #{ffc_bn_act_forward.5} parent=0 // pred_check_branch
    %23 = sbr.rel (0) target = $region13
  $region12: #{ffc_bn_act_forward.5} parent=0 // pred_region
    _
  $region13: #{ffc_bn_act_forward.5} parent=0 // pred_fallthru
    _
  // Predicated region
  $region14: #{ffc_bn_act_forward.5} parent=0 // pred_check
    _
  $region15: #{ffc_bn_act_forward.5} parent=0 // pred_check_branch
    %25 = sbr.rel (0) target = $region17
  $region16: #{ffc_bn_act_forward.5} parent=0 // pred_region
    _
  $region17: #{ffc_bn_act_forward.5} parent=0 // pred_fallthru
    _
  // Predicated region
  $region18: #{ffc_bn_act_forward.5} parent=0 // pred_check
    _
  $region19: #{ffc_bn_act_forward.5} parent=0 // pred_check_branch
    %27 = sbr.rel (0) target = $region21
  $region20: #{ffc_bn_act_forward.5} parent=0 // pred_region
    _
  $region21: #{ffc_bn_act_forward.5} parent=0 // pred_fallthru
    _
  // Predicated region
  $region22: #{ffc_bn_act_forward.5} parent=0 // pred_check
    _
  $region23: #{ffc_bn_act_forward.5} parent=0 // pred_check_branch
    %29 = sbr.rel (0) target = $region25
  $region24: #{ffc_bn_act_forward.5} parent=0 // pred_region
    _
  $region25: #{ffc_bn_act_forward.5} parent=0 // pred_fallthru
    _
  // Predicated region
  $region26: #{ffc_bn_act_forward.5} parent=0 // pred_check
    _
  $region27: #{ffc_bn_act_forward.5} parent=0 // pred_check_branch
    %31 = sbr.rel (0) target = $region29
  $region28: #{ffc_bn_act_forward.5} parent=0 // pred_region
    _
  $region29: #{ffc_bn_act_forward.5} parent=0 // pred_fallthru
    _
  // Predicated region
  $region30: #{ffc_bn_act_forward.5} parent=0 // pred_check
    _
  $region31: #{ffc_bn_act_forward.5} parent=0 // pred_check_branch
    %33 = sbr.rel (0) target = $region33
  $region32: #{ffc_bn_act_forward.5} parent=0 // pred_region
    _
  $region33: #{ffc_bn_act_forward.5} parent=0 // pred_fallthru
    _
  // Predicated region
  $region34: #{ffc_bn_act_forward.5} parent=0 // pred_check
    _
  $region35: #{ffc_bn_act_forward.5} parent=0 // pred_check_branch
    %35 = sbr.rel (0) target = $region37
  $region36: #{ffc_bn_act_forward.5} parent=0 // pred_region
    _
  $region37: #{ffc_bn_act_forward.5} parent=0 // pred_fallthru
    _
  %v36 = vld [vmem:[%s0] sm:$0xff]
  %v37 = vld [vmem:[%s0 + $0x8] sm:$0xff]
  %v38 = vld [vmem:[%s1] sm:$0xf]
  %40 = vset.pattern.permute.xlu0 0
  %41 = vperm.xlu0 %40, %v38
  %v42 = vpop.permute.xlu0 %41
  %v44 = vunpack.c.l.s4 839922192
  %v45 = vunpack.c.0.s8 %v44
  %v46 = vlaneseq
  %v47 = vshrl.u32 %v46, 7
  %v48 = vsub.s32 %v45, %v47
  %v49 = vrot.slane %v42, %v48
  %v51 = vmul.f32 %v36, %v49
  %v52 = vmul.f32 %v37, %v49
  %v53 = vld [vmem:[%s2] sm:$0xf]
  %55 = vset.pattern.permute.xlu0 0
  %56 = vperm.xlu0 %55, %v53
  %v57 = vpop.permute.xlu0 %56
  %v59 = vunpack.c.l.s4 839922192
  %v60 = vunpack.c.0.s8 %v59
  %v61 = vlaneseq
  %v62 = vshrl.u32 %v61, 7
  %v63 = vsub.s32 %v60, %v62
  %v64 = vrot.slane %v57, %v63
  %v66 = vadd.f32 %v51, %v64
  %v67 = vadd.f32 %v52, %v64
  %v68 = vmax.f32 %v66, 0.0
  %v69 = vmax.f32 %v67, 0.0
  %v71 = vcombine.high %v68, %v68
  %v74 = vcombine.low %v69, %v69
  %vm76 = vcmask 1043456
  %v77 = vsel %vm76, %v68, %v74
  %v78 = vsel %vm76, %v71, %v69
  %v79 = vld [vmem:[%s3] sm:$0xff]
  %v80 = vld [vmem:[%s3 + $0x8] sm:$0xff]
  %v81 = vld [vmem:[%s3 + $0x10] sm:$0xff]
  %v82 = vld [vmem:[%s3 + $0x18] sm:$0xff]
  %v83 = vld [vmem:[%s3 + $0x20] sm:$0xff]
  %v84 = vld [vmem:[%s3 + $0x28] sm:$0xff]
  %v85 = vld [vmem:[%s3 + $0x30] sm:$0xff]
  %v86 = vld [vmem:[%s3 + $0x38] sm:$0xff]
  %v87 = vld [vmem:[%s3 + $0x40] sm:$0xff]
  %v88 = vld [vmem:[%s3 + $0x48] sm:$0xff]
  %v89 = vld [vmem:[%s3 + $0x50] sm:$0xff]
  %v90 = vld [vmem:[%s3 + $0x58] sm:$0xff]
  %v91 = vld [vmem:[%s3 + $0x60] sm:$0xff]
  %v92 = vld [vmem:[%s3 + $0x68] sm:$0xff]
  %v93 = vld [vmem:[%s3 + $0x70] sm:$0xff]
  %v94 = vld [vmem:[%s3 + $0x78] sm:$0xff]
  %v95 = vld [vmem:[%s3 + $0x80] sm:$0xff]
  %v96 = vld [vmem:[%s3 + $0x88] sm:$0xff]
  %v97 = vld [vmem:[%s3 + $0x90] sm:$0xff]
  %v98 = vld [vmem:[%s3 + $0x98] sm:$0xff]
  %v99 = vld [vmem:[%s3 + $0xa0] sm:$0xff]
  %v100 = vld [vmem:[%s3 + $0xa8] sm:$0xff]
  %v101 = vld [vmem:[%s3 + $0xb0] sm:$0xff]
  %v102 = vld [vmem:[%s3 + $0xb8] sm:$0xff]
  %v103 = vld [vmem:[%s3 + $0xc0] sm:$0xff]
  %v104 = vld [vmem:[%s3 + $0xc8] sm:$0xff]
  %v105 = vld [vmem:[%s3 + $0xd0] sm:$0xff]
  %v106 = vld [vmem:[%s3 + $0xd8] sm:$0xff]
  %v107 = vld [vmem:[%s3 + $0xe0] sm:$0xff]
  %v108 = vld [vmem:[%s3 + $0xe8] sm:$0xff]
  %v109 = vld [vmem:[%s3 + $0xf0] sm:$0xff]
  %v110 = vld [vmem:[%s3 + $0xf8] sm:$0xff]
  %v111 = vld [vmem:[%s3 + $0x100] sm:$0xff]
  %v112 = vld [vmem:[%s3 + $0x108] sm:$0xff]
  %v113 = vld [vmem:[%s3 + $0x110] sm:$0xff]
  %v114 = vld [vmem:[%s3 + $0x118] sm:$0xff]
  %v115 = vld [vmem:[%s3 + $0x120] sm:$0xff]
  %v116 = vld [vmem:[%s3 + $0x128] sm:$0xff]
  %v117 = vld [vmem:[%s3 + $0x130] sm:$0xff]
  %v118 = vld [vmem:[%s3 + $0x138] sm:$0xff]
  %v119 = vld [vmem:[%s3 + $0x140] sm:$0xff]
  %v120 = vld [vmem:[%s3 + $0x148] sm:$0xff]
  %v121 = vld [vmem:[%s3 + $0x150] sm:$0xff]
  %v122 = vld [vmem:[%s3 + $0x158] sm:$0xff]
  %v123 = vld [vmem:[%s3 + $0x160] sm:$0xff]
  %v124 = vld [vmem:[%s3 + $0x168] sm:$0xff]
  %v125 = vld [vmem:[%s3 + $0x170] sm:$0xff]
  %v126 = vld [vmem:[%s3 + $0x178] sm:$0xff]
  %v127 = vld [vmem:[%s3 + $0x180] sm:$0xff]
  %v128 = vld [vmem:[%s3 + $0x188] sm:$0xff]
  %v129 = vld [vmem:[%s3 + $0x190] sm:$0xff]
  %v130 = vld [vmem:[%s3 + $0x198] sm:$0xff]
  %v131 = vld [vmem:[%s3 + $0x1a0] sm:$0xff]
  %v132 = vld [vmem:[%s3 + $0x1a8] sm:$0xff]
  %v133 = vld [vmem:[%s3 + $0x1b0] sm:$0xff]
  %v134 = vld [vmem:[%s3 + $0x1b8] sm:$0xff]
  %v135 = vld [vmem:[%s3 + $0x1c0] sm:$0xff]
  %v136 = vld [vmem:[%s3 + $0x1c8] sm:$0xff]
  %v137 = vld [vmem:[%s3 + $0x1d0] sm:$0xff]
  %v138 = vld [vmem:[%s3 + $0x1d8] sm:$0xff]
  %v139 = vld [vmem:[%s3 + $0x1e0] sm:$0xff]
  %v140 = vld [vmem:[%s3 + $0x1e8] sm:$0xff]
  %v141 = vld [vmem:[%s3 + $0x1f0] sm:$0xff]
  %v142 = vld [vmem:[%s3 + $0x1f8] sm:$0xff]
  %v143 = vld [vmem:[%s3 + $0x200] sm:$0xff]
  %v144 = vld [vmem:[%s3 + $0x208] sm:$0xff]
  %v145 = vld [vmem:[%s3 + $0x210] sm:$0xff]
  %v146 = vld [vmem:[%s3 + $0x218] sm:$0xff]
  %v147 = vld [vmem:[%s3 + $0x220] sm:$0xff]
  %v148 = vld [vmem:[%s3 + $0x228] sm:$0xff]
  %v149 = vld [vmem:[%s3 + $0x230] sm:$0xff]
  %v150 = vld [vmem:[%s3 + $0x238] sm:$0xff]
  %v151 = vld [vmem:[%s3 + $0x240] sm:$0xff]
  %v152 = vld [vmem:[%s3 + $0x248] sm:$0xff]
  %v153 = vld [vmem:[%s3 + $0x250] sm:$0xff]
  %v154 = vld [vmem:[%s3 + $0x258] sm:$0xff]
  %v155 = vld [vmem:[%s3 + $0x260] sm:$0xff]
  %v156 = vld [vmem:[%s3 + $0x268] sm:$0xff]
  %v157 = vld [vmem:[%s3 + $0x270] sm:$0xff]
  %v158 = vld [vmem:[%s3 + $0x278] sm:$0xff]
  %v159 = vld [vmem:[%s3 + $0x280] sm:$0xff]
  %v160 = vld [vmem:[%s3 + $0x288] sm:$0xff]
  %v161 = vld [vmem:[%s3 + $0x290] sm:$0xff]
  %v162 = vld [vmem:[%s3 + $0x298] sm:$0xff]
  %v163 = vld [vmem:[%s3 + $0x2a0] sm:$0xff]
  %v164 = vld [vmem:[%s3 + $0x2a8] sm:$0xff]
  %v165 = vld [vmem:[%s3 + $0x2b0] sm:$0xff]
  %v166 = vld [vmem:[%s3 + $0x2b8] sm:$0xff]
  %v167 = vld [vmem:[%s3 + $0x2c0] sm:$0xff]
  %v168 = vld [vmem:[%s3 + $0x2c8] sm:$0xff]
  %v169 = vld [vmem:[%s3 + $0x2d0] sm:$0xff]
  %v170 = vld [vmem:[%s3 + $0x2d8] sm:$0xff]
  %v171 = vld [vmem:[%s3 + $0x2e0] sm:$0xff]
  %v172 = vld [vmem:[%s3 + $0x2e8] sm:$0xff]
  %v173 = vld [vmem:[%s3 + $0x2f0] sm:$0xff]
  %v174 = vld [vmem:[%s3 + $0x2f8] sm:$0xff]
  %v175 = vld [vmem:[%s3 + $0x300] sm:$0xff]
  %v176 = vld [vmem:[%s3 + $0x308] sm:$0xff]
  %v177 = vld [vmem:[%s3 + $0x310] sm:$0xff]
  %v178 = vld [vmem:[%s3 + $0x318] sm:$0xff]
  %v179 = vld [vmem:[%s3 + $0x320] sm:$0xff]
  %v180 = vld [vmem:[%s3 + $0x328] sm:$0xff]
  %v181 = vld [vmem:[%s3 + $0x330] sm:$0xff]
  %v182 = vld [vmem:[%s3 + $0x338] sm:$0xff]
  %v183 = vld [vmem:[%s3 + $0x340] sm:$0xff]
  %v184 = vld [vmem:[%s3 + $0x348] sm:$0xff]
  %v185 = vld [vmem:[%s3 + $0x350] sm:$0xff]
  %v186 = vld [vmem:[%s3 + $0x358] sm:$0xff]
  %v187 = vld [vmem:[%s3 + $0x360] sm:$0xff]
  %v188 = vld [vmem:[%s3 + $0x368] sm:$0xff]
  %v189 = vld [vmem:[%s3 + $0x370] sm:$0xff]
  %v190 = vld [vmem:[%s3 + $0x378] sm:$0xff]
  %v191 = vld [vmem:[%s3 + $0x380] sm:$0xff]
  %v192 = vld [vmem:[%s3 + $0x388] sm:$0xff]
  %v193 = vld [vmem:[%s3 + $0x390] sm:$0xff]
  %v194 = vld [vmem:[%s3 + $0x398] sm:$0xff]
  %v195 = vld [vmem:[%s3 + $0x3a0] sm:$0xff]
  %v196 = vld [vmem:[%s3 + $0x3a8] sm:$0xff]
  %v197 = vld [vmem:[%s3 + $0x3b0] sm:$0xff]
  %v198 = vld [vmem:[%s3 + $0x3b8] sm:$0xff]
  %v199 = vld [vmem:[%s3 + $0x3c0] sm:$0xff]
  %v200 = vld [vmem:[%s3 + $0x3c8] sm:$0xff]
  %v201 = vld [vmem:[%s3 + $0x3d0] sm:$0xff]
  %v202 = vld [vmem:[%s3 + $0x3d8] sm:$0xff]
  %v203 = vld [vmem:[%s3 + $0x3e0] sm:$0xff]
  %v204 = vld [vmem:[%s3 + $0x3e8] sm:$0xff]
  %v205 = vld [vmem:[%s3 + $0x3f0] sm:$0xff]
  %v206 = vld [vmem:[%s3 + $0x3f8] sm:$0xff]
  %207 = vmatprep.subr.mxu0 %v80
  %208 = vmatpush1.msra.mxu0 %v79
  %209 = vmatprep.subr.mxu0 %v84
  %210 = vmatpush1.msra.mxu0 %v83
  %211 = vmatprep.subr.mxu0 %v88
  %212 = vmatpush1.msra.mxu0 %v87
  %213 = vmatprep.subr.mxu0 %v92
  %214 = vmatpush1.msra.mxu0 %v91
  %215 = vmatprep.subr.mxu0 %v96
  %216 = vmatpush1.msra.mxu0 %v95
  %217 = vmatprep.subr.mxu0 %v100
  %218 = vmatpush1.msra.mxu0 %v99
  %219 = vmatprep.subr.mxu0 %v104
  %220 = vmatpush1.msra.mxu0 %v103
  %221 = vmatprep.subr.mxu0 %v108
  %222 = vmatpush1.msra.mxu0 %v107
  %223 = vmatprep.subr.mxu0 %v112
  %224 = vmatpush1.msra.mxu0 %v111
  %225 = vmatprep.subr.mxu0 %v116
  %226 = vmatpush1.msra.mxu0 %v115
  %227 = vmatprep.subr.mxu0 %v120
  %228 = vmatpush1.msra.mxu0 %v119
  %229 = vmatprep.subr.mxu0 %v124
  %230 = vmatpush1.msra.mxu0 %v123
  %231 = vmatprep.subr.mxu0 %v128
  %232 = vmatpush1.msra.mxu0 %v127
  %233 = vmatprep.subr.mxu0 %v132
  %234 = vmatpush1.msra.mxu0 %v131
  %235 = vmatprep.subr.mxu0 %v136
  %236 = vmatpush1.msra.mxu0 %v135
  %237 = vmatprep.subr.mxu0 %v140
  %238 = vmatpush1.msra.mxu0 %v139
  %239 = vmatprep.subr.mxu0 %v144
  %240 = vmatpush1.msra.mxu0 %v143
  %241 = vmatprep.subr.mxu0 %v148
  %242 = vmatpush1.msra.mxu0 %v147
  %243 = vmatprep.subr.mxu0 %v152
  %244 = vmatpush1.msra.mxu0 %v151
  %245 = vmatprep.subr.mxu0 %v156
  %246 = vmatpush1.msra.mxu0 %v155
  %247 = vmatprep.subr.mxu0 %v160
  %248 = vmatpush1.msra.mxu0 %v159
  %249 = vmatprep.subr.mxu0 %v164
  %250 = vmatpush1.msra.mxu0 %v163
  %251 = vmatprep.subr.mxu0 %v168
  %252 = vmatpush1.msra.mxu0 %v167
  %253 = vmatprep.subr.mxu0 %v172
  %254 = vmatpush1.msra.mxu0 %v171
  %255 = vmatprep.subr.mxu0 %v176
  %256 = vmatpush1.msra.mxu0 %v175
  %257 = vmatprep.subr.mxu0 %v180
  %258 = vmatpush1.msra.mxu0 %v179
  %259 = vmatprep.subr.mxu0 %v184
  %260 = vmatpush1.msra.mxu0 %v183
  %261 = vmatprep.subr.mxu0 %v188
  %262 = vmatpush1.msra.mxu0 %v187
  %263 = vmatprep.subr.mxu0 %v192
  %264 = vmatpush1.msra.mxu0 %v191
  %265 = vmatprep.subr.mxu0 %v196
  %266 = vmatpush1.msra.mxu0 %v195
  %267 = vmatprep.subr.mxu0 %v200
  %268 = vmatpush1.msra.mxu0 %v199
  %269 = vmatprep.subr.mxu0 %v204
  %270 = vmatpush1.msra.mxu0 %v203
  %271 = vmatprep.mubr.f32.mxu0 %v78
  %272 = vmatmul.mubr.f32.gmra.mrb[0].mxu0 %v77
  %v273 = vpop.f32.mrb[0].mxu0
  %v274 = vadd.f32 0.0, %v273
  %v275 = vpop.f32.mrb[0].mxu0
  %v276 = vadd.f32 0.0, %v275
  %277 = vdwg.mxu0
  %278 = vmatprep.subr.mxu0 %v82
  %279 = vmatpush1.msra.mxu0 %v81
  %280 = vmatprep.subr.mxu0 %v86
  %281 = vmatpush1.msra.mxu0 %v85
  %282 = vmatprep.subr.mxu0 %v90
  %283 = vmatpush1.msra.mxu0 %v89
  %284 = vmatprep.subr.mxu0 %v94
  %285 = vmatpush1.msra.mxu0 %v93
  %286 = vmatprep.subr.mxu0 %v98
  %287 = vmatpush1.msra.mxu0 %v97
  %288 = vmatprep.subr.mxu0 %v102
  %289 = vmatpush1.msra.mxu0 %v101
  %290 = vmatprep.subr.mxu0 %v106
  %291 = vmatpush1.msra.mxu0 %v105
  %292 = vmatprep.subr.mxu0 %v110
  %293 = vmatpush1.msra.mxu0 %v109
  %294 = vmatprep.subr.mxu0 %v114
  %295 = vmatpush1.msra.mxu0 %v113
  %296 = vmatprep.subr.mxu0 %v118
  %297 = vmatpush1.msra.mxu0 %v117
  %298 = vmatprep.subr.mxu0 %v122
  %299 = vmatpush1.msra.mxu0 %v121
  %300 = vmatprep.subr.mxu0 %v126
  %301 = vmatpush1.msra.mxu0 %v125
  %302 = vmatprep.subr.mxu0 %v130
  %303 = vmatpush1.msra.mxu0 %v129
  %304 = vmatprep.subr.mxu0 %v134
  %305 = vmatpush1.msra.mxu0 %v133
  %306 = vmatprep.subr.mxu0 %v138
  %307 = vmatpush1.msra.mxu0 %v137
  %308 = vmatprep.subr.mxu0 %v142
  %309 = vmatpush1.msra.mxu0 %v141
  %310 = vmatprep.subr.mxu0 %v146
  %311 = vmatpush1.msra.mxu0 %v145
  %312 = vmatprep.subr.mxu0 %v150
  %313 = vmatpush1.msra.mxu0 %v149
  %314 = vmatprep.subr.mxu0 %v154
  %315 = vmatpush1.msra.mxu0 %v153
  %316 = vmatprep.subr.mxu0 %v158
  %317 = vmatpush1.msra.mxu0 %v157
  %318 = vmatprep.subr.mxu0 %v162
  %319 = vmatpush1.msra.mxu0 %v161
  %320 = vmatprep.subr.mxu0 %v166
  %321 = vmatpush1.msra.mxu0 %v165
  %322 = vmatprep.subr.mxu0 %v170
  %323 = vmatpush1.msra.mxu0 %v169
  %324 = vmatprep.subr.mxu0 %v174
  %325 = vmatpush1.msra.mxu0 %v173
  %326 = vmatprep.subr.mxu0 %v178
  %327 = vmatpush1.msra.mxu0 %v177
  %328 = vmatprep.subr.mxu0 %v182
  %329 = vmatpush1.msra.mxu0 %v181
  %330 = vmatprep.subr.mxu0 %v186
  %331 = vmatpush1.msra.mxu0 %v185
  %332 = vmatprep.subr.mxu0 %v190
  %333 = vmatpush1.msra.mxu0 %v189
  %334 = vmatprep.subr.mxu0 %v194
  %335 = vmatpush1.msra.mxu0 %v193
  %336 = vmatprep.subr.mxu0 %v198
  %337 = vmatpush1.msra.mxu0 %v197
  %338 = vmatprep.subr.mxu0 %v202
  %339 = vmatpush1.msra.mxu0 %v201
  %340 = vmatprep.subr.mxu0 %v206
  %341 = vmatpush1.msra.mxu0 %v205
  %342 = vmatprep.mubr.f32.mxu0 %v78
  %343 = vmatmul.mubr.f32.gmra.mrb[0].mxu0 %v77
  %v344 = vpop.f32.mrb[0].mxu0
  %v345 = vadd.f32 0.0, %v344
  %v346 = vpop.f32.mrb[0].mxu0
  %v347 = vadd.f32 0.0, %v346
  %348 = vdwg.mxu0
  %v351 = vrot.slane %v274, 4
  %v352 = vrot.slane %v276, 4
  %v355 = vrot.slane %v345, 4
  %v356 = vrot.slane %v347, 4
  %v357 = vld [vmem:[%s4] sm:$0xff]
  %v358 = vld [vmem:[%s5] sm:$0xff]
  %vm359 = vcmask 31744
  %v361 = vsel %vm359, %v358, 0
  %v363 = vsel %vm76, %v345, 0
  %v365 = vsel %vm76, %v347, 0
  %v367 = vsel %vm76, %v355, 0
  %v369 = vsel %vm76, %v356, 0
  %371 = vmatprep.subr.mxu0 %v365
  %372 = vmatpush1.msra.mxu0 %v363
  %373 = vmatprep.subr.mxu0 0.0
  %374 = vmatpush1.msra.mxu0 0.0
  %375 = vmatprep.subr.mxu0 0.0
  %376 = vmatpush1.msra.mxu0 0.0
  %377 = vmatprep.subr.mxu0 0.0
  %378 = vmatpush1.msra.mxu0 0.0
  %379 = vmatprep.subr.mxu0 0.0
  %380 = vmatpush1.msra.mxu0 0.0
  %381 = vmatprep.subr.mxu0 0.0
  %382 = vmatpush1.msra.mxu0 0.0
  %383 = vmatprep.subr.mxu0 0.0
  %384 = vmatpush1.msra.mxu0 0.0
  %385 = vmatprep.subr.mxu0 0.0
  %386 = vmatpush1.msra.mxu0 0.0
  %387 = vmatprep.subr.mxu0 0.0
  %388 = vmatpush1.msra.mxu0 0.0
  %389 = vmatprep.subr.mxu0 0.0
  %390 = vmatpush1.msra.mxu0 0.0
  %391 = vmatprep.subr.mxu0 0.0
  %392 = vmatpush1.msra.mxu0 0.0
  %393 = vmatprep.subr.mxu0 0.0
  %394 = vmatpush1.msra.mxu0 0.0
  %395 = vmatprep.subr.mxu0 0.0
  %396 = vmatpush1.msra.mxu0 0.0
  %397 = vmatprep.subr.mxu0 0.0
  %398 = vmatpush1.msra.mxu0 0.0
  %399 = vmatprep.subr.mxu0 0.0
  %400 = vmatpush1.msra.mxu0 0.0
  %401 = vmatprep.subr.mxu0 0.0
  %402 = vmatpush1.msra.mxu0 0.0
  %403 = vmatprep.subr.mxu0 0.0
  %404 = vmatpush1.msra.mxu0 0.0
  %405 = vmatprep.subr.mxu0 0.0
  %406 = vmatpush1.msra.mxu0 0.0
  %407 = vmatprep.subr.mxu0 0.0
  %408 = vmatpush1.msra.mxu0 0.0
  %409 = vmatprep.subr.mxu0 0.0
  %410 = vmatpush1.msra.mxu0 0.0
  %411 = vmatprep.subr.mxu0 0.0
  %412 = vmatpush1.msra.mxu0 0.0
  %413 = vmatprep.subr.mxu0 0.0
  %414 = vmatpush1.msra.mxu0 0.0
  %415 = vmatprep.subr.mxu0 0.0
  %416 = vmatpush1.msra.mxu0 0.0
  %417 = vmatprep.subr.mxu0 0.0
  %418 = vmatpush1.msra.mxu0 0.0
  %419 = vmatprep.subr.mxu0 0.0
  %420 = vmatpush1.msra.mxu0 0.0
  %421 = vmatprep.subr.mxu0 0.0
  %422 = vmatpush1.msra.mxu0 0.0
  %423 = vmatprep.subr.mxu0 0.0
  %424 = vmatpush1.msra.mxu0 0.0
  %425 = vmatprep.subr.mxu0 0.0
  %426 = vmatpush1.msra.mxu0 0.0
  %427 = vmatprep.subr.mxu0 0.0
  %428 = vmatpush1.msra.mxu0 0.0
  %429 = vmatprep.subr.mxu0 0.0
  %430 = vmatpush1.msra.mxu0 0.0
  %431 = vmatprep.subr.mxu0 0.0
  %432 = vmatpush1.msra.mxu0 0.0
  %433 = vmatprep.subr.mxu0 0.0
  %434 = vmatpush1.msra.mxu0 0.0
  %435 = vmatprep.mubr.f32.mxu0 0.0
  %436 = vmatmul.mubr.f32.gmra.mrb[0].mxu0 %v361
  %v437 = vpop.f32.mrb[0].mxu0
  %v438 = vadd.f32 0.0, %v437
  %v439 = vpop.f32.mrb[0].mxu0
  %v440 = vadd.f32 0.0, %v439
  %441 = vdwg.mxu0
  %442 = vmatprep.subr.mxu0 %v369
  %443 = vmatpush1.msra.mxu0 %v367
  %444 = vmatprep.subr.mxu0 0.0
  %445 = vmatpush1.msra.mxu0 0.0
  %446 = vmatprep.subr.mxu0 0.0
  %447 = vmatpush1.msra.mxu0 0.0
  %448 = vmatprep.subr.mxu0 0.0
  %449 = vmatpush1.msra.mxu0 0.0
  %450 = vmatprep.subr.mxu0 0.0
  %451 = vmatpush1.msra.mxu0 0.0
  %452 = vmatprep.subr.mxu0 0.0
  %453 = vmatpush1.msra.mxu0 0.0
  %454 = vmatprep.subr.mxu0 0.0
  %455 = vmatpush1.msra.mxu0 0.0
  %456 = vmatprep.subr.mxu0 0.0
  %457 = vmatpush1.msra.mxu0 0.0
  %458 = vmatprep.subr.mxu0 0.0
  %459 = vmatpush1.msra.mxu0 0.0
  %460 = vmatprep.subr.mxu0 0.0
  %461 = vmatpush1.msra.mxu0 0.0
  %462 = vmatprep.subr.mxu0 0.0
  %463 = vmatpush1.msra.mxu0 0.0
  %464 = vmatprep.subr.mxu0 0.0
  %465 = vmatpush1.msra.mxu0 0.0
  %466 = vmatprep.subr.mxu0 0.0
  %467 = vmatpush1.msra.mxu0 0.0
  %468 = vmatprep.subr.mxu0 0.0
  %469 = vmatpush1.msra.mxu0 0.0
  %470 = vmatprep.subr.mxu0 0.0
  %471 = vmatpush1.msra.mxu0 0.0
  %472 = vmatprep.subr.mxu0 0.0
  %473 = vmatpush1.msra.mxu0 0.0
  %474 = vmatprep.subr.mxu0 0.0
  %475 = vmatpush1.msra.mxu0 0.0
  %476 = vmatprep.subr.mxu0 0.0
  %477 = vmatpush1.msra.mxu0 0.0
  %478 = vmatprep.subr.mxu0 0.0
  %479 = vmatpush1.msra.mxu0 0.0
  %480 = vmatprep.subr.mxu0 0.0
  %481 = vmatpush1.msra.mxu0 0.0
  %482 = vmatprep.subr.mxu0 0.0
  %483 = vmatpush1.msra.mxu0 0.0
  %484 = vmatprep.subr.mxu0 0.0
  %485 = vmatpush1.msra.mxu0 0.0
  %486 = vmatprep.subr.mxu0 0.0
  %487 = vmatpush1.msra.mxu0 0.0
  %488 = vmatprep.subr.mxu0 0.0
  %489 = vmatpush1.msra.mxu0 0.0
  %490 = vmatprep.subr.mxu0 0.0
  %491 = vmatpush1.msra.mxu0 0.0
  %492 = vmatprep.subr.mxu0 0.0
  %493 = vmatpush1.msra.mxu0 0.0
  %494 = vmatprep.subr.mxu0 0.0
  %495 = vmatpush1.msra.mxu0 0.0
  %496 = vmatprep.subr.mxu0 0.0
  %497 = vmatpush1.msra.mxu0 0.0
  %498 = vmatprep.subr.mxu0 0.0
  %499 = vmatpush1.msra.mxu0 0.0
  %500 = vmatprep.subr.mxu0 0.0
  %501 = vmatpush1.msra.mxu0 0.0
  %502 = vmatprep.subr.mxu0 0.0
  %503 = vmatpush1.msra.mxu0 0.0
  %504 = vmatprep.subr.mxu0 0.0
  %505 = vmatpush1.msra.mxu0 0.0
  %506 = vmatprep.mubr.f32.mxu0 0.0
  %507 = vmatmul.mubr.f32.gmra.mrb[0].mxu0 %v361
  %v508 = vpop.f32.mrb[0].mxu0
  %v509 = vadd.f32 0.0, %v508
  %v510 = vpop.f32.mrb[0].mxu0
  %v511 = vadd.f32 0.0, %v510
  %512 = vdwg.mxu0
  %v514 = vsel %vm359, %v357, 0
  %v516 = vsel %vm76, %v274, 0
  %v518 = vsel %vm76, %v276, 0
  %v520 = vsel %vm76, %v351, 0
  %v522 = vsel %vm76, %v352, 0
  %524 = vmatprep.subr.mxu0 %v518
  %525 = vmatpush1.msra.mxu0 %v516
  %526 = vmatprep.subr.mxu0 0.0
  %527 = vmatpush1.msra.mxu0 0.0
  %528 = vmatprep.subr.mxu0 0.0
  %529 = vmatpush1.msra.mxu0 0.0
  %530 = vmatprep.subr.mxu0 0.0
  %531 = vmatpush1.msra.mxu0 0.0
  %532 = vmatprep.subr.mxu0 0.0
  %533 = vmatpush1.msra.mxu0 0.0
  %534 = vmatprep.subr.mxu0 0.0
  %535 = vmatpush1.msra.mxu0 0.0
  %536 = vmatprep.subr.mxu0 0.0
  %537 = vmatpush1.msra.mxu0 0.0
  %538 = vmatprep.subr.mxu0 0.0
  %539 = vmatpush1.msra.mxu0 0.0
  %540 = vmatprep.subr.mxu0 0.0
  %541 = vmatpush1.msra.mxu0 0.0
  %542 = vmatprep.subr.mxu0 0.0
  %543 = vmatpush1.msra.mxu0 0.0
  %544 = vmatprep.subr.mxu0 0.0
  %545 = vmatpush1.msra.mxu0 0.0
  %546 = vmatprep.subr.mxu0 0.0
  %547 = vmatpush1.msra.mxu0 0.0
  %548 = vmatprep.subr.mxu0 0.0
  %549 = vmatpush1.msra.mxu0 0.0
  %550 = vmatprep.subr.mxu0 0.0
  %551 = vmatpush1.msra.mxu0 0.0
  %552 = vmatprep.subr.mxu0 0.0
  %553 = vmatpush1.msra.mxu0 0.0
  %554 = vmatprep.subr.mxu0 0.0
  %555 = vmatpush1.msra.mxu0 0.0
  %556 = vmatprep.subr.mxu0 0.0
  %557 = vmatpush1.msra.mxu0 0.0
  %558 = vmatprep.subr.mxu0 0.0
  %559 = vmatpush1.msra.mxu0 0.0
  %560 = vmatprep.subr.mxu0 0.0
  %561 = vmatpush1.msra.mxu0 0.0
  %562 = vmatprep.subr.mxu0 0.0
  %563 = vmatpush1.msra.mxu0 0.0
  %564 = vmatprep.subr.mxu0 0.0
  %565 = vmatpush1.msra.mxu0 0.0
  %566 = vmatprep.subr.mxu0 0.0
  %567 = vmatpush1.msra.mxu0 0.0
  %568 = vmatprep.subr.mxu0 0.0
  %569 = vmatpush1.msra.mxu0 0.0
  %570 = vmatprep.subr.mxu0 0.0
  %571 = vmatpush1.msra.mxu0 0.0
  %572 = vmatprep.subr.mxu0 0.0
  %573 = vmatpush1.msra.mxu0 0.0
  %574 = vmatprep.subr.mxu0 0.0
  %575 = vmatpush1.msra.mxu0 0.0
  %576 = vmatprep.subr.mxu0 0.0
  %577 = vmatpush1.msra.mxu0 0.0
  %578 = vmatprep.subr.mxu0 0.0
  %579 = vmatpush1.msra.mxu0 0.0
  %580 = vmatprep.subr.mxu0 0.0
  %581 = vmatpush1.msra.mxu0 0.0
  %582 = vmatprep.subr.mxu0 0.0
  %583 = vmatpush1.msra.mxu0 0.0
  %584 = vmatprep.subr.mxu0 0.0
  %585 = vmatpush1.msra.mxu0 0.0
  %586 = vmatprep.subr.mxu0 0.0
  %587 = vmatpush1.msra.mxu0 0.0
  %588 = vmatprep.mubr.f32.mxu0 0.0
  %589 = vmatmul.mubr.f32.gmra.mrb[0].mxu0 %v514
  %v590 = vpop.f32.mrb[0].mxu0
  %v591 = vadd.f32 %v438, %v590
  %v592 = vpop.f32.mrb[0].mxu0
  %v593 = vadd.f32 %v440, %v592
  %594 = vdwg.mxu0
  %595 = vmatprep.subr.mxu0 %v522
  %596 = vmatpush1.msra.mxu0 %v520
  %597 = vmatprep.subr.mxu0 0.0
  %598 = vmatpush1.msra.mxu0 0.0
  %599 = vmatprep.subr.mxu0 0.0
  %600 = vmatpush1.msra.mxu0 0.0
  %601 = vmatprep.subr.mxu0 0.0
  %602 = vmatpush1.msra.mxu0 0.0
  %603 = vmatprep.subr.mxu0 0.0
  %604 = vmatpush1.msra.mxu0 0.0
  %605 = vmatprep.subr.mxu0 0.0
  %606 = vmatpush1.msra.mxu0 0.0
  %607 = vmatprep.subr.mxu0 0.0
  %608 = vmatpush1.msra.mxu0 0.0
  %609 = vmatprep.subr.mxu0 0.0
  %610 = vmatpush1.msra.mxu0 0.0
  %611 = vmatprep.subr.mxu0 0.0
  %612 = vmatpush1.msra.mxu0 0.0
  %613 = vmatprep.subr.mxu0 0.0
  %614 = vmatpush1.msra.mxu0 0.0
  %615 = vmatprep.subr.mxu0 0.0
  %616 = vmatpush1.msra.mxu0 0.0
  %617 = vmatprep.subr.mxu0 0.0
  %618 = vmatpush1.msra.mxu0 0.0
  %619 = vmatprep.subr.mxu0 0.0
  %620 = vmatpush1.msra.mxu0 0.0
  %621 = vmatprep.subr.mxu0 0.0
  %622 = vmatpush1.msra.mxu0 0.0
  %623 = vmatprep.subr.mxu0 0.0
  %624 = vmatpush1.msra.mxu0 0.0
  %625 = vmatprep.subr.mxu0 0.0
  %626 = vmatpush1.msra.mxu0 0.0
  %627 = vmatprep.subr.mxu0 0.0
  %628 = vmatpush1.msra.mxu0 0.0
  %629 = vmatprep.subr.mxu0 0.0
  %630 = vmatpush1.msra.mxu0 0.0
  %631 = vmatprep.subr.mxu0 0.0
  %632 = vmatpush1.msra.mxu0 0.0
  %633 = vmatprep.subr.mxu0 0.0
  %634 = vmatpush1.msra.mxu0 0.0
  %635 = vmatprep.subr.mxu0 0.0
  %636 = vmatpush1.msra.mxu0 0.0
  %637 = vmatprep.subr.mxu0 0.0
  %638 = vmatpush1.msra.mxu0 0.0
  %639 = vmatprep.subr.mxu0 0.0
  %640 = vmatpush1.msra.mxu0 0.0
  %641 = vmatprep.subr.mxu0 0.0
  %642 = vmatpush1.msra.mxu0 0.0
  %643 = vmatprep.subr.mxu0 0.0
  %644 = vmatpush1.msra.mxu0 0.0
  %645 = vmatprep.subr.mxu0 0.0
  %646 = vmatpush1.msra.mxu0 0.0
  %647 = vmatprep.subr.mxu0 0.0
  %648 = vmatpush1.msra.mxu0 0.0
  %649 = vmatprep.subr.mxu0 0.0
  %650 = vmatpush1.msra.mxu0 0.0
  %651 = vmatprep.subr.mxu0 0.0
  %652 = vmatpush1.msra.mxu0 0.0
  %653 = vmatprep.subr.mxu0 0.0
  %654 = vmatpush1.msra.mxu0 0.0
  %655 = vmatprep.subr.mxu0 0.0
  %656 = vmatpush1.msra.mxu0 0.0
  %657 = vmatprep.subr.mxu0 0.0
  %658 = vmatpush1.msra.mxu0 0.0
  %659 = vmatprep.mubr.f32.mxu0 0.0
  %660 = vmatmul.mubr.f32.gmra.mrb[0].mxu0 %v514
  %v661 = vpop.f32.mrb[0].mxu0
  %v662 = vadd.f32 %v509, %v661
  %v663 = vpop.f32.mrb[0].mxu0
  %v664 = vadd.f32 %v511, %v663
  %665 = vdwg.mxu0
  %v666 = vadd.f32 %v591, %v593
  %v667 = vadd.f32 %v666, %v662
  %v668 = vadd.f32 %v667, %v664
  %669 = vadd.xlane.f32.xlu0 %v668
  %v670 = vpop.xlane.xlu0 %669
  %v671 = vmul.f32 %v591, %v591
  %v672 = vmul.f32 %v593, %v593
  %v673 = vmul.f32 %v662, %v662
  %v674 = vmul.f32 %v664, %v664
  %v675 = vadd.f32 %v671, %v672
  %v676 = vadd.f32 %v675, %v673
  %v677 = vadd.f32 %v676, %v674
  %678 = vadd.xlane.f32.xlu0 %v677
  %v679 = vpop.xlane.xlu0 %678
  %vm680 = vcmask 7168
  %v681 = vsel %vm680, %v670, %v679
  %vm682 = vcmask 15360
  %683 = vst.msk [vmem:[%s10] sm:$0xff] %vm682, %v681
  %v686 = vrot.slane %v591, 4
  %v687 = vrot.slane %v593, 4
  %v690 = vrot.slane %v662, 4
  %v691 = vrot.slane %v664, 4
  %v692 = vcombine.low %v591, %v593
  %v693 = vcombine.low %v686, %v687
  %v694 = vcombine.low %v662, %v664
  %v695 = vcombine.low %v690, %v691
  %700 = vst [vmem:[%s9] sm:$0xff] %v692
  %701 = vst [vmem:[%s9 + $0x8] sm:$0xff] %v693
  %702 = vst [vmem:[%s9 + $0x10] sm:$0xff] %v694
  %703 = vst [vmem:[%s9 + $0x18] sm:$0xff] %v695
  %v704 = vlaneseq
  %v705 = vshrl.u32 %v704, 7
  %v706 = vsub.s32 0, %v705
  %v707 = vrot.slane %v68, %v706
  %v708 = vlaneseq
  %v709 = vshrl.u32 %v708, 7
  %v710 = vsub.s32 4, %v709
  %v711 = vrot.slane %v68, %v710
  %v714 = vlaneseq
  %v715 = vshrl.u32 %v714, 7
  %v716 = vsub.s32 0, %v715
  %v717 = vrot.slane %v69, %v716
  %v718 = vlaneseq
  %v719 = vshrl.u32 %v718, 7
  %v720 = vsub.s32 4, %v719
  %v721 = vrot.slane %v69, %v720
  %vm724 = vcmask 1040384
  %v725 = vsel %vm724, %v707, %v717
  %v726 = vsel %vm724, %v711, %v721
  %v727 = vld [vmem:[%s6] sm:$0xff]
  %v728 = vld [vmem:[%s6 + $0x8] sm:$0xff]
  %v729 = vld [vmem:[%s6 + $0x10] sm:$0xff]
  %v730 = vld [vmem:[%s6 + $0x18] sm:$0xff]
  %v731 = vld [vmem:[%s6 + $0x20] sm:$0xff]
  %v732 = vld [vmem:[%s6 + $0x28] sm:$0xff]
  %v733 = vld [vmem:[%s6 + $0x30] sm:$0xff]
  %v734 = vld [vmem:[%s6 + $0x38] sm:$0xff]
  %v735 = vld [vmem:[%s6 + $0x40] sm:$0xff]
  %v736 = vld [vmem:[%s6 + $0x48] sm:$0xff]
  %v737 = vld [vmem:[%s6 + $0x50] sm:$0xff]
  %v738 = vld [vmem:[%s6 + $0x58] sm:$0xff]
  %v739 = vld [vmem:[%s6 + $0x60] sm:$0xff]
  %v740 = vld [vmem:[%s6 + $0x68] sm:$0xff]
  %v741 = vld [vmem:[%s6 + $0x70] sm:$0xff]
  %v742 = vld [vmem:[%s6 + $0x78] sm:$0xff]
  %v743 = vld [vmem:[%s6 + $0x80] sm:$0xff]
  %v744 = vld [vmem:[%s6 + $0x88] sm:$0xff]
  %v745 = vld [vmem:[%s6 + $0x90] sm:$0xff]
  %v746 = vld [vmem:[%s6 + $0x98] sm:$0xff]
  %v747 = vld [vmem:[%s6 + $0xa0] sm:$0xff]
  %v748 = vld [vmem:[%s6 + $0xa8] sm:$0xff]
  %v749 = vld [vmem:[%s6 + $0xb0] sm:$0xff]
  %v750 = vld [vmem:[%s6 + $0xb8] sm:$0xff]
  %v751 = vld [vmem:[%s6 + $0xc0] sm:$0xff]
  %v752 = vld [vmem:[%s6 + $0xc8] sm:$0xff]
  %v753 = vld [vmem:[%s6 + $0xd0] sm:$0xff]
  %v754 = vld [vmem:[%s6 + $0xd8] sm:$0xff]
  %v755 = vld [vmem:[%s6 + $0xe0] sm:$0xff]
  %v756 = vld [vmem:[%s6 + $0xe8] sm:$0xff]
  %v757 = vld [vmem:[%s6 + $0xf0] sm:$0xff]
  %v758 = vld [vmem:[%s6 + $0xf8] sm:$0xff]
  %v759 = vld [vmem:[%s6 + $0x100] sm:$0xff]
  %v760 = vld [vmem:[%s6 + $0x108] sm:$0xff]
  %v761 = vld [vmem:[%s6 + $0x110] sm:$0xff]
  %v762 = vld [vmem:[%s6 + $0x118] sm:$0xff]
  %v763 = vld [vmem:[%s6 + $0x120] sm:$0xff]
  %v764 = vld [vmem:[%s6 + $0x128] sm:$0xff]
  %v765 = vld [vmem:[%s6 + $0x130] sm:$0xff]
  %v766 = vld [vmem:[%s6 + $0x138] sm:$0xff]
  %v767 = vld [vmem:[%s6 + $0x140] sm:$0xff]
  %v768 = vld [vmem:[%s6 + $0x148] sm:$0xff]
  %v769 = vld [vmem:[%s6 + $0x150] sm:$0xff]
  %v770 = vld [vmem:[%s6 + $0x158] sm:$0xff]
  %v771 = vld [vmem:[%s6 + $0x160] sm:$0xff]
  %v772 = vld [vmem:[%s6 + $0x168] sm:$0xff]
  %v773 = vld [vmem:[%s6 + $0x170] sm:$0xff]
  %v774 = vld [vmem:[%s6 + $0x178] sm:$0xff]
  %v775 = vld [vmem:[%s6 + $0x180] sm:$0xff]
  %v776 = vld [vmem:[%s6 + $0x188] sm:$0xff]
  %v777 = vld [vmem:[%s6 + $0x190] sm:$0xff]
  %v778 = vld [vmem:[%s6 + $0x198] sm:$0xff]
  %v779 = vld [vmem:[%s6 + $0x1a0] sm:$0xff]
  %v780 = vld [vmem:[%s6 + $0x1a8] sm:$0xff]
  %v781 = vld [vmem:[%s6 + $0x1b0] sm:$0xff]
  %v782 = vld [vmem:[%s6 + $0x1b8] sm:$0xff]
  %v783 = vld [vmem:[%s6 + $0x1c0] sm:$0xff]
  %v784 = vld [vmem:[%s6 + $0x1c8] sm:$0xff]
  %v785 = vld [vmem:[%s6 + $0x1d0] sm:$0xff]
  %v786 = vld [vmem:[%s6 + $0x1d8] sm:$0xff]
  %v787 = vld [vmem:[%s6 + $0x1e0] sm:$0xff]
  %v788 = vld [vmem:[%s6 + $0x1e8] sm:$0xff]
  %v789 = vld [vmem:[%s6 + $0x1f0] sm:$0xff]
  %v790 = vld [vmem:[%s6 + $0x1f8] sm:$0xff]
  %v791 = vld [vmem:[%s6 + $0x200] sm:$0xff]
  %v792 = vld [vmem:[%s6 + $0x208] sm:$0xff]
  %v793 = vld [vmem:[%s6 + $0x210] sm:$0xff]
  %v794 = vld [vmem:[%s6 + $0x218] sm:$0xff]
  %v795 = vld [vmem:[%s6 + $0x220] sm:$0xff]
  %v796 = vld [vmem:[%s6 + $0x228] sm:$0xff]
  %v797 = vld [vmem:[%s6 + $0x230] sm:$0xff]
  %v798 = vld [vmem:[%s6 + $0x238] sm:$0xff]
  %v799 = vld [vmem:[%s6 + $0x240] sm:$0xff]
  %v800 = vld [vmem:[%s6 + $0x248] sm:$0xff]
  %v801 = vld [vmem:[%s6 + $0x250] sm:$0xff]
  %v802 = vld [vmem:[%s6 + $0x258] sm:$0xff]
  %v803 = vld [vmem:[%s6 + $0x260] sm:$0xff]
  %v804 = vld [vmem:[%s6 + $0x268] sm:$0xff]
  %v805 = vld [vmem:[%s6 + $0x270] sm:$0xff]
  %v806 = vld [vmem:[%s6 + $0x278] sm:$0xff]
  %v807 = vld [vmem:[%s6 + $0x280] sm:$0xff]
  %v808 = vld [vmem:[%s6 + $0x288] sm:$0xff]
  %v809 = vld [vmem:[%s6 + $0x290] sm:$0xff]
  %v810 = vld [vmem:[%s6 + $0x298] sm:$0xff]
  %v811 = vld [vmem:[%s6 + $0x2a0] sm:$0xff]
  %v812 = vld [vmem:[%s6 + $0x2a8] sm:$0xff]
  %v813 = vld [vmem:[%s6 + $0x2b0] sm:$0xff]
  %v814 = vld [vmem:[%s6 + $0x2b8] sm:$0xff]
  %v815 = vld [vmem:[%s6 + $0x2c0] sm:$0xff]
  %v816 = vld [vmem:[%s6 + $0x2c8] sm:$0xff]
  %v817 = vld [vmem:[%s6 + $0x2d0] sm:$0xff]
  %v818 = vld [vmem:[%s6 + $0x2d8] sm:$0xff]
  %v819 = vld [vmem:[%s6 + $0x2e0] sm:$0xff]
  %v820 = vld [vmem:[%s6 + $0x2e8] sm:$0xff]
  %v821 = vld [vmem:[%s6 + $0x2f0] sm:$0xff]
  %v822 = vld [vmem:[%s6 + $0x2f8] sm:$0xff]
  %v823 = vld [vmem:[%s6 + $0x300] sm:$0xff]
  %v824 = vld [vmem:[%s6 + $0x308] sm:$0xff]
  %v825 = vld [vmem:[%s6 + $0x310] sm:$0xff]
  %v826 = vld [vmem:[%s6 + $0x318] sm:$0xff]
  %v827 = vld [vmem:[%s6 + $0x320] sm:$0xff]
  %v828 = vld [vmem:[%s6 + $0x328] sm:$0xff]
  %v829 = vld [vmem:[%s6 + $0x330] sm:$0xff]
  %v830 = vld [vmem:[%s6 + $0x338] sm:$0xff]
  %v831 = vld [vmem:[%s6 + $0x340] sm:$0xff]
  %v832 = vld [vmem:[%s6 + $0x348] sm:$0xff]
  %v833 = vld [vmem:[%s6 + $0x350] sm:$0xff]
  %v834 = vld [vmem:[%s6 + $0x358] sm:$0xff]
  %v835 = vld [vmem:[%s6 + $0x360] sm:$0xff]
  %v836 = vld [vmem:[%s6 + $0x368] sm:$0xff]
  %v837 = vld [vmem:[%s6 + $0x370] sm:$0xff]
  %v838 = vld [vmem:[%s6 + $0x378] sm:$0xff]
  %v839 = vld [vmem:[%s6 + $0x380] sm:$0xff]
  %v840 = vld [vmem:[%s6 + $0x388] sm:$0xff]
  %v841 = vld [vmem:[%s6 + $0x390] sm:$0xff]
  %v842 = vld [vmem:[%s6 + $0x398] sm:$0xff]
  %v843 = vld [vmem:[%s6 + $0x3a0] sm:$0xff]
  %v844 = vld [vmem:[%s6 + $0x3a8] sm:$0xff]
  %v845 = vld [vmem:[%s6 + $0x3b0] sm:$0xff]
  %v846 = vld [vmem:[%s6 + $0x3b8] sm:$0xff]
  %v847 = vld [vmem:[%s6 + $0x3c0] sm:$0xff]
  %v848 = vld [vmem:[%s6 + $0x3c8] sm:$0xff]
  %v849 = vld [vmem:[%s6 + $0x3d0] sm:$0xff]
  %v850 = vld [vmem:[%s6 + $0x3d8] sm:$0xff]
  %v851 = vld [vmem:[%s6 + $0x3e0] sm:$0xff]
  %v852 = vld [vmem:[%s6 + $0x3e8] sm:$0xff]
  %v853 = vld [vmem:[%s6 + $0x3f0] sm:$0xff]
  %v854 = vld [vmem:[%s6 + $0x3f8] sm:$0xff]
  %855 = vmatprep.subr.mxu0 %v728
  %856 = vmatpush1.msra.mxu0 %v727
  %857 = vmatprep.subr.mxu0 %v732
  %858 = vmatpush1.msra.mxu0 %v731
  %859 = vmatprep.subr.mxu0 %v736
  %860 = vmatpush1.msra.mxu0 %v735
  %861 = vmatprep.subr.mxu0 %v740
  %862 = vmatpush1.msra.mxu0 %v739
  %863 = vmatprep.subr.mxu0 %v744
  %864 = vmatpush1.msra.mxu0 %v743
  %865 = vmatprep.subr.mxu0 %v748
  %866 = vmatpush1.msra.mxu0 %v747
  %867 = vmatprep.subr.mxu0 %v752
  %868 = vmatpush1.msra.mxu0 %v751
  %869 = vmatprep.subr.mxu0 %v756
  %870 = vmatpush1.msra.mxu0 %v755
  %871 = vmatprep.subr.mxu0 %v760
  %872 = vmatpush1.msra.mxu0 %v759
  %873 = vmatprep.subr.mxu0 %v764
  %874 = vmatpush1.msra.mxu0 %v763
  %875 = vmatprep.subr.mxu0 %v768
  %876 = vmatpush1.msra.mxu0 %v767
  %877 = vmatprep.subr.mxu0 %v772
  %878 = vmatpush1.msra.mxu0 %v771
  %879 = vmatprep.subr.mxu0 %v776
  %880 = vmatpush1.msra.mxu0 %v775
  %881 = vmatprep.subr.mxu0 %v780
  %882 = vmatpush1.msra.mxu0 %v779
  %883 = vmatprep.subr.mxu0 %v784
  %884 = vmatpush1.msra.mxu0 %v783
  %885 = vmatprep.subr.mxu0 %v788
  %886 = vmatpush1.msra.mxu0 %v787
  %887 = vmatprep.subr.mxu0 %v792
  %888 = vmatpush1.msra.mxu0 %v791
  %889 = vmatprep.subr.mxu0 %v796
  %890 = vmatpush1.msra.mxu0 %v795
  %891 = vmatprep.subr.mxu0 %v800
  %892 = vmatpush1.msra.mxu0 %v799
  %893 = vmatprep.subr.mxu0 %v804
  %894 = vmatpush1.msra.mxu0 %v803
  %895 = vmatprep.subr.mxu0 %v808
  %896 = vmatpush1.msra.mxu0 %v807
  %897 = vmatprep.subr.mxu0 %v812
  %898 = vmatpush1.msra.mxu0 %v811
  %899 = vmatprep.subr.mxu0 %v816
  %900 = vmatpush1.msra.mxu0 %v815
  %901 = vmatprep.subr.mxu0 %v820
  %902 = vmatpush1.msra.mxu0 %v819
  %903 = vmatprep.subr.mxu0 %v824
  %904 = vmatpush1.msra.mxu0 %v823
  %905 = vmatprep.subr.mxu0 %v828
  %906 = vmatpush1.msra.mxu0 %v827
  %907 = vmatprep.subr.mxu0 %v832
  %908 = vmatpush1.msra.mxu0 %v831
  %909 = vmatprep.subr.mxu0 %v836
  %910 = vmatpush1.msra.mxu0 %v835
  %911 = vmatprep.subr.mxu0 %v840
  %912 = vmatpush1.msra.mxu0 %v839
  %913 = vmatprep.subr.mxu0 %v844
  %914 = vmatpush1.msra.mxu0 %v843
  %915 = vmatprep.subr.mxu0 %v848
  %916 = vmatpush1.msra.mxu0 %v847
  %917 = vmatprep.subr.mxu0 %v852
  %918 = vmatpush1.msra.mxu0 %v851
  %919 = vmatprep.mubr.f32.mxu0 %v726
  %920 = vmatmul.mubr.f32.gmra.mrb[0].mxu0 %v725
  %v921 = vpop.f32.mrb[0].mxu0
  %v922 = vadd.f32 0.0, %v921
  %v923 = vpop.f32.mrb[0].mxu0
  %v924 = vadd.f32 0.0, %v923
  %925 = vdwg.mxu0
  %926 = vmatprep.subr.mxu0 %v730
  %927 = vmatpush1.msra.mxu0 %v729
  %928 = vmatprep.subr.mxu0 %v734
  %929 = vmatpush1.msra.mxu0 %v733
  %930 = vmatprep.subr.mxu0 %v738
  %931 = vmatpush1.msra.mxu0 %v737
  %932 = vmatprep.subr.mxu0 %v742
  %933 = vmatpush1.msra.mxu0 %v741
  %934 = vmatprep.subr.mxu0 %v746
  %935 = vmatpush1.msra.mxu0 %v745
  %936 = vmatprep.subr.mxu0 %v750
  %937 = vmatpush1.msra.mxu0 %v749
  %938 = vmatprep.subr.mxu0 %v754
  %939 = vmatpush1.msra.mxu0 %v753
  %940 = vmatprep.subr.mxu0 %v758
  %941 = vmatpush1.msra.mxu0 %v757
  %942 = vmatprep.subr.mxu0 %v762
  %943 = vmatpush1.msra.mxu0 %v761
  %944 = vmatprep.subr.mxu0 %v766
  %945 = vmatpush1.msra.mxu0 %v765
  %946 = vmatprep.subr.mxu0 %v770
  %947 = vmatpush1.msra.mxu0 %v769
  %948 = vmatprep.subr.mxu0 %v774
  %949 = vmatpush1.msra.mxu0 %v773
  %950 = vmatprep.subr.mxu0 %v778
  %951 = vmatpush1.msra.mxu0 %v777
  %952 = vmatprep.subr.mxu0 %v782
  %953 = vmatpush1.msra.mxu0 %v781
  %954 = vmatprep.subr.mxu0 %v786
  %955 = vmatpush1.msra.mxu0 %v785
  %956 = vmatprep.subr.mxu0 %v790
  %957 = vmatpush1.msra.mxu0 %v789
  %958 = vmatprep.subr.mxu0 %v794
  %959 = vmatpush1.msra.mxu0 %v793
  %960 = vmatprep.subr.mxu0 %v798
  %961 = vmatpush1.msra.mxu0 %v797
  %962 = vmatprep.subr.mxu0 %v802
  %963 = vmatpush1.msra.mxu0 %v801
  %964 = vmatprep.subr.mxu0 %v806
  %965 = vmatpush1.msra.mxu0 %v805
  %966 = vmatprep.subr.mxu0 %v810
  %967 = vmatpush1.msra.mxu0 %v809
  %968 = vmatprep.subr.mxu0 %v814
  %969 = vmatpush1.msra.mxu0 %v813
  %970 = vmatprep.subr.mxu0 %v818
  %971 = vmatpush1.msra.mxu0 %v817
  %972 = vmatprep.subr.mxu0 %v822
  %973 = vmatpush1.msra.mxu0 %v821
  %974 = vmatprep.subr.mxu0 %v826
  %975 = vmatpush1.msra.mxu0 %v825
  %976 = vmatprep.subr.mxu0 %v830
  %977 = vmatpush1.msra.mxu0 %v829
  %978 = vmatprep.subr.mxu0 %v834
  %979 = vmatpush1.msra.mxu0 %v833
  %980 = vmatprep.subr.mxu0 %v838
  %981 = vmatpush1.msra.mxu0 %v837
  %982 = vmatprep.subr.mxu0 %v842
  %983 = vmatpush1.msra.mxu0 %v841
  %984 = vmatprep.subr.mxu0 %v846
  %985 = vmatpush1.msra.mxu0 %v845
  %986 = vmatprep.subr.mxu0 %v850
  %987 = vmatpush1.msra.mxu0 %v849
  %988 = vmatprep.subr.mxu0 %v854
  %989 = vmatpush1.msra.mxu0 %v853
  %990 = vmatprep.mubr.f32.mxu0 %v726
  %991 = vmatmul.mubr.f32.gmra.mrb[0].mxu0 %v725
  %v992 = vpop.f32.mrb[0].mxu0
  %v993 = vadd.f32 0.0, %v992
  %v994 = vpop.f32.mrb[0].mxu0
  %v995 = vadd.f32 0.0, %v994
  %996 = vdwg.mxu0
  %v998 = vrot.slane %v922, 1
  %999 = vrot.lane.b32.xlu0 %v998, 64
  %v1000 = vpop.permute.xlu0 %999
  %vm1002 = vcmask 523264
  %v1003 = vsel %vm1002, %v922, %v1000
  %v1005 = vrot.slane %v993, 1
  %1006 = vrot.lane.b32.xlu0 %v1005, 64
  %v1007 = vpop.permute.xlu0 %1006
  %v1009 = vsel %vm1002, %v993, %v1007
  %1010 = vrot.lane.b32.xlu0 %v922, 64
  %v1011 = vpop.permute.xlu0 %1010
  %v1014 = vsel %vm1002, %v1011, %v998
  %1015 = vrot.lane.b32.xlu0 %v993, 64
  %v1016 = vpop.permute.xlu0 %1015
  %v1019 = vsel %vm1002, %v1016, %v1005
  %v1021 = vrot.slane %v924, 1
  %1022 = vrot.lane.b32.xlu0 %v1021, 64
  %v1023 = vpop.permute.xlu0 %1022
  %v1025 = vsel %vm1002, %v924, %v1023
  %v1027 = vrot.slane %v995, 1
  %1028 = vrot.lane.b32.xlu0 %v1027, 64
  %v1029 = vpop.permute.xlu0 %1028
  %v1031 = vsel %vm1002, %v995, %v1029
  %1032 = vrot.lane.b32.xlu0 %v924, 64
  %v1033 = vpop.permute.xlu0 %1032
  %v1036 = vsel %vm1002, %v1033, %v1021
  %1037 = vrot.lane.b32.xlu0 %v995, 64
  %v1038 = vpop.permute.xlu0 %1037
  %v1041 = vsel %vm1002, %v1038, %v1027
  %v1043 = vrot.slane %v1014, 7
  %v1046 = vrot.slane %v1025, 6
  %v1049 = vrot.slane %v1036, 5
  %v1051 = vsel %vm724, %v1003, %v1043
  %vm1052 = vcmask 1041408
  %v1053 = vsel %vm1052, %v1051, %v1046
  %vm1054 = vcmask 1042432
  %v1055 = vsel %vm1054, %v1053, %v1049
  %v1057 = vrot.slane %v1019, 7
  %v1060 = vrot.slane %v1031, 6
  %v1063 = vrot.slane %v1041, 5
  %v1065 = vsel %vm724, %v1009, %v1057
  %v1066 = vsel %vm1052, %v1065, %v1060
  %v1067 = vsel %vm1054, %v1066, %v1063
  %v1068 = vld [vmem:[%s7] sm:$0xff]
  %v1069 = vld [vmem:[%s8] sm:$0xff]
  %v1071 = vsel %vm359, %v1069, 0
  %v1074 = vsel %vm76, %v1067, 0
  %1076 = vmatprep.subr.mxu0 0.0
  %1077 = vmatpush1.msra.mxu0 %v1074
  %1078 = vmatprep.subr.mxu0 0.0
  %1079 = vmatpush1.msra.mxu0 0.0
  %1080 = vmatprep.subr.mxu0 0.0
  %1081 = vmatpush1.msra.mxu0 0.0
  %1082 = vmatprep.subr.mxu0 0.0
  %1083 = vmatpush1.msra.mxu0 0.0
  %1084 = vmatprep.subr.mxu0 0.0
  %1085 = vmatpush1.msra.mxu0 0.0
  %1086 = vmatprep.subr.mxu0 0.0
  %1087 = vmatpush1.msra.mxu0 0.0
  %1088 = vmatprep.subr.mxu0 0.0
  %1089 = vmatpush1.msra.mxu0 0.0
  %1090 = vmatprep.subr.mxu0 0.0
  %1091 = vmatpush1.msra.mxu0 0.0
  %1092 = vmatprep.subr.mxu0 0.0
  %1093 = vmatpush1.msra.mxu0 0.0
  %1094 = vmatprep.subr.mxu0 0.0
  %1095 = vmatpush1.msra.mxu0 0.0
  %1096 = vmatprep.subr.mxu0 0.0
  %1097 = vmatpush1.msra.mxu0 0.0
  %1098 = vmatprep.subr.mxu0 0.0
  %1099 = vmatpush1.msra.mxu0 0.0
  %1100 = vmatprep.subr.mxu0 0.0
  %1101 = vmatpush1.msra.mxu0 0.0
  %1102 = vmatprep.subr.mxu0 0.0
  %1103 = vmatpush1.msra.mxu0 0.0
  %1104 = vmatprep.subr.mxu0 0.0
  %1105 = vmatpush1.msra.mxu0 0.0
  %1106 = vmatprep.subr.mxu0 0.0
  %1107 = vmatpush1.msra.mxu0 0.0
  %1108 = vmatprep.subr.mxu0 0.0
  %1109 = vmatpush1.msra.mxu0 0.0
  %1110 = vmatprep.subr.mxu0 0.0
  %1111 = vmatpush1.msra.mxu0 0.0
  %1112 = vmatprep.subr.mxu0 0.0
  %1113 = vmatpush1.msra.mxu0 0.0
  %1114 = vmatprep.subr.mxu0 0.0
  %1115 = vmatpush1.msra.mxu0 0.0
  %1116 = vmatprep.subr.mxu0 0.0
  %1117 = vmatpush1.msra.mxu0 0.0
  %1118 = vmatprep.subr.mxu0 0.0
  %1119 = vmatpush1.msra.mxu0 0.0
  %1120 = vmatprep.subr.mxu0 0.0
  %1121 = vmatpush1.msra.mxu0 0.0
  %1122 = vmatprep.subr.mxu0 0.0
  %1123 = vmatpush1.msra.mxu0 0.0
  %1124 = vmatprep.subr.mxu0 0.0
  %1125 = vmatpush1.msra.mxu0 0.0
  %1126 = vmatprep.subr.mxu0 0.0
  %1127 = vmatpush1.msra.mxu0 0.0
  %1128 = vmatprep.subr.mxu0 0.0
  %1129 = vmatpush1.msra.mxu0 0.0
  %1130 = vmatprep.subr.mxu0 0.0
  %1131 = vmatpush1.msra.mxu0 0.0
  %1132 = vmatprep.subr.mxu0 0.0
  %1133 = vmatpush1.msra.mxu0 0.0
  %1134 = vmatprep.subr.mxu0 0.0
  %1135 = vmatpush1.msra.mxu0 0.0
  %1136 = vmatprep.subr.mxu0 0.0
  %1137 = vmatpush1.msra.mxu0 0.0
  %1138 = vmatprep.subr.mxu0 0.0
  %1139 = vmatpush1.msra.mxu0 0.0
  %1140 = vmatprep.mubr.f32.mxu0 0.0
  %1141 = vmatmul.mubr.f32.gmra.mrb[0].mxu0 %v1071
  %v1142 = vpop.f32.mrb[0].mxu0
  %v1143 = vadd.f32 0.0, %v1142
  %v1144 = vpop.f32.mrb[0].mxu0
  %1145 = vdwg.mxu0
  %v1147 = vsel %vm359, %v1068, 0
  %v1150 = vsel %vm76, %v1055, 0
  %1152 = vmatprep.subr.mxu0 0.0
  %1153 = vmatpush1.msra.mxu0 %v1150
  %1154 = vmatprep.subr.mxu0 0.0
  %1155 = vmatpush1.msra.mxu0 0.0
  %1156 = vmatprep.subr.mxu0 0.0
  %1157 = vmatpush1.msra.mxu0 0.0
  %1158 = vmatprep.subr.mxu0 0.0
  %1159 = vmatpush1.msra.mxu0 0.0
  %1160 = vmatprep.subr.mxu0 0.0
  %1161 = vmatpush1.msra.mxu0 0.0
  %1162 = vmatprep.subr.mxu0 0.0
  %1163 = vmatpush1.msra.mxu0 0.0
  %1164 = vmatprep.subr.mxu0 0.0
  %1165 = vmatpush1.msra.mxu0 0.0
  %1166 = vmatprep.subr.mxu0 0.0
  %1167 = vmatpush1.msra.mxu0 0.0
  %1168 = vmatprep.subr.mxu0 0.0
  %1169 = vmatpush1.msra.mxu0 0.0
  %1170 = vmatprep.subr.mxu0 0.0
  %1171 = vmatpush1.msra.mxu0 0.0
  %1172 = vmatprep.subr.mxu0 0.0
  %1173 = vmatpush1.msra.mxu0 0.0
  %1174 = vmatprep.subr.mxu0 0.0
  %1175 = vmatpush1.msra.mxu0 0.0
  %1176 = vmatprep.subr.mxu0 0.0
  %1177 = vmatpush1.msra.mxu0 0.0
  %1178 = vmatprep.subr.mxu0 0.0
  %1179 = vmatpush1.msra.mxu0 0.0
  %1180 = vmatprep.subr.mxu0 0.0
  %1181 = vmatpush1.msra.mxu0 0.0
  %1182 = vmatprep.subr.mxu0 0.0
  %1183 = vmatpush1.msra.mxu0 0.0
  %1184 = vmatprep.subr.mxu0 0.0
  %1185 = vmatpush1.msra.mxu0 0.0
  %1186 = vmatprep.subr.mxu0 0.0
  %1187 = vmatpush1.msra.mxu0 0.0
  %1188 = vmatprep.subr.mxu0 0.0
  %1189 = vmatpush1.msra.mxu0 0.0
  %1190 = vmatprep.subr.mxu0 0.0
  %1191 = vmatpush1.msra.mxu0 0.0
  %1192 = vmatprep.subr.mxu0 0.0
  %1193 = vmatpush1.msra.mxu0 0.0
  %1194 = vmatprep.subr.mxu0 0.0
  %1195 = vmatpush1.msra.mxu0 0.0
  %1196 = vmatprep.subr.mxu0 0.0
  %1197 = vmatpush1.msra.mxu0 0.0
  %1198 = vmatprep.subr.mxu0 0.0
  %1199 = vmatpush1.msra.mxu0 0.0
  %1200 = vmatprep.subr.mxu0 0.0
  %1201 = vmatpush1.msra.mxu0 0.0
  %1202 = vmatprep.subr.mxu0 0.0
  %1203 = vmatpush1.msra.mxu0 0.0
  %1204 = vmatprep.subr.mxu0 0.0
  %1205 = vmatpush1.msra.mxu0 0.0
  %1206 = vmatprep.subr.mxu0 0.0
  %1207 = vmatpush1.msra.mxu0 0.0
  %1208 = vmatprep.subr.mxu0 0.0
  %1209 = vmatpush1.msra.mxu0 0.0
  %1210 = vmatprep.subr.mxu0 0.0
  %1211 = vmatpush1.msra.mxu0 0.0
  %1212 = vmatprep.subr.mxu0 0.0
  %1213 = vmatpush1.msra.mxu0 0.0
  %1214 = vmatprep.subr.mxu0 0.0
  %1215 = vmatpush1.msra.mxu0 0.0
  %1216 = vmatprep.mubr.f32.mxu0 0.0
  %1217 = vmatmul.mubr.f32.gmra.mrb[0].mxu0 %v1147
  %v1218 = vpop.f32.mrb[0].mxu0
  %v1219 = vadd.f32 %v1143, %v1218
  %v1220 = vpop.f32.mrb[0].mxu0
  %1221 = vdwg.mxu0
  %1222 = vadd.xlane.f32.xlu0 %v1219
  %v1223 = vpop.xlane.xlu0 %1222
  %v1224 = vmul.f32 %v1219, %v1219
  %1225 = vadd.xlane.f32.xlu0 %v1224
  %v1226 = vpop.xlane.xlu0 %1225
  %v1227 = vsel %vm680, %v1223, %v1226
  %1228 = vst.msk [vmem:[%s12] sm:$0xff] %vm682, %v1227
  %v1230 = vrot.slane %v1219, 4
  %1231 = vrot.lane.b32.xlu0 %v1230, 64
  %v1232 = vpop.permute.xlu0 %1231
  %1234 = vrot.lane.b32.xlu0 %v1219, 64
  %v1235 = vpop.permute.xlu0 %1234
  %v1238 = vsel %vm1002, %v1219, %v1232
  %v1239 = vsel %vm1002, %v1235, %v1230
  %v1242 = vcombine.low %v1238, %v1239
  %1244 = vst [vmem:[%s11] sm:$0xff] %v1242
  // Predicated region
  $region38: #{ffc_bn_act_forward.5} parent=0 // pred_check
    _
  $region39: #{ffc_bn_act_forward.5} parent=0 // pred_check_branch
    %1246 = sbr.rel (0) target = $region41
  $region40: #{ffc_bn_act_forward.5} parent=0 // pred_region
    _
  $region41: #{ffc_bn_act_forward.5} parent=0 // pred_fallthru
    _
  // Predicated region
  $region42: #{ffc_bn_act_forward.5} parent=0 // pred_check
    _
  $region43: #{ffc_bn_act_forward.5} parent=0 // pred_check_branch
    %1248 = sbr.rel (0) target = $region45
  $region44: #{ffc_bn_act_forward.5} parent=0 // pred_region
    _
  $region45: #{ffc_bn_act_forward.5} parent=0 // pred_fallthru
    _
  // Predicated region
  $region46: #{ffc_bn_act_forward.5} parent=0 // pred_check
    _
  $region47: #{ffc_bn_act_forward.5} parent=0 // pred_check_branch
    %1250 = sbr.rel (0) target = $region49
  $region48: #{ffc_bn_act_forward.5} parent=0 // pred_region
    _
  $region49: #{ffc_bn_act_forward.5} parent=0 // pred_fallthru
    _
  // Predicated region
  $region50: #{ffc_bn_act_forward.5} parent=0 // pred_check
    _
  $region51: #{ffc_bn_act_forward.5} parent=0 // pred_check_branch
    %1252 = sbr.rel (0) target = $region53
  $region52: #{ffc_bn_act_forward.5} parent=0 // pred_region
    _
  $region53: #{ffc_bn_act_forward.5} parent=0 // pred_fallthru
    _
  // Predicated region
  $region54: #{ffc_bn_act_forward.5} parent=0 // pred_check
    _
  $region55: #{ffc_bn_act_forward.5} parent=0 // pred_check_branch
    %1254 = sbr.rel (0) target = $region57
  $region56: #{ffc_bn_act_forward.5} parent=0 // pred_region
    _
  $region57: #{ffc_bn_act_forward.5} parent=0 // pred_fallthru
    _
  // Predicated region
  $region58: #{ffc_bn_act_forward.5} parent=0 // pred_check
    _
  $region59: #{ffc_bn_act_forward.5} parent=0 // pred_check_branch
    %1256 = sbr.rel (0) target = $region61
  $region60: #{ffc_bn_act_forward.5} parent=0 // pred_region
    _
  $region61: #{ffc_bn_act_forward.5} parent=0 // pred_fallthru
    _
  // Predicated region
  $region62: #{ffc_bn_act_forward.5} parent=0 // pred_check
    _
  $region63: #{ffc_bn_act_forward.5} parent=0 // pred_check_branch
    %1258 = sbr.rel (0) target = $region65
  $region64: #{ffc_bn_act_forward.5} parent=0 // pred_region
    _
  $region65: #{ffc_bn_act_forward.5} parent=0 // pred_fallthru
    _
  // Predicated region
  $region66: #{ffc_bn_act_forward.5} parent=0 // pred_check
    _
  $region67: #{ffc_bn_act_forward.5} parent=0 // pred_check_branch
    %1260 = sbr.rel (0) target = $region69
  $region68: #{ffc_bn_act_forward.5} parent=0 // pred_region
    _
  $region69: #{ffc_bn_act_forward.5} parent=0 // pred_fallthru
    _

// kernel: ffc_bn_act_forward.7
$region0: #{ffc_bn_act_forward.7}
  #allocation0 [shape = 'u32[]', space=smem, size = 0x4, offset = 0x4, fixed_abs, tag = 'smem constant byte address 0x4 - core index']
  #allocation1 [shape = 'u32[144,128]{1,0:T(1,128)}', space=vmem, size = 0x12000, scoped, tag = 'internal scratch']
  %s0 = inlined_call_operand.vmem [shape: f32[8,512], index: 0, kind: input, shape index: {}]
  %s1 = inlined_call_operand.vmem [shape: f32[8,512], index: 1, kind: input, shape index: {}]
  %s2 = inlined_call_operand.vmem [shape: f32[8,1], index: 2, kind: input, shape index: {}]
  %s3 = inlined_call_operand.vmem [shape: f32[8,1], index: 3, kind: input, shape index: {}]
  %s4 = inlined_call_operand.vmem [shape: f32[8,1], index: 4, kind: input, shape index: {}]
  %s5 = inlined_call_operand.vmem [shape: f32[8,1], index: 5, kind: input, shape index: {}]
  %s6 = inlined_call_operand.vmem [shape: f32[16,512], index: 6, kind: output, shape index: {}]
  %s7 = sld [smem:[#allocation0]]
  $region34: #{ffc_bn_act_forward.7} parent=0
    _
  %s9 = ssub.s32 1, %s7
  %s10 = scalar_select 0, %s9, %s7
  // Predicated region
  $region2: #{ffc_bn_act_forward.7} parent=0 // pred_check
    _
  $region3: #{ffc_bn_act_forward.7} parent=0 // pred_check_branch
    %12 = sbr.rel (0) target = $region5
  $region4: #{ffc_bn_act_forward.7} parent=0 // pred_region
    _
  $region5: #{ffc_bn_act_forward.7} parent=0 // pred_fallthru
    _
  // Predicated region
  $region6: #{ffc_bn_act_forward.7} parent=0 // pred_check
    _
  $region7: #{ffc_bn_act_forward.7} parent=0 // pred_check_branch
    %14 = sbr.rel (0) target = $region9
  $region8: #{ffc_bn_act_forward.7} parent=0 // pred_region
    _
  $region9: #{ffc_bn_act_forward.7} parent=0 // pred_fallthru
    _
  // Predicated region
  $region10: #{ffc_bn_act_forward.7} parent=0 // pred_check
    _
  $region11: #{ffc_bn_act_forward.7} parent=0 // pred_check_branch
    %16 = sbr.rel (0) target = $region13
  $region12: #{ffc_bn_act_forward.7} parent=0 // pred_region
    _
  $region13: #{ffc_bn_act_forward.7} parent=0 // pred_fallthru
    _
  // Predicated region
  $region14: #{ffc_bn_act_forward.7} parent=0 // pred_check
    _
  $region15: #{ffc_bn_act_forward.7} parent=0 // pred_check_branch
    %18 = sbr.rel (0) target = $region17
  $region16: #{ffc_bn_act_forward.7} parent=0 // pred_region
    _
  $region17: #{ffc_bn_act_forward.7} parent=0 // pred_fallthru
    _
  // Predicated region
  $region18: #{ffc_bn_act_forward.7} parent=0 // pred_check
    _
  $region19: #{ffc_bn_act_forward.7} parent=0 // pred_check_branch
    %20 = sbr.rel (0) target = $region21
  $region20: #{ffc_bn_act_forward.7} parent=0 // pred_region
    _
  $region21: #{ffc_bn_act_forward.7} parent=0 // pred_fallthru
    _
  // Predicated region
  $region22: #{ffc_bn_act_forward.7} parent=0 // pred_check
    _
  $region23: #{ffc_bn_act_forward.7} parent=0 // pred_check_branch
    %22 = sbr.rel (0) target = $region25
  $region24: #{ffc_bn_act_forward.7} parent=0 // pred_region
    _
  $region25: #{ffc_bn_act_forward.7} parent=0 // pred_fallthru
    _
  %v23 = vld [vmem:[%s0] sm:$0xff]
  %v24 = vld [vmem:[%s0 + $0x8] sm:$0xff]
  %v25 = vld [vmem:[%s0 + $0x10] sm:$0xff]
  %v26 = vld [vmem:[%s0 + $0x18] sm:$0xff]
  %v27 = vld [vmem:[%s2] sm:$0xff]
  %29 = vset.pattern.permute.xlu0 0
  %30 = vperm.xlu0 %29, %v27
  %v31 = vpop.permute.xlu0 %30
  %v33 = vmul.f32 %v23, %v31
  %v34 = vmul.f32 %v24, %v31
  %v35 = vmul.f32 %v25, %v31
  %v36 = vmul.f32 %v26, %v31
  %v37 = vld [vmem:[%s3] sm:$0xff]
  %39 = vset.pattern.permute.xlu0 0
  %40 = vperm.xlu0 %39, %v37
  %v41 = vpop.permute.xlu0 %40
  %v43 = vadd.f32 %v33, %v41
  %v44 = vadd.f32 %v34, %v41
  %v45 = vadd.f32 %v35, %v41
  %v46 = vadd.f32 %v36, %v41
  %47 = vst [vmem:[%s6] sm:$0xff] %v43
  %48 = vst [vmem:[%s6 + $0x8] sm:$0xff] %v44
  %49 = vst [vmem:[%s6 + $0x10] sm:$0xff] %v45
  %50 = vst [vmem:[%s6 + $0x18] sm:$0xff] %v46
  %v51 = vld [vmem:[%s1] sm:$0xff]
  %v52 = vld [vmem:[%s1 + $0x8] sm:$0xff]
  %v53 = vld [vmem:[%s1 + $0x10] sm:$0xff]
  %v54 = vld [vmem:[%s1 + $0x18] sm:$0xff]
  %v55 = vld [vmem:[%s4] sm:$0xff]
  %57 = vset.pattern.permute.xlu0 0
  %58 = vperm.xlu0 %57, %v55
  %v59 = vpop.permute.xlu0 %58
  %v61 = vmul.f32 %v51, %v59
  %v62 = vmul.f32 %v52, %v59
  %v63 = vmul.f32 %v53, %v59
  %v64 = vmul.f32 %v54, %v59
  %v65 = vld [vmem:[%s5] sm:$0xff]
  %67 = vset.pattern.permute.xlu0 0
  %68 = vperm.xlu0 %67, %v65
  %v69 = vpop.permute.xlu0 %68
  %v71 = vadd.f32 %v61, %v69
  %v72 = vadd.f32 %v62, %v69
  %v73 = vadd.f32 %v63, %v69
  %v74 = vadd.f32 %v64, %v69
  %75 = vst [vmem:[%s6 + $0x20] sm:$0xff] %v71
  %76 = vst [vmem:[%s6 + $0x28] sm:$0xff] %v72
  %77 = vst [vmem:[%s6 + $0x30] sm:$0xff] %v73
  %78 = vst [vmem:[%s6 + $0x38] sm:$0xff] %v74
  // Predicated region
  $region26: #{ffc_bn_act_forward.7} parent=0 // pred_check
    _
  $region27: #{ffc_bn_act_forward.7} parent=0 // pred_check_branch
    %80 = sbr.rel (0) target = $region29
  $region28: #{ffc_bn_act_forward.7} parent=0 // pred_region
    _
  $region29: #{ffc_bn_act_forward.7} parent=0 // pred_fallthru
    _
  // Predicated region
  $region30: #{ffc_bn_act_forward.7} parent=0 // pred_check
    _
  $region31: #{ffc_bn_act_forward.7} parent=0 // pred_check_branch
    %82 = sbr.rel (0) target = $region33
  $region32: #{ffc_bn_act_forward.7} parent=0 // pred_region
    _
  $region33: #{ffc_bn_act_forward.7} parent=0 // pred_fallthru
    _

// kernel: ffc_bn_act_forward.6
$region0: #{ffc_bn_act_forward.6}
  #allocation0 [shape = 'u32[]', space=smem, size = 0x4, offset = 0x4, fixed_abs, tag = 'smem constant byte address 0x4 - core index']
  #allocation1 [shape = 'u32[144,128]{1,0:T(1,128)}', space=vmem, size = 0x12000, scoped, tag = 'internal scratch']
  %s0 = inlined_call_operand.vmem [shape: f32[4,512], index: 0, kind: input, shape index: {}]
  %s1 = inlined_call_operand.vmem [shape: f32[4,1], index: 1, kind: input, shape index: {}]
  %s2 = inlined_call_operand.vmem [shape: f32[4,1], index: 2, kind: input, shape index: {}]
  %s3 = inlined_call_operand.vmem [shape: f32[4,1024], index: 3, kind: input, shape index: {}]
  %s4 = inlined_call_operand.vmem [shape: f32[4,512], index: 4, kind: input, shape index: {}]
  %s5 = inlined_call_operand.vmem [shape: f32[4,512], index: 5, kind: input, shape index: {}]
  %s6 = inlined_call_operand.vmem [shape: f32[4,256], index: 6, kind: input, shape index: {}]
  %s7 = inlined_call_operand.vmem [shape: f32[4,128], index: 7, kind: input, shape index: {}]
  %s8 = inlined_call_operand.vmem [shape: f32[4,128], index: 8, kind: input, shape index: {}]
  %s9 = inlined_call_operand.vmem [shape: f32[8,512], index: 9, kind: input, shape index: {}]
  %s10 = inlined_call_operand.vmem [shape: f32[512,256], index: 10, kind: input, shape index: {}]
  %s11 = inlined_call_operand.vmem [shape: f32[128,256], index: 11, kind: input, shape index: {}]
  %s12 = inlined_call_operand.vmem [shape: f32[8,4], index: 12, kind: input, shape index: {}]
  %s13 = inlined_call_operand.vmem [shape: f32[8,4], index: 13, kind: input, shape index: {}]
  %s14 = inlined_call_operand.vmem [shape: f32[8,512], index: 14, kind: output, shape index: {0}]
  %s15 = inlined_call_operand.vmem [shape: f32[1,8,2], index: 15, kind: output, shape index: {1}]
  %16 = xla_tuple %s14, %s15
  %s17 = sld [smem:[#allocation0]]
  $region74: #{ffc_bn_act_forward.6} parent=0
    _
  %s19 = ssub.s32 1, %s17
  %s20 = scalar_select 0, %s19, %s17
  // Predicated region
  $region2: #{ffc_bn_act_forward.6} parent=0 // pred_check
    _
  $region3: #{ffc_bn_act_forward.6} parent=0 // pred_check_branch
    %22 = sbr.rel (0) target = $region5
  $region4: #{ffc_bn_act_forward.6} parent=0 // pred_region
    _
  $region5: #{ffc_bn_act_forward.6} parent=0 // pred_fallthru
    _
  // Predicated region
  $region6: #{ffc_bn_act_forward.6} parent=0 // pred_check
    _
  $region7: #{ffc_bn_act_forward.6} parent=0 // pred_check_branch
    %24 = sbr.rel (0) target = $region9
  $region8: #{ffc_bn_act_forward.6} parent=0 // pred_region
    _
  $region9: #{ffc_bn_act_forward.6} parent=0 // pred_fallthru
    _
  // Predicated region
  $region10: #{ffc_bn_act_forward.6} parent=0 // pred_check
    _
  $region11: #{ffc_bn_act_forward.6} parent=0 // pred_check_branch
    %26 = sbr.rel (0) target = $region13
  $region12: #{ffc_bn_act_forward.6} parent=0 // pred_region
    _
  $region13: #{ffc_bn_act_forward.6} parent=0 // pred_fallthru
    _
  // Predicated region
  $region14: #{ffc_bn_act_forward.6} parent=0 // pred_check
    _
  $region15: #{ffc_bn_act_forward.6} parent=0 // pred_check_branch
    %28 = sbr.rel (0) target = $region17
  $region16: #{ffc_bn_act_forward.6} parent=0 // pred_region
    _
  $region17: #{ffc_bn_act_forward.6} parent=0 // pred_fallthru
    _
  // Predicated region
  $region18: #{ffc_bn_act_forward.6} parent=0 // pred_check
    _
  $region19: #{ffc_bn_act_forward.6} parent=0 // pred_check_branch
    %30 = sbr.rel (0) target = $region21
  $region20: #{ffc_bn_act_forward.6} parent=0 // pred_region
    _
  $region21: #{ffc_bn_act_forward.6} parent=0 // pred_fallthru
    _
  // Predicated region
  $region22: #{ffc_bn_act_forward.6} parent=0 // pred_check
    _
  $region23: #{ffc_bn_act_forward.6} parent=0 // pred_check_branch
    %32 = sbr.rel (0) target = $region25
  $region24: #{ffc_bn_act_forward.6} parent=0 // pred_region
    _
  $region25: #{ffc_bn_act_forward.6} parent=0 // pred_fallthru
    _
  // Predicated region
  $region26: #{ffc_bn_act_forward.6} parent=0 // pred_check
    _
  $region27: #{ffc_bn_act_forward.6} parent=0 // pred_check_branch
    %34 = sbr.rel (0) target = $region29
  $region28: #{ffc_bn_act_forward.6} parent=0 // pred_region
    _
  $region29: #{ffc_bn_act_forward.6} parent=0 // pred_fallthru
    _
  // Predicated region
  $region30: #{ffc_bn_act_forward.6} parent=0 // pred_check
    _
  $region31: #{ffc_bn_act_forward.6} parent=0 // pred_check_branch
    %36 = sbr.rel (0) target = $region33
  $region32: #{ffc_bn_act_forward.6} parent=0 // pred_region
    _
  $region33: #{ffc_bn_act_forward.6} parent=0 // pred_fallthru
    _
  // Predicated region
  $region34: #{ffc_bn_act_forward.6} parent=0 // pred_check
    _
  $region35: #{ffc_bn_act_forward.6} parent=0 // pred_check_branch
    %38 = sbr.rel (0) target = $region37
  $region36: #{ffc_bn_act_forward.6} parent=0 // pred_region
    _
  $region37: #{ffc_bn_act_forward.6} parent=0 // pred_fallthru
    _
  // Predicated region
  $region38: #{ffc_bn_act_forward.6} parent=0 // pred_check
    _
  $region39: #{ffc_bn_act_forward.6} parent=0 // pred_check_branch
    %40 = sbr.rel (0) target = $region41
  $region40: #{ffc_bn_act_forward.6} parent=0 // pred_region
    _
  $region41: #{ffc_bn_act_forward.6} parent=0 // pred_fallthru
    _
  // Predicated region
  $region42: #{ffc_bn_act_forward.6} parent=0 // pred_check
    _
  $region43: #{ffc_bn_act_forward.6} parent=0 // pred_check_branch
    %42 = sbr.rel (0) target = $region45
  $region44: #{ffc_bn_act_forward.6} parent=0 // pred_region
    _
  $region45: #{ffc_bn_act_forward.6} parent=0 // pred_fallthru
    _
  // Predicated region
  $region46: #{ffc_bn_act_forward.6} parent=0 // pred_check
    _
  $region47: #{ffc_bn_act_forward.6} parent=0 // pred_check_branch
    %44 = sbr.rel (0) target = $region49
  $region48: #{ffc_bn_act_forward.6} parent=0 // pred_region
    _
  $region49: #{ffc_bn_act_forward.6} parent=0 // pred_fallthru
    _
  // Predicated region
  $region50: #{ffc_bn_act_forward.6} parent=0 // pred_check
    _
  $region51: #{ffc_bn_act_forward.6} parent=0 // pred_check_branch
    %46 = sbr.rel (0) target = $region53
  $region52: #{ffc_bn_act_forward.6} parent=0 // pred_region
    _
  $region53: #{ffc_bn_act_forward.6} parent=0 // pred_fallthru
    _
  // Predicated region
  $region54: #{ffc_bn_act_forward.6} parent=0 // pred_check
    _
  $region55: #{ffc_bn_act_forward.6} parent=0 // pred_check_branch
    %48 = sbr.rel (0) target = $region57
  $region56: #{ffc_bn_act_forward.6} parent=0 // pred_region
    _
  $region57: #{ffc_bn_act_forward.6} parent=0 // pred_fallthru
    _
  %v49 = vld [vmem:[%s0] sm:$0xff]
  %v50 = vld [vmem:[%s0 + $0x8] sm:$0xff]
  %v51 = vld [vmem:[%s1] sm:$0xf]
  %53 = vset.pattern.permute.xlu0 0
  %54 = vperm.xlu0 %53, %v51
  %v55 = vpop.permute.xlu0 %54
  %v57 = vunpack.c.l.s4 839922192
  %v58 = vunpack.c.0.s8 %v57
  %v59 = vlaneseq
  %v60 = vshrl.u32 %v59, 7
  %v61 = vsub.s32 %v58, %v60
  %v62 = vrot.slane %v55, %v61
  %v64 = vmul.f32 %v49, %v62
  %v65 = vmul.f32 %v50, %v62
  %v66 = vld [vmem:[%s2] sm:$0xf]
  %68 = vset.pattern.permute.xlu0 0
  %69 = vperm.xlu0 %68, %v66
  %v70 = vpop.permute.xlu0 %69
  %v72 = vunpack.c.l.s4 839922192
  %v73 = vunpack.c.0.s8 %v72
  %v74 = vlaneseq
  %v75 = vshrl.u32 %v74, 7
  %v76 = vsub.s32 %v73, %v75
  %v77 = vrot.slane %v70, %v76
  %v79 = vadd.f32 %v64, %v77
  %v80 = vadd.f32 %v65, %v77
  %v81 = vmax.f32 %v79, 0.0
  %v82 = vmax.f32 %v80, 0.0
  %v83 = vld [vmem:[%s3] sm:$0xff]
  %v84 = vld [vmem:[%s3 + $0x8] sm:$0xff]
  %v85 = vld [vmem:[%s3 + $0x10] sm:$0xff]
  %v86 = vld [vmem:[%s3 + $0x18] sm:$0xff]
  %v87 = vld [vmem:[%s4] sm:$0xff]
  %v88 = vld [vmem:[%s4 + $0x8] sm:$0xff]
  %v89 = vmul.f32 %v83, %v87
  %v90 = vmul.f32 %v84, %v88
  %v91 = vld [vmem:[%s5] sm:$0xff]
  %v92 = vld [vmem:[%s5 + $0x8] sm:$0xff]
  %v93 = vadd.f32 %v89, %v91
  %v94 = vadd.f32 %v90, %v92
  %v95 = vmax.f32 %v93, 0.0
  %v96 = vmax.f32 %v94, 0.0
  %v97 = vmul.f32 %v85, %v87
  %v98 = vmul.f32 %v86, %v88
  %v99 = vadd.f32 %v97, %v91
  %v100 = vadd.f32 %v98, %v92
  %v101 = vmax.f32 %v99, 0.0
  %v102 = vmax.f32 %v100, 0.0
  %v105 = vcombine.high %v95, %v95
  %v106 = vcombine.high %v96, %v96
  %v111 = vcombine.low %v101, %v101
  %v112 = vcombine.low %v102, %v102
  %vm115 = vcmask 1043456
  %v116 = vsel %vm115, %v95, %v111
  %v117 = vsel %vm115, %v105, %v101
  %v118 = vsel %vm115, %v96, %v112
  %v119 = vsel %vm115, %v106, %v102
  %v120 = vld [vmem:[%s10] sm:$0xff]
  %v121 = vld [vmem:[%s10 + $0x8] sm:$0xff]
  %v122 = vld [vmem:[%s10 + $0x10] sm:$0xff]
  %v123 = vld [vmem:[%s10 + $0x18] sm:$0xff]
  %v124 = vld [vmem:[%s10 + $0x20] sm:$0xff]
  %v125 = vld [vmem:[%s10 + $0x28] sm:$0xff]
  %v126 = vld [vmem:[%s10 + $0x30] sm:$0xff]
  %v127 = vld [vmem:[%s10 + $0x38] sm:$0xff]
  %v128 = vld [vmem:[%s10 + $0x40] sm:$0xff]
  %v129 = vld [vmem:[%s10 + $0x48] sm:$0xff]
  %v130 = vld [vmem:[%s10 + $0x50] sm:$0xff]
  %v131 = vld [vmem:[%s10 + $0x58] sm:$0xff]
  %v132 = vld [vmem:[%s10 + $0x60] sm:$0xff]
  %v133 = vld [vmem:[%s10 + $0x68] sm:$0xff]
  %v134 = vld [vmem:[%s10 + $0x70] sm:$0xff]
  %v135 = vld [vmem:[%s10 + $0x78] sm:$0xff]
  %v136 = vld [vmem:[%s10 + $0x80] sm:$0xff]
  %v137 = vld [vmem:[%s10 + $0x88] sm:$0xff]
  %v138 = vld [vmem:[%s10 + $0x90] sm:$0xff]
  %v139 = vld [vmem:[%s10 + $0x98] sm:$0xff]
  %v140 = vld [vmem:[%s10 + $0xa0] sm:$0xff]
  %v141 = vld [vmem:[%s10 + $0xa8] sm:$0xff]
  %v142 = vld [vmem:[%s10 + $0xb0] sm:$0xff]
  %v143 = vld [vmem:[%s10 + $0xb8] sm:$0xff]
  %v144 = vld [vmem:[%s10 + $0xc0] sm:$0xff]
  %v145 = vld [vmem:[%s10 + $0xc8] sm:$0xff]
  %v146 = vld [vmem:[%s10 + $0xd0] sm:$0xff]
  %v147 = vld [vmem:[%s10 + $0xd8] sm:$0xff]
  %v148 = vld [vmem:[%s10 + $0xe0] sm:$0xff]
  %v149 = vld [vmem:[%s10 + $0xe8] sm:$0xff]
  %v150 = vld [vmem:[%s10 + $0xf0] sm:$0xff]
  %v151 = vld [vmem:[%s10 + $0xf8] sm:$0xff]
  %v152 = vld [vmem:[%s10 + $0x100] sm:$0xff]
  %v153 = vld [vmem:[%s10 + $0x108] sm:$0xff]
  %v154 = vld [vmem:[%s10 + $0x110] sm:$0xff]
  %v155 = vld [vmem:[%s10 + $0x118] sm:$0xff]
  %v156 = vld [vmem:[%s10 + $0x120] sm:$0xff]
  %v157 = vld [vmem:[%s10 + $0x128] sm:$0xff]
  %v158 = vld [vmem:[%s10 + $0x130] sm:$0xff]
  %v159 = vld [vmem:[%s10 + $0x138] sm:$0xff]
  %v160 = vld [vmem:[%s10 + $0x140] sm:$0xff]
  %v161 = vld [vmem:[%s10 + $0x148] sm:$0xff]
  %v162 = vld [vmem:[%s10 + $0x150] sm:$0xff]
  %v163 = vld [vmem:[%s10 + $0x158] sm:$0xff]
  %v164 = vld [vmem:[%s10 + $0x160] sm:$0xff]
  %v165 = vld [vmem:[%s10 + $0x168] sm:$0xff]
  %v166 = vld [vmem:[%s10 + $0x170] sm:$0xff]
  %v167 = vld [vmem:[%s10 + $0x178] sm:$0xff]
  %v168 = vld [vmem:[%s10 + $0x180] sm:$0xff]
  %v169 = vld [vmem:[%s10 + $0x188] sm:$0xff]
  %v170 = vld [vmem:[%s10 + $0x190] sm:$0xff]
  %v171 = vld [vmem:[%s10 + $0x198] sm:$0xff]
  %v172 = vld [vmem:[%s10 + $0x1a0] sm:$0xff]
  %v173 = vld [vmem:[%s10 + $0x1a8] sm:$0xff]
  %v174 = vld [vmem:[%s10 + $0x1b0] sm:$0xff]
  %v175 = vld [vmem:[%s10 + $0x1b8] sm:$0xff]
  %v176 = vld [vmem:[%s10 + $0x1c0] sm:$0xff]
  %v177 = vld [vmem:[%s10 + $0x1c8] sm:$0xff]
  %v178 = vld [vmem:[%s10 + $0x1d0] sm:$0xff]
  %v179 = vld [vmem:[%s10 + $0x1d8] sm:$0xff]
  %v180 = vld [vmem:[%s10 + $0x1e0] sm:$0xff]
  %v181 = vld [vmem:[%s10 + $0x1e8] sm:$0xff]
  %v182 = vld [vmem:[%s10 + $0x1f0] sm:$0xff]
  %v183 = vld [vmem:[%s10 + $0x1f8] sm:$0xff]
  %v184 = vld [vmem:[%s10 + $0x200] sm:$0xff]
  %v185 = vld [vmem:[%s10 + $0x208] sm:$0xff]
  %v186 = vld [vmem:[%s10 + $0x210] sm:$0xff]
  %v187 = vld [vmem:[%s10 + $0x218] sm:$0xff]
  %v188 = vld [vmem:[%s10 + $0x220] sm:$0xff]
  %v189 = vld [vmem:[%s10 + $0x228] sm:$0xff]
  %v190 = vld [vmem:[%s10 + $0x230] sm:$0xff]
  %v191 = vld [vmem:[%s10 + $0x238] sm:$0xff]
  %v192 = vld [vmem:[%s10 + $0x240] sm:$0xff]
  %v193 = vld [vmem:[%s10 + $0x248] sm:$0xff]
  %v194 = vld [vmem:[%s10 + $0x250] sm:$0xff]
  %v195 = vld [vmem:[%s10 + $0x258] sm:$0xff]
  %v196 = vld [vmem:[%s10 + $0x260] sm:$0xff]
  %v197 = vld [vmem:[%s10 + $0x268] sm:$0xff]
  %v198 = vld [vmem:[%s10 + $0x270] sm:$0xff]
  %v199 = vld [vmem:[%s10 + $0x278] sm:$0xff]
  %v200 = vld [vmem:[%s10 + $0x280] sm:$0xff]
  %v201 = vld [vmem:[%s10 + $0x288] sm:$0xff]
  %v202 = vld [vmem:[%s10 + $0x290] sm:$0xff]
  %v203 = vld [vmem:[%s10 + $0x298] sm:$0xff]
  %v204 = vld [vmem:[%s10 + $0x2a0] sm:$0xff]
  %v205 = vld [vmem:[%s10 + $0x2a8] sm:$0xff]
  %v206 = vld [vmem:[%s10 + $0x2b0] sm:$0xff]
  %v207 = vld [vmem:[%s10 + $0x2b8] sm:$0xff]
  %v208 = vld [vmem:[%s10 + $0x2c0] sm:$0xff]
  %v209 = vld [vmem:[%s10 + $0x2c8] sm:$0xff]
  %v210 = vld [vmem:[%s10 + $0x2d0] sm:$0xff]
  %v211 = vld [vmem:[%s10 + $0x2d8] sm:$0xff]
  %v212 = vld [vmem:[%s10 + $0x2e0] sm:$0xff]
  %v213 = vld [vmem:[%s10 + $0x2e8] sm:$0xff]
  %v214 = vld [vmem:[%s10 + $0x2f0] sm:$0xff]
  %v215 = vld [vmem:[%s10 + $0x2f8] sm:$0xff]
  %v216 = vld [vmem:[%s10 + $0x300] sm:$0xff]
  %v217 = vld [vmem:[%s10 + $0x308] sm:$0xff]
  %v218 = vld [vmem:[%s10 + $0x310] sm:$0xff]
  %v219 = vld [vmem:[%s10 + $0x318] sm:$0xff]
  %v220 = vld [vmem:[%s10 + $0x320] sm:$0xff]
  %v221 = vld [vmem:[%s10 + $0x328] sm:$0xff]
  %v222 = vld [vmem:[%s10 + $0x330] sm:$0xff]
  %v223 = vld [vmem:[%s10 + $0x338] sm:$0xff]
  %v224 = vld [vmem:[%s10 + $0x340] sm:$0xff]
  %v225 = vld [vmem:[%s10 + $0x348] sm:$0xff]
  %v226 = vld [vmem:[%s10 + $0x350] sm:$0xff]
  %v227 = vld [vmem:[%s10 + $0x358] sm:$0xff]
  %v228 = vld [vmem:[%s10 + $0x360] sm:$0xff]
  %v229 = vld [vmem:[%s10 + $0x368] sm:$0xff]
  %v230 = vld [vmem:[%s10 + $0x370] sm:$0xff]
  %v231 = vld [vmem:[%s10 + $0x378] sm:$0xff]
  %v232 = vld [vmem:[%s10 + $0x380] sm:$0xff]
  %v233 = vld [vmem:[%s10 + $0x388] sm:$0xff]
  %v234 = vld [vmem:[%s10 + $0x390] sm:$0xff]
  %v235 = vld [vmem:[%s10 + $0x398] sm:$0xff]
  %v236 = vld [vmem:[%s10 + $0x3a0] sm:$0xff]
  %v237 = vld [vmem:[%s10 + $0x3a8] sm:$0xff]
  %v238 = vld [vmem:[%s10 + $0x3b0] sm:$0xff]
  %v239 = vld [vmem:[%s10 + $0x3b8] sm:$0xff]
  %v240 = vld [vmem:[%s10 + $0x3c0] sm:$0xff]
  %v241 = vld [vmem:[%s10 + $0x3c8] sm:$0xff]
  %v242 = vld [vmem:[%s10 + $0x3d0] sm:$0xff]
  %v243 = vld [vmem:[%s10 + $0x3d8] sm:$0xff]
  %v244 = vld [vmem:[%s10 + $0x3e0] sm:$0xff]
  %v245 = vld [vmem:[%s10 + $0x3e8] sm:$0xff]
  %v246 = vld [vmem:[%s10 + $0x3f0] sm:$0xff]
  %v247 = vld [vmem:[%s10 + $0x3f8] sm:$0xff]
  %v248 = vld [vmem:[%s6] sm:$0xff]
  %v249 = vld [vmem:[%s7] sm:$0xf]
  %v250 = vmul.f32 %v248, %v249
  %v251 = vld [vmem:[%s8] sm:$0xf]
  %v252 = vadd.f32 %v250, %v251
  %v253 = vmax.f32 %v252, 0.0
  %v255 = vrot.slane %v248, 4
  %v257 = vmul.f32 %v255, %v249
  %v258 = vadd.f32 %v257, %v251
  %v259 = vmax.f32 %v258, 0.0
  %v261 = vcombine.low %v259, %v259
  %v263 = vsel %vm115, %v253, %v261
  %v264 = vld [vmem:[%s11] sm:$0xff]
  %v265 = vld [vmem:[%s11 + $0x8] sm:$0xff]
  %v266 = vld [vmem:[%s11 + $0x10] sm:$0xff]
  %v267 = vld [vmem:[%s11 + $0x18] sm:$0xff]
  %v268 = vld [vmem:[%s11 + $0x20] sm:$0xff]
  %v269 = vld [vmem:[%s11 + $0x28] sm:$0xff]
  %v270 = vld [vmem:[%s11 + $0x30] sm:$0xff]
  %v271 = vld [vmem:[%s11 + $0x38] sm:$0xff]
  %v272 = vld [vmem:[%s11 + $0x40] sm:$0xff]
  %v273 = vld [vmem:[%s11 + $0x48] sm:$0xff]
  %v274 = vld [vmem:[%s11 + $0x50] sm:$0xff]
  %v275 = vld [vmem:[%s11 + $0x58] sm:$0xff]
  %v276 = vld [vmem:[%s11 + $0x60] sm:$0xff]
  %v277 = vld [vmem:[%s11 + $0x68] sm:$0xff]
  %v278 = vld [vmem:[%s11 + $0x70] sm:$0xff]
  %v279 = vld [vmem:[%s11 + $0x78] sm:$0xff]
  %v280 = vld [vmem:[%s11 + $0x80] sm:$0xff]
  %v281 = vld [vmem:[%s11 + $0x88] sm:$0xff]
  %v282 = vld [vmem:[%s11 + $0x90] sm:$0xff]
  %v283 = vld [vmem:[%s11 + $0x98] sm:$0xff]
  %v284 = vld [vmem:[%s11 + $0xa0] sm:$0xff]
  %v285 = vld [vmem:[%s11 + $0xa8] sm:$0xff]
  %v286 = vld [vmem:[%s11 + $0xb0] sm:$0xff]
  %v287 = vld [vmem:[%s11 + $0xb8] sm:$0xff]
  %v288 = vld [vmem:[%s11 + $0xc0] sm:$0xff]
  %v289 = vld [vmem:[%s11 + $0xc8] sm:$0xff]
  %v290 = vld [vmem:[%s11 + $0xd0] sm:$0xff]
  %v291 = vld [vmem:[%s11 + $0xd8] sm:$0xff]
  %v292 = vld [vmem:[%s11 + $0xe0] sm:$0xff]
  %v293 = vld [vmem:[%s11 + $0xe8] sm:$0xff]
  %v294 = vld [vmem:[%s11 + $0xf0] sm:$0xff]
  %v295 = vld [vmem:[%s11 + $0xf8] sm:$0xff]
  %296 = vmatprep.subr.mxu0 %v265
  %297 = vmatpush1.msra.mxu0 %v264
  %298 = vmatprep.subr.mxu0 %v267
  %299 = vmatpush1.msra.mxu0 %v266
  %300 = vmatprep.subr.mxu0 %v269
  %301 = vmatpush1.msra.mxu0 %v268
  %302 = vmatprep.subr.mxu0 %v271
  %303 = vmatpush1.msra.mxu0 %v270
  %304 = vmatprep.subr.mxu0 %v273
  %305 = vmatpush1.msra.mxu0 %v272
  %306 = vmatprep.subr.mxu0 %v275
  %307 = vmatpush1.msra.mxu0 %v274
  %308 = vmatprep.subr.mxu0 %v277
  %309 = vmatpush1.msra.mxu0 %v276
  %310 = vmatprep.subr.mxu0 %v279
  %311 = vmatpush1.msra.mxu0 %v278
  %312 = vmatprep.subr.mxu0 %v281
  %313 = vmatpush1.msra.mxu0 %v280
  %314 = vmatprep.subr.mxu0 %v283
  %315 = vmatpush1.msra.mxu0 %v282
  %316 = vmatprep.subr.mxu0 %v285
  %317 = vmatpush1.msra.mxu0 %v284
  %318 = vmatprep.subr.mxu0 %v287
  %319 = vmatpush1.msra.mxu0 %v286
  %320 = vmatprep.subr.mxu0 %v289
  %321 = vmatpush1.msra.mxu0 %v288
  %322 = vmatprep.subr.mxu0 %v291
  %323 = vmatpush1.msra.mxu0 %v290
  %324 = vmatprep.subr.mxu0 %v293
  %325 = vmatpush1.msra.mxu0 %v292
  %326 = vmatprep.subr.mxu0 %v295
  %327 = vmatpush1.msra.mxu0 %v294
  %328 = vmatprep.subr.mxu0 0.0
  %329 = vmatpush1.msra.mxu0 0.0
  %330 = vmatprep.subr.mxu0 0.0
  %331 = vmatpush1.msra.mxu0 0.0
  %332 = vmatprep.subr.mxu0 0.0
  %333 = vmatpush1.msra.mxu0 0.0
  %334 = vmatprep.subr.mxu0 0.0
  %335 = vmatpush1.msra.mxu0 0.0
  %336 = vmatprep.subr.mxu0 0.0
  %337 = vmatpush1.msra.mxu0 0.0
  %338 = vmatprep.subr.mxu0 0.0
  %339 = vmatpush1.msra.mxu0 0.0
  %340 = vmatprep.subr.mxu0 0.0
  %341 = vmatpush1.msra.mxu0 0.0
  %342 = vmatprep.subr.mxu0 0.0
  %343 = vmatpush1.msra.mxu0 0.0
  %344 = vmatprep.subr.mxu0 0.0
  %345 = vmatpush1.msra.mxu0 0.0
  %346 = vmatprep.subr.mxu0 0.0
  %347 = vmatpush1.msra.mxu0 0.0
  %348 = vmatprep.subr.mxu0 0.0
  %349 = vmatpush1.msra.mxu0 0.0
  %350 = vmatprep.subr.mxu0 0.0
  %351 = vmatpush1.msra.mxu0 0.0
  %352 = vmatprep.subr.mxu0 0.0
  %353 = vmatpush1.msra.mxu0 0.0
  %354 = vmatprep.subr.mxu0 0.0
  %355 = vmatpush1.msra.mxu0 0.0
  %356 = vmatprep.subr.mxu0 0.0
  %357 = vmatpush1.msra.mxu0 0.0
  %358 = vmatprep.subr.mxu0 0.0
  %359 = vmatpush1.msra.mxu0 0.0
  %360 = vmatprep.mubr.f32.mxu0 0.0
  %361 = vmatmul.mubr.f32.gmra.mrb[0].mxu0 %v263
  %v362 = vpop.f32.mrb[0].mxu0
  %v363 = vadd.f32 0.0, %v362
  %v364 = vpop.f32.mrb[0].mxu0
  %v365 = vadd.f32 0.0, %v364
  %366 = vdwg.mxu0
  %367 = vmatprep.subr.mxu0 %v121
  %368 = vmatpush1.msra.mxu0 %v120
  %369 = vmatprep.subr.mxu0 %v123
  %370 = vmatpush1.msra.mxu0 %v122
  %371 = vmatprep.subr.mxu0 %v125
  %372 = vmatpush1.msra.mxu0 %v124
  %373 = vmatprep.subr.mxu0 %v127
  %374 = vmatpush1.msra.mxu0 %v126
  %375 = vmatprep.subr.mxu0 %v129
  %376 = vmatpush1.msra.mxu0 %v128
  %377 = vmatprep.subr.mxu0 %v131
  %378 = vmatpush1.msra.mxu0 %v130
  %379 = vmatprep.subr.mxu0 %v133
  %380 = vmatpush1.msra.mxu0 %v132
  %381 = vmatprep.subr.mxu0 %v135
  %382 = vmatpush1.msra.mxu0 %v134
  %383 = vmatprep.subr.mxu0 %v137
  %384 = vmatpush1.msra.mxu0 %v136
  %385 = vmatprep.subr.mxu0 %v139
  %386 = vmatpush1.msra.mxu0 %v138
  %387 = vmatprep.subr.mxu0 %v141
  %388 = vmatpush1.msra.mxu0 %v140
  %389 = vmatprep.subr.mxu0 %v143
  %390 = vmatpush1.msra.mxu0 %v142
  %391 = vmatprep.subr.mxu0 %v145
  %392 = vmatpush1.msra.mxu0 %v144
  %393 = vmatprep.subr.mxu0 %v147
  %394 = vmatpush1.msra.mxu0 %v146
  %395 = vmatprep.subr.mxu0 %v149
  %396 = vmatpush1.msra.mxu0 %v148
  %397 = vmatprep.subr.mxu0 %v151
  %398 = vmatpush1.msra.mxu0 %v150
  %399 = vmatprep.subr.mxu0 %v153
  %400 = vmatpush1.msra.mxu0 %v152
  %401 = vmatprep.subr.mxu0 %v155
  %402 = vmatpush1.msra.mxu0 %v154
  %403 = vmatprep.subr.mxu0 %v157
  %404 = vmatpush1.msra.mxu0 %v156
  %405 = vmatprep.subr.mxu0 %v159
  %406 = vmatpush1.msra.mxu0 %v158
  %407 = vmatprep.subr.mxu0 %v161
  %408 = vmatpush1.msra.mxu0 %v160
  %409 = vmatprep.subr.mxu0 %v163
  %410 = vmatpush1.msra.mxu0 %v162
  %411 = vmatprep.subr.mxu0 %v165
  %412 = vmatpush1.msra.mxu0 %v164
  %413 = vmatprep.subr.mxu0 %v167
  %414 = vmatpush1.msra.mxu0 %v166
  %415 = vmatprep.subr.mxu0 %v169
  %416 = vmatpush1.msra.mxu0 %v168
  %417 = vmatprep.subr.mxu0 %v171
  %418 = vmatpush1.msra.mxu0 %v170
  %419 = vmatprep.subr.mxu0 %v173
  %420 = vmatpush1.msra.mxu0 %v172
  %421 = vmatprep.subr.mxu0 %v175
  %422 = vmatpush1.msra.mxu0 %v174
  %423 = vmatprep.subr.mxu0 %v177
  %424 = vmatpush1.msra.mxu0 %v176
  %425 = vmatprep.subr.mxu0 %v179
  %426 = vmatpush1.msra.mxu0 %v178
  %427 = vmatprep.subr.mxu0 %v181
  %428 = vmatpush1.msra.mxu0 %v180
  %429 = vmatprep.subr.mxu0 %v183
  %430 = vmatpush1.msra.mxu0 %v182
  %431 = vmatprep.mubr.f32.mxu0 %v117
  %432 = vmatmul.mubr.f32.gmra.mrb[0].mxu0 %v116
  %v433 = vpop.f32.mrb[0].mxu0
  %v434 = vadd.f32 %v363, %v433
  %v435 = vpop.f32.mrb[0].mxu0
  %v436 = vadd.f32 %v365, %v435
  %437 = vdwg.mxu0
  %438 = vmatprep.subr.mxu0 %v185
  %439 = vmatpush1.msra.mxu0 %v184
  %440 = vmatprep.subr.mxu0 %v187
  %441 = vmatpush1.msra.mxu0 %v186
  %442 = vmatprep.subr.mxu0 %v189
  %443 = vmatpush1.msra.mxu0 %v188
  %444 = vmatprep.subr.mxu0 %v191
  %445 = vmatpush1.msra.mxu0 %v190
  %446 = vmatprep.subr.mxu0 %v193
  %447 = vmatpush1.msra.mxu0 %v192
  %448 = vmatprep.subr.mxu0 %v195
  %449 = vmatpush1.msra.mxu0 %v194
  %450 = vmatprep.subr.mxu0 %v197
  %451 = vmatpush1.msra.mxu0 %v196
  %452 = vmatprep.subr.mxu0 %v199
  %453 = vmatpush1.msra.mxu0 %v198
  %454 = vmatprep.subr.mxu0 %v201
  %455 = vmatpush1.msra.mxu0 %v200
  %456 = vmatprep.subr.mxu0 %v203
  %457 = vmatpush1.msra.mxu0 %v202
  %458 = vmatprep.subr.mxu0 %v205
  %459 = vmatpush1.msra.mxu0 %v204
  %460 = vmatprep.subr.mxu0 %v207
  %461 = vmatpush1.msra.mxu0 %v206
  %462 = vmatprep.subr.mxu0 %v209
  %463 = vmatpush1.msra.mxu0 %v208
  %464 = vmatprep.subr.mxu0 %v211
  %465 = vmatpush1.msra.mxu0 %v210
  %466 = vmatprep.subr.mxu0 %v213
  %467 = vmatpush1.msra.mxu0 %v212
  %468 = vmatprep.subr.mxu0 %v215
  %469 = vmatpush1.msra.mxu0 %v214
  %470 = vmatprep.subr.mxu0 %v217
  %471 = vmatpush1.msra.mxu0 %v216
  %472 = vmatprep.subr.mxu0 %v219
  %473 = vmatpush1.msra.mxu0 %v218
  %474 = vmatprep.subr.mxu0 %v221
  %475 = vmatpush1.msra.mxu0 %v220
  %476 = vmatprep.subr.mxu0 %v223
  %477 = vmatpush1.msra.mxu0 %v222
  %478 = vmatprep.subr.mxu0 %v225
  %479 = vmatpush1.msra.mxu0 %v224
  %480 = vmatprep.subr.mxu0 %v227
  %481 = vmatpush1.msra.mxu0 %v226
  %482 = vmatprep.subr.mxu0 %v229
  %483 = vmatpush1.msra.mxu0 %v228
  %484 = vmatprep.subr.mxu0 %v231
  %485 = vmatpush1.msra.mxu0 %v230
  %486 = vmatprep.subr.mxu0 %v233
  %487 = vmatpush1.msra.mxu0 %v232
  %488 = vmatprep.subr.mxu0 %v235
  %489 = vmatpush1.msra.mxu0 %v234
  %490 = vmatprep.subr.mxu0 %v237
  %491 = vmatpush1.msra.mxu0 %v236
  %492 = vmatprep.subr.mxu0 %v239
  %493 = vmatpush1.msra.mxu0 %v238
  %494 = vmatprep.subr.mxu0 %v241
  %495 = vmatpush1.msra.mxu0 %v240
  %496 = vmatprep.subr.mxu0 %v243
  %497 = vmatpush1.msra.mxu0 %v242
  %498 = vmatprep.subr.mxu0 %v245
  %499 = vmatpush1.msra.mxu0 %v244
  %500 = vmatprep.subr.mxu0 %v247
  %501 = vmatpush1.msra.mxu0 %v246
  %502 = vmatprep.mubr.f32.mxu0 %v119
  %503 = vmatmul.mubr.f32.gmra.mrb[0].mxu0 %v118
  %v504 = vpop.f32.mrb[0].mxu0
  %v505 = vadd.f32 %v434, %v504
  %v506 = vpop.f32.mrb[0].mxu0
  %v507 = vadd.f32 %v436, %v506
  %508 = vdwg.mxu0
  %v511 = vrot.slane %v505, 4
  %v512 = vrot.slane %v507, 4
  %v513 = vcombine.low %v505, %v507
  %v514 = vcombine.low %v511, %v512
  %v517 = vadd.f32 %v81, %v513
  %v518 = vadd.f32 %v82, %v514
  %v519 = vld [vmem:[%s9] sm:$0xff]
  %v520 = vld [vmem:[%s9 + $0x8] sm:$0xff]
  %v521 = vld [vmem:[%s9 + $0x10] sm:$0xff]
  %v522 = vld [vmem:[%s9 + $0x18] sm:$0xff]
  %v523 = vld [vmem:[%s12] sm:$0xff]
  %v524 = vld [vmem:[%s13] sm:$0xff]
  %vm525 = vcmask 31744
  %v527 = vsel %vm525, %v524, 0
  %v530 = vsel %vm115, %v519, 0
  %v533 = vsel %vm115, %v520, 0
  %v536 = vsel %vm115, %v521, 0
  %v539 = vsel %vm115, %v522, 0
  %541 = vmatprep.subr.mxu0 %v533
  %542 = vmatpush1.msra.mxu0 %v530
  %543 = vmatprep.subr.mxu0 0.0
  %544 = vmatpush1.msra.mxu0 0.0
  %545 = vmatprep.subr.mxu0 0.0
  %546 = vmatpush1.msra.mxu0 0.0
  %547 = vmatprep.subr.mxu0 0.0
  %548 = vmatpush1.msra.mxu0 0.0
  %549 = vmatprep.subr.mxu0 0.0
  %550 = vmatpush1.msra.mxu0 0.0
  %551 = vmatprep.subr.mxu0 0.0
  %552 = vmatpush1.msra.mxu0 0.0
  %553 = vmatprep.subr.mxu0 0.0
  %554 = vmatpush1.msra.mxu0 0.0
  %555 = vmatprep.subr.mxu0 0.0
  %556 = vmatpush1.msra.mxu0 0.0
  %557 = vmatprep.subr.mxu0 0.0
  %558 = vmatpush1.msra.mxu0 0.0
  %559 = vmatprep.subr.mxu0 0.0
  %560 = vmatpush1.msra.mxu0 0.0
  %561 = vmatprep.subr.mxu0 0.0
  %562 = vmatpush1.msra.mxu0 0.0
  %563 = vmatprep.subr.mxu0 0.0
  %564 = vmatpush1.msra.mxu0 0.0
  %565 = vmatprep.subr.mxu0 0.0
  %566 = vmatpush1.msra.mxu0 0.0
  %567 = vmatprep.subr.mxu0 0.0
  %568 = vmatpush1.msra.mxu0 0.0
  %569 = vmatprep.subr.mxu0 0.0
  %570 = vmatpush1.msra.mxu0 0.0
  %571 = vmatprep.subr.mxu0 0.0
  %572 = vmatpush1.msra.mxu0 0.0
  %573 = vmatprep.subr.mxu0 0.0
  %574 = vmatpush1.msra.mxu0 0.0
  %575 = vmatprep.subr.mxu0 0.0
  %576 = vmatpush1.msra.mxu0 0.0
  %577 = vmatprep.subr.mxu0 0.0
  %578 = vmatpush1.msra.mxu0 0.0
  %579 = vmatprep.subr.mxu0 0.0
  %580 = vmatpush1.msra.mxu0 0.0
  %581 = vmatprep.subr.mxu0 0.0
  %582 = vmatpush1.msra.mxu0 0.0
  %583 = vmatprep.subr.mxu0 0.0
  %584 = vmatpush1.msra.mxu0 0.0
  %585 = vmatprep.subr.mxu0 0.0
  %586 = vmatpush1.msra.mxu0 0.0
  %587 = vmatprep.subr.mxu0 0.0
  %588 = vmatpush1.msra.mxu0 0.0
  %589 = vmatprep.subr.mxu0 0.0
  %590 = vmatpush1.msra.mxu0 0.0
  %591 = vmatprep.subr.mxu0 0.0
  %592 = vmatpush1.msra.mxu0 0.0
  %593 = vmatprep.subr.mxu0 0.0
  %594 = vmatpush1.msra.mxu0 0.0
  %595 = vmatprep.subr.mxu0 0.0
  %596 = vmatpush1.msra.mxu0 0.0
  %597 = vmatprep.subr.mxu0 0.0
  %598 = vmatpush1.msra.mxu0 0.0
  %599 = vmatprep.subr.mxu0 0.0
  %600 = vmatpush1.msra.mxu0 0.0
  %601 = vmatprep.subr.mxu0 0.0
  %602 = vmatpush1.msra.mxu0 0.0
  %603 = vmatprep.subr.mxu0 0.0
  %604 = vmatpush1.msra.mxu0 0.0
  %605 = vmatprep.mubr.f32.mxu0 0.0
  %606 = vmatmul.mubr.f32.gmra.mrb[0].mxu0 %v527
  %v607 = vpop.f32.mrb[0].mxu0
  %v608 = vadd.f32 0.0, %v607
  %v609 = vpop.f32.mrb[0].mxu0
  %v610 = vadd.f32 0.0, %v609
  %611 = vdwg.mxu0
  %612 = vmatprep.subr.mxu0 %v539
  %613 = vmatpush1.msra.mxu0 %v536
  %614 = vmatprep.subr.mxu0 0.0
  %615 = vmatpush1.msra.mxu0 0.0
  %616 = vmatprep.subr.mxu0 0.0
  %617 = vmatpush1.msra.mxu0 0.0
  %618 = vmatprep.subr.mxu0 0.0
  %619 = vmatpush1.msra.mxu0 0.0
  %620 = vmatprep.subr.mxu0 0.0
  %621 = vmatpush1.msra.mxu0 0.0
  %622 = vmatprep.subr.mxu0 0.0
  %623 = vmatpush1.msra.mxu0 0.0
  %624 = vmatprep.subr.mxu0 0.0
  %625 = vmatpush1.msra.mxu0 0.0
  %626 = vmatprep.subr.mxu0 0.0
  %627 = vmatpush1.msra.mxu0 0.0
  %628 = vmatprep.subr.mxu0 0.0
  %629 = vmatpush1.msra.mxu0 0.0
  %630 = vmatprep.subr.mxu0 0.0
  %631 = vmatpush1.msra.mxu0 0.0
  %632 = vmatprep.subr.mxu0 0.0
  %633 = vmatpush1.msra.mxu0 0.0
  %634 = vmatprep.subr.mxu0 0.0
  %635 = vmatpush1.msra.mxu0 0.0
  %636 = vmatprep.subr.mxu0 0.0
  %637 = vmatpush1.msra.mxu0 0.0
  %638 = vmatprep.subr.mxu0 0.0
  %639 = vmatpush1.msra.mxu0 0.0
  %640 = vmatprep.subr.mxu0 0.0
  %641 = vmatpush1.msra.mxu0 0.0
  %642 = vmatprep.subr.mxu0 0.0
  %643 = vmatpush1.msra.mxu0 0.0
  %644 = vmatprep.subr.mxu0 0.0
  %645 = vmatpush1.msra.mxu0 0.0
  %646 = vmatprep.subr.mxu0 0.0
  %647 = vmatpush1.msra.mxu0 0.0
  %648 = vmatprep.subr.mxu0 0.0
  %649 = vmatpush1.msra.mxu0 0.0
  %650 = vmatprep.subr.mxu0 0.0
  %651 = vmatpush1.msra.mxu0 0.0
  %652 = vmatprep.subr.mxu0 0.0
  %653 = vmatpush1.msra.mxu0 0.0
  %654 = vmatprep.subr.mxu0 0.0
  %655 = vmatpush1.msra.mxu0 0.0
  %656 = vmatprep.subr.mxu0 0.0
  %657 = vmatpush1.msra.mxu0 0.0
  %658 = vmatprep.subr.mxu0 0.0
  %659 = vmatpush1.msra.mxu0 0.0
  %660 = vmatprep.subr.mxu0 0.0
  %661 = vmatpush1.msra.mxu0 0.0
  %662 = vmatprep.subr.mxu0 0.0
  %663 = vmatpush1.msra.mxu0 0.0
  %664 = vmatprep.subr.mxu0 0.0
  %665 = vmatpush1.msra.mxu0 0.0
  %666 = vmatprep.subr.mxu0 0.0
  %667 = vmatpush1.msra.mxu0 0.0
  %668 = vmatprep.subr.mxu0 0.0
  %669 = vmatpush1.msra.mxu0 0.0
  %670 = vmatprep.subr.mxu0 0.0
  %671 = vmatpush1.msra.mxu0 0.0
  %672 = vmatprep.subr.mxu0 0.0
  %673 = vmatpush1.msra.mxu0 0.0
  %674 = vmatprep.subr.mxu0 0.0
  %675 = vmatpush1.msra.mxu0 0.0
  %676 = vmatprep.mubr.f32.mxu0 0.0
  %677 = vmatmul.mubr.f32.gmra.mrb[0].mxu0 %v527
  %v678 = vpop.f32.mrb[0].mxu0
  %v679 = vadd.f32 0.0, %v678
  %v680 = vpop.f32.mrb[0].mxu0
  %v681 = vadd.f32 0.0, %v680
  %682 = vdwg.mxu0
  %v685 = vcombine.high %v517, %v517
  %v686 = vcombine.high %v518, %v518
  %v688 = vsel %vm525, %v523, 0
  %v690 = vsel %vm115, %v517, 0
  %v692 = vsel %vm115, %v685, 0
  %v694 = vsel %vm115, %v518, 0
  %v696 = vsel %vm115, %v686, 0
  %698 = vmatprep.subr.mxu0 %v692
  %699 = vmatpush1.msra.mxu0 %v690
  %700 = vmatprep.subr.mxu0 0.0
  %701 = vmatpush1.msra.mxu0 0.0
  %702 = vmatprep.subr.mxu0 0.0
  %703 = vmatpush1.msra.mxu0 0.0
  %704 = vmatprep.subr.mxu0 0.0
  %705 = vmatpush1.msra.mxu0 0.0
  %706 = vmatprep.subr.mxu0 0.0
  %707 = vmatpush1.msra.mxu0 0.0
  %708 = vmatprep.subr.mxu0 0.0
  %709 = vmatpush1.msra.mxu0 0.0
  %710 = vmatprep.subr.mxu0 0.0
  %711 = vmatpush1.msra.mxu0 0.0
  %712 = vmatprep.subr.mxu0 0.0
  %713 = vmatpush1.msra.mxu0 0.0
  %714 = vmatprep.subr.mxu0 0.0
  %715 = vmatpush1.msra.mxu0 0.0
  %716 = vmatprep.subr.mxu0 0.0
  %717 = vmatpush1.msra.mxu0 0.0
  %718 = vmatprep.subr.mxu0 0.0
  %719 = vmatpush1.msra.mxu0 0.0
  %720 = vmatprep.subr.mxu0 0.0
  %721 = vmatpush1.msra.mxu0 0.0
  %722 = vmatprep.subr.mxu0 0.0
  %723 = vmatpush1.msra.mxu0 0.0
  %724 = vmatprep.subr.mxu0 0.0
  %725 = vmatpush1.msra.mxu0 0.0
  %726 = vmatprep.subr.mxu0 0.0
  %727 = vmatpush1.msra.mxu0 0.0
  %728 = vmatprep.subr.mxu0 0.0
  %729 = vmatpush1.msra.mxu0 0.0
  %730 = vmatprep.subr.mxu0 0.0
  %731 = vmatpush1.msra.mxu0 0.0
  %732 = vmatprep.subr.mxu0 0.0
  %733 = vmatpush1.msra.mxu0 0.0
  %734 = vmatprep.subr.mxu0 0.0
  %735 = vmatpush1.msra.mxu0 0.0
  %736 = vmatprep.subr.mxu0 0.0
  %737 = vmatpush1.msra.mxu0 0.0
  %738 = vmatprep.subr.mxu0 0.0
  %739 = vmatpush1.msra.mxu0 0.0
  %740 = vmatprep.subr.mxu0 0.0
  %741 = vmatpush1.msra.mxu0 0.0
  %742 = vmatprep.subr.mxu0 0.0
  %743 = vmatpush1.msra.mxu0 0.0
  %744 = vmatprep.subr.mxu0 0.0
  %745 = vmatpush1.msra.mxu0 0.0
  %746 = vmatprep.subr.mxu0 0.0
  %747 = vmatpush1.msra.mxu0 0.0
  %748 = vmatprep.subr.mxu0 0.0
  %749 = vmatpush1.msra.mxu0 0.0
  %750 = vmatprep.subr.mxu0 0.0
  %751 = vmatpush1.msra.mxu0 0.0
  %752 = vmatprep.subr.mxu0 0.0
  %753 = vmatpush1.msra.mxu0 0.0
  %754 = vmatprep.subr.mxu0 0.0
  %755 = vmatpush1.msra.mxu0 0.0
  %756 = vmatprep.subr.mxu0 0.0
  %757 = vmatpush1.msra.mxu0 0.0
  %758 = vmatprep.subr.mxu0 0.0
  %759 = vmatpush1.msra.mxu0 0.0
  %760 = vmatprep.subr.mxu0 0.0
  %761 = vmatpush1.msra.mxu0 0.0
  %762 = vmatprep.mubr.f32.mxu0 0.0
  %763 = vmatmul.mubr.f32.gmra.mrb[0].mxu0 %v688
  %v764 = vpop.f32.mrb[0].mxu0
  %v765 = vadd.f32 %v608, %v764
  %v766 = vpop.f32.mrb[0].mxu0
  %v767 = vadd.f32 %v610, %v766
  %768 = vdwg.mxu0
  %769 = vmatprep.subr.mxu0 %v696
  %770 = vmatpush1.msra.mxu0 %v694
  %771 = vmatprep.subr.mxu0 0.0
  %772 = vmatpush1.msra.mxu0 0.0
  %773 = vmatprep.subr.mxu0 0.0
  %774 = vmatpush1.msra.mxu0 0.0
  %775 = vmatprep.subr.mxu0 0.0
  %776 = vmatpush1.msra.mxu0 0.0
  %777 = vmatprep.subr.mxu0 0.0
  %778 = vmatpush1.msra.mxu0 0.0
  %779 = vmatprep.subr.mxu0 0.0
  %780 = vmatpush1.msra.mxu0 0.0
  %781 = vmatprep.subr.mxu0 0.0
  %782 = vmatpush1.msra.mxu0 0.0
  %783 = vmatprep.subr.mxu0 0.0
  %784 = vmatpush1.msra.mxu0 0.0
  %785 = vmatprep.subr.mxu0 0.0
  %786 = vmatpush1.msra.mxu0 0.0
  %787 = vmatprep.subr.mxu0 0.0
  %788 = vmatpush1.msra.mxu0 0.0
  %789 = vmatprep.subr.mxu0 0.0
  %790 = vmatpush1.msra.mxu0 0.0
  %791 = vmatprep.subr.mxu0 0.0
  %792 = vmatpush1.msra.mxu0 0.0
  %793 = vmatprep.subr.mxu0 0.0
  %794 = vmatpush1.msra.mxu0 0.0
  %795 = vmatprep.subr.mxu0 0.0
  %796 = vmatpush1.msra.mxu0 0.0
  %797 = vmatprep.subr.mxu0 0.0
  %798 = vmatpush1.msra.mxu0 0.0
  %799 = vmatprep.subr.mxu0 0.0
  %800 = vmatpush1.msra.mxu0 0.0
  %801 = vmatprep.subr.mxu0 0.0
  %802 = vmatpush1.msra.mxu0 0.0
  %803 = vmatprep.subr.mxu0 0.0
  %804 = vmatpush1.msra.mxu0 0.0
  %805 = vmatprep.subr.mxu0 0.0
  %806 = vmatpush1.msra.mxu0 0.0
  %807 = vmatprep.subr.mxu0 0.0
  %808 = vmatpush1.msra.mxu0 0.0
  %809 = vmatprep.subr.mxu0 0.0
  %810 = vmatpush1.msra.mxu0 0.0
  %811 = vmatprep.subr.mxu0 0.0
  %812 = vmatpush1.msra.mxu0 0.0
  %813 = vmatprep.subr.mxu0 0.0
  %814 = vmatpush1.msra.mxu0 0.0
  %815 = vmatprep.subr.mxu0 0.0
  %816 = vmatpush1.msra.mxu0 0.0
  %817 = vmatprep.subr.mxu0 0.0
  %818 = vmatpush1.msra.mxu0 0.0
  %819 = vmatprep.subr.mxu0 0.0
  %820 = vmatpush1.msra.mxu0 0.0
  %821 = vmatprep.subr.mxu0 0.0
  %822 = vmatpush1.msra.mxu0 0.0
  %823 = vmatprep.subr.mxu0 0.0
  %824 = vmatpush1.msra.mxu0 0.0
  %825 = vmatprep.subr.mxu0 0.0
  %826 = vmatpush1.msra.mxu0 0.0
  %827 = vmatprep.subr.mxu0 0.0
  %828 = vmatpush1.msra.mxu0 0.0
  %829 = vmatprep.subr.mxu0 0.0
  %830 = vmatpush1.msra.mxu0 0.0
  %831 = vmatprep.subr.mxu0 0.0
  %832 = vmatpush1.msra.mxu0 0.0
  %833 = vmatprep.mubr.f32.mxu0 0.0
  %834 = vmatmul.mubr.f32.gmra.mrb[0].mxu0 %v688
  %v835 = vpop.f32.mrb[0].mxu0
  %v836 = vadd.f32 %v679, %v835
  %v837 = vpop.f32.mrb[0].mxu0
  %v838 = vadd.f32 %v681, %v837
  %839 = vdwg.mxu0
  %v840 = vadd.f32 %v765, %v767
  %v841 = vadd.f32 %v840, %v836
  %v842 = vadd.f32 %v841, %v838
  %843 = vadd.xlane.f32.xlu0 %v842
  %v844 = vpop.xlane.xlu0 %843
  %v845 = vmul.f32 %v765, %v765
  %v846 = vmul.f32 %v767, %v767
  %v847 = vmul.f32 %v836, %v836
  %v848 = vmul.f32 %v838, %v838
  %v849 = vadd.f32 %v845, %v846
  %v850 = vadd.f32 %v849, %v847
  %v851 = vadd.f32 %v850, %v848
  %852 = vadd.xlane.f32.xlu0 %v851
  %v853 = vpop.xlane.xlu0 %852
  %vm854 = vcmask 7168
  %v855 = vsel %vm854, %v844, %v853
  %vm856 = vcmask 15360
  %857 = vst.msk [vmem:[%s15] sm:$0xff] %vm856, %v855
  %858 = vst [vmem:[%s14] sm:$0xff] %v765
  %859 = vst [vmem:[%s14 + $0x8] sm:$0xff] %v767
  %860 = vst [vmem:[%s14 + $0x10] sm:$0xff] %v836
  %861 = vst [vmem:[%s14 + $0x18] sm:$0xff] %v838
  // Predicated region
  $region58: #{ffc_bn_act_forward.6} parent=0 // pred_check
    _
  $region59: #{ffc_bn_act_forward.6} parent=0 // pred_check_branch
    %863 = sbr.rel (0) target = $region61
  $region60: #{ffc_bn_act_forward.6} parent=0 // pred_region
    _
  $region61: #{ffc_bn_act_forward.6} parent=0 // pred_fallthru
    _
  // Predicated region
  $region62: #{ffc_bn_act_forward.6} parent=0 // pred_check
    _
  $region63: #{ffc_bn_act_forward.6} parent=0 // pred_check_branch
    %865 = sbr.rel (0) target = $region65
  $region64: #{ffc_bn_act_forward.6} parent=0 // pred_region
    _
  $region65: #{ffc_bn_act_forward.6} parent=0 // pred_fallthru
    _
  // Predicated region
  $region66: #{ffc_bn_act_forward.6} parent=0 // pred_check
    _
  $region67: #{ffc_bn_act_forward.6} parent=0 // pred_check_branch
    %867 = sbr.rel (0) target = $region69
  $region68: #{ffc_bn_act_forward.6} parent=0 // pred_region
    _
  $region69: #{ffc_bn_act_forward.6} parent=0 // pred_fallthru
    _
  // Predicated region
  $region70: #{ffc_bn_act_forward.6} parent=0 // pred_check
    _
  $region71: #{ffc_bn_act_forward.6} parent=0 // pred_check_branch
    %869 = sbr.rel (0) target = $region73
  $region72: #{ffc_bn_act_forward.6} parent=0 // pred_region
    _
  $region73: #{ffc_bn_act_forward.6} parent=0 // pred_fallthru
    _

</llo_original>
